<compile_context>
chip_gen: v5e
topology: v5e:2x2
jax: 0.10.0
libtpu: 0.0.40
codegen_flags: <defaults>
</compile_context>

<pallas_src>
import functools
import math

import jax
import jax.numpy as jnp
from jax import lax
from jax.experimental import pallas as pl
from jax.experimental.pallas import tpu as pltpu


# ----------------------------------------------------------------------------
# kernels
# ----------------------------------------------------------------------------
def _degree_kernel(adj_ref, dinv_ref, acc_ref):
    """Row degrees of adj (count of entries > 0), finalized as d^{-1/2}."""
    k = pl.program_id(1)

    @pl.when(k == 0)
    def _():
        acc_ref[...] = jnp.zeros_like(acc_ref)

    acc_ref[...] += jnp.sum(
        (adj_ref[...] > 0).astype(jnp.float32), axis=1, keepdims=True)

    @pl.when(k == pl.num_programs(1) - 1)
    def _():
        deg = acc_ref[...]
        # guard: padded / isolated rows (deg == 0) -> 0 instead of inf
        dinv_ref[...] = jnp.where(deg > 0.0, lax.rsqrt(deg), 0.0)


def _support_kernel(x_ref, w_ref, dinv_ref, s_ref):
    """scaled = d^{-1/2} * (X @ W) for one row tile (W resident); bf16 out."""
    support = jnp.dot(x_ref[...], w_ref[...], preferred_element_type=jnp.float32)
    s_ref[...] = (dinv_ref[...] * support).astype(s_ref.dtype)


def _aggregate_kernel(adj_ref, sk_ref, si_ref, dinv_ref, b_ref, out_ref,
                      acc_ref, *, apply_elu):
    """out = act(d^{-1/2} * (adj @ scaled + scaled) + bias), K-reduction tiled."""
    k = pl.program_id(1)

    @pl.when(k == 0)
    def _():
        acc_ref[...] = jnp.zeros_like(acc_ref)

    # bf16 x bf16 on the MXU, f32 accumulation (adj entries are exact 0/1).
    acc_ref[...] += jnp.dot(adj_ref[...], sk_ref[...],
                            preferred_element_type=jnp.float32)

    @pl.when(k == pl.num_programs(1) - 1)
    def _():
        # identity term (I @ scaled == scaled) added here instead of adj + I.
        out = dinv_ref[...] * (acc_ref[...] + si_ref[...].astype(jnp.float32))
        out = out + b_ref[...]
        if apply_elu:
            out = jnp.where(out > 0.0, out, jnp.exp(jnp.minimum(out, 0.0)) - 1.0)
        out_ref[...] = out.astype(out_ref.dtype)


# ----------------------------------------------------------------------------
# pallas_call wrappers
# ----------------------------------------------------------------------------
_VMEM_LIMIT = 32 * 1024 * 1024  # safe on v5e/v6e (128 MiB) and v7x (64 MiB)


def _round_up(x, m):
    return ((x + m - 1) // m) * m


def _pad2(a, rows, cols):
    return jnp.zeros((rows, cols), a.dtype).at[:a.shape[0], :a.shape[1]].set(a)


def _pad1(a, n):
    return jnp.zeros((n,), a.dtype).at[:a.shape[0]].set(a)


def _degree_inv_sqrt(adj_p, tile):
    n_p = adj_p.shape[0]
    grid = (n_p // tile, n_p // tile)
    return pl.pallas_call(
        _degree_kernel,
        out_shape=jax.ShapeDtypeStruct((n_p, 1), jnp.float32),
        grid=grid,
        in_specs=[pl.BlockSpec((tile, tile), lambda i, k: (i, k))],
        out_specs=pl.BlockSpec((tile, 1), lambda i, k: (i, 0)),
        scratch_shapes=[pltpu.VMEM((tile, 1), jnp.float32)],
        compiler_params=pltpu.CompilerParams(
            dimension_semantics=("parallel", "arbitrary"),
            vmem_limit_bytes=_VMEM_LIMIT),
    )(adj_p)


def _support(h_p, w_p, dinv, tile):
    n_p, fin_p = h_p.shape
    fout_p = w_p.shape[1]
    grid = (n_p // tile,)
    return pl.pallas_call(
        _support_kernel,
        out_shape=jax.ShapeDtypeStruct((n_p, fout_p), jnp.bfloat16),
        grid=grid,
        in_specs=[
            pl.BlockSpec((tile, fin_p), lambda i: (i, 0)),
            pl.BlockSpec((fin_p, fout_p), lambda i: (0, 0)),   # W resident
            pl.BlockSpec((tile, 1), lambda i: (i, 0)),
        ],
        out_specs=pl.BlockSpec((tile, fout_p), lambda i: (i, 0)),
        compiler_params=pltpu.CompilerParams(
            dimension_semantics=("parallel",),
            vmem_limit_bytes=_VMEM_LIMIT),
    )(h_p, w_p, dinv)


def _aggregate(adj_p, s, dinv, b_p, apply_elu, tile):
    n_p = adj_p.shape[0]
    f_p = s.shape[1]
    grid = (n_p // tile, n_p // tile)
    kernel = functools.partial(_aggregate_kernel, apply_elu=apply_elu)
    return pl.pallas_call(
        kernel,
        out_shape=jax.ShapeDtypeStruct((n_p, f_p), jnp.float32),
        grid=grid,
        in_specs=[
            pl.BlockSpec((tile, tile), lambda i, k: (i, k)),  # adj (bf16)
            pl.BlockSpec((tile, f_p), lambda i, k: (k, 0)),   # scaled, K-indexed (bf16)
            pl.BlockSpec((tile, f_p), lambda i, k: (i, 0)),   # scaled, row-indexed
            pl.BlockSpec((tile, 1), lambda i, k: (i, 0)),     # d^{-1/2}, rows
            pl.BlockSpec((1, f_p), lambda i, k: (0, 0)),      # bias resident
        ],
        out_specs=pl.BlockSpec((tile, f_p), lambda i, k: (i, 0)),
        scratch_shapes=[pltpu.VMEM((tile, f_p), jnp.float32)],
        compiler_params=pltpu.CompilerParams(
            dimension_semantics=("parallel", "arbitrary"),
            vmem_limit_bytes=_VMEM_LIMIT),
    )(adj_p, s, s, dinv, b_p)


@jax.jit
def protein_segmenter2_forward(x, adj, params):
    """x: (N, F_in) f32, adj: (N, N) 0/1 f32, params: w1..w4 / b1..b4.

    Returns (hidden, x4) matching ProteinSegmenter2.forward (eval mode).
    """
    n, f_in = x.shape
    hsize = params["w1"].shape[1]
    num_classes = params["w4"].shape[1]

    # 256-multiple tiles for v6e/v7x MXU when the graph is big enough.
    tile = 128 if n <= 128 else 256
    n_p = _round_up(n, tile)
    fin_p = _round_up(f_in, 128)
    h_p = _round_up(hsize, 128)
    c_p = _round_up(num_classes, 128)

    adj_p = _pad2(adj, n_p, n_p).astype(jnp.bfloat16)   # ship adjacency as bf16
    x_p = _pad2(x.astype(jnp.float32), n_p, fin_p)

    w = [_pad2(params["w1"].astype(jnp.float32), fin_p, h_p),
         _pad2(params["w2"].astype(jnp.float32), h_p, h_p),
         _pad2(params["w3"].astype(jnp.float32), h_p, h_p),
         _pad2(params["w4"].astype(jnp.float32), h_p, c_p)]
    b = [_pad1(params["b1"].astype(jnp.float32), h_p).reshape(1, h_p),
         _pad1(params["b2"].astype(jnp.float32), h_p).reshape(1, h_p),
         _pad1(params["b3"].astype(jnp.float32), h_p).reshape(1, h_p),
         _pad1(params["b4"].astype(jnp.float32), c_p).reshape(1, c_p)]

    # d^{-1/2} computed once; reused by all 4 layers.
    dinv = _degree_inv_sqrt(adj_p, tile)

    def layer(h, wi, bi, apply_elu):
        s = _support(h, wi, dinv, tile)                 # scaled = dinv * (h @ W), bf16
        return _aggregate(adj_p, s, dinv, bi, apply_elu, tile)

    h1 = layer(x_p, w[0], b[0], True)
    h2 = layer(h1, w[1], b[1], True)
    hidden_p = layer(h2, w[2], b[2], True)
    x4_p = layer(hidden_p, w[3], b[3], False)

    return hidden_p[:n, :hsize], x4_p[:n, :num_classes]


# ----------------------------------------------------------------------------
# pure-JAX reference
# ----------------------------------------------------------------------------
def _reference(x, adj, params, mimic_bf16):
    deg = jnp.sum((adj > 0.0).astype(jnp.float32), axis=1)
    dinv = jnp.where(deg > 0.0, lax.rsqrt(deg), 0.0)[:, None]

    def layer(h, w, bias, elu):
        s = dinv * (h @ w)
        if mimic_bf16:
            s_bf = s.astype(jnp.bfloat16)
            agg = jnp.dot(adj.astype(jnp.bfloat16), s_bf,
                          preferred_element_type=jnp.float32)
            ident = s_bf.astype(jnp.float32)
        else:
            agg = adj @ s
            ident = s
        out = dinv * (agg + ident) + bias[None, :]
        if elu:
            out = jnp.where(out > 0.0, out, jnp.exp(jnp.minimum(out, 0.0)) - 1.0)
        return out

    h1 = layer(x, params["w1"], params["b1"], True)
    h2 = layer(h1, params["w2"], params["b2"], True)
    hidden = layer(h2, params["w3"], params["b3"], True)
    x4 = layer(hidden, params["w4"], params["b4"], False)
    return hidden, x4


# ----------------------------------------------------------------------------
# demo / self-check
# ----------------------------------------------------------------------------
if __name__ == "__main__":
    N, F_IN, HSIZE, NUM_CLASSES = 300, 12, 30, 8   # small, exercises 2x2 grid + padding

    key = jax.random.PRNGKey(0)
    keys = jax.random.split(key, 10)

    # node features
    x = jax.random.normal(keys[0], (N, F_IN), dtype=jnp.float32)

    # symmetric 0/1 adjacency, every node degree >= 1, no explicit self loops
    r = jax.random.uniform(keys[1], (N, N))
    adj_rand = ((r + r.T) > 1.0).astype(jnp.float32)
    idx = jnp.arange(N)
    ring = jnp.zeros((N, N), jnp.float32).at[idx, (idx + 1) % N].set(1.0)
    ring = jnp.maximum(ring, ring.T)
    adj = jnp.maximum(adj_rand, ring)
    adj = adj * (1.0 - jnp.eye(N, dtype=jnp.float32))

    # deterministic layer init mirroring reset_parameters(): U(-stdv, stdv),
    # stdv = 1/sqrt(out_features)
    def init_layer(kw, kb, fin, fout):
        stdv = 1.0 / math.sqrt(fout)
        wgt = jax.random.uniform(kw, (fin, fout), jnp.float32, -stdv, stdv)
        bia = jax.random.uniform(kb, (fout,), jnp.float32, -stdv, stdv)
        return wgt, bia

    w1, b1 = init_layer(keys[2], keys[3], F_IN, HSIZE)
    w2, b2 = init_layer(keys[4], keys[5], HSIZE, HSIZE)
    w3, b3 = init_layer(keys[6], keys[7], HSIZE, HSIZE)
    w4, b4 = init_layer(keys[8], keys[9], HSIZE, NUM_CLASSES)
    params = dict(w1=w1, b1=b1, w2=w2, b2=b2, w3=w3, b3=b3, w4=w4, b4=b4)

    hidden, x4 = protein_segmenter2_forward(x, adj, params)
    hidden = jax.block_until_ready(hidden)
    x4 = jax.block_until_ready(x4)

    assert hidden.shape == (N, HSIZE)
    assert x4.shape == (N, NUM_CLASSES)

    # tight check vs reference using the same bf16 rounding as the kernels
    hid_bf, x4_bf = _reference(x, adj, params, mimic_bf16=True)
    assert jnp.allclose(hidden, hid_bf, atol=5e-3, rtol=5e-3)
    assert jnp.allclose(x4, x4_bf, atol=5e-3, rtol=5e-3)

    # loose check vs full-f32 reference (bf16 adjacency/support path ~1e-3)
    hid_f32, x4_f32 = _reference(x, adj, params, mimic_bf16=False)
    assert jnp.allclose(hidden, hid_f32, atol=5e-2, rtol=5e-2)
    assert jnp.allclose(x4, x4_f32, atol=5e-2, rtol=5e-2)

    print("KERNEL_OK")
</pallas_src>

<mosaic_0001>
module attributes {stable_mosaic.version = 11 : i64} {
  func.func @_degree_kernel(%arg0: i32, %arg1: i32, %arg2: memref<256x256xbf16, #tpu.memory_space<vmem>>, %arg3: memref<256x1xf32, #tpu.memory_space<vmem>>, %arg4: memref<256x1xf32, #tpu.memory_space<vmem>>) attributes {dimension_semantics = [#tpu.dimension_semantics<parallel>, #tpu.dimension_semantics<arbitrary>], iteration_bounds = array<i64: 2, 2>, scalar_prefetch = 0 : i64, scratch_operands = 1 : i64, tpu.core_type = #tpu.core_type<tc>, window_params = [{transform_indices = @transform_0, window_bounds = array<i64: 256, 256>}, {transform_indices = @transform_1, window_bounds = array<i64: 256, 1>}]} {
    %c0_i32 = arith.constant 0 : i32
    %0 = arith.cmpi eq, %arg1, %c0_i32 : i32
    %1 = arith.extui %0 : i1 to i32
    %c0_i32_0 = arith.constant 0 : i32
    %2 = arith.cmpi ne, %1, %c0_i32_0 : i32
    scf.if %2 {
      %cst_8 = arith.constant 0.000000e+00 : f32
      %16 = vector.broadcast %cst_8 : f32 to vector<256x1xf32>
      %c0_9 = arith.constant 0 : index
      %c0_10 = arith.constant 0 : index
      %17 = vector.load %arg4[%c0_9, %c0_10] : memref<256x1xf32, #tpu.memory_space<vmem>>, vector<256x1xf32>
      tpu.vector_store %arg4[%c0_9, %c0_10], %16 {strides = array<i32>} : memref<256x1xf32, #tpu.memory_space<vmem>>, vector<256x1xf32>,
    } else {
    }
    %c0 = arith.constant 0 : index
    %c0_1 = arith.constant 0 : index
    %3 = vector.load %arg4[%c0, %c0_1] : memref<256x1xf32, #tpu.memory_space<vmem>>, vector<256x1xf32>
    %c0_2 = arith.constant 0 : index
    %c0_3 = arith.constant 0 : index
    %4 = vector.load %arg2[%c0_2, %c0_3] : memref<256x256xbf16, #tpu.memory_space<vmem>>, vector<256x256xbf16>
    %cst = arith.constant 0.000000e+00 : bf16
    %5 = vector.broadcast %cst : bf16 to vector<256x256xbf16>
    %6 = arith.cmpf ogt, %4, %5 : vector<256x256xbf16>
    %7 = arith.extui %6 : vector<256x256xi1> to vector<256x256xi32>
    %8 = arith.sitofp %7 : vector<256x256xi32> to vector<256x256xf32>
    %cst_4 = arith.constant dense<0.000000e+00> : vector<256xf32>
    %9 = vector.multi_reduction <add>, %8, %cst_4 [1] : vector<256x256xf32> to vector<256xf32>
    %10 = vector.shape_cast %9 : vector<256xf32> to vector<256x1xf32>
    %11 = arith.addf %3, %10 : vector<256x1xf32>
    %c0_5 = arith.constant 0 : index
    %c0_6 = arith.constant 0 : index
    %12 = vector.load %arg4[%c0_5, %c0_6] : memref<256x1xf32, #tpu.memory_space<vmem>>, vector<256x1xf32>
    tpu.vector_store %arg4[%c0_5, %c0_6], %11 {strides = array<i32>} : memref<256x1xf32, #tpu.memory_space<vmem>>, vector<256x1xf32>,
    %c1_i32 = arith.constant 1 : i32
    %13 = arith.cmpi eq, %arg1, %c1_i32 : i32
    %14 = arith.extui %13 : i1 to i32
    %c0_i32_7 = arith.constant 0 : i32
    %15 = arith.cmpi ne, %14, %c0_i32_7 : i32
    scf.if %15 {
      %c0_8 = arith.constant 0 : index
      %c0_9 = arith.constant 0 : index
      %16 = vector.load %arg4[%c0_8, %c0_9] : memref<256x1xf32, #tpu.memory_space<vmem>>, vector<256x1xf32>
      %cst_10 = arith.constant 0.000000e+00 : f32
      %17 = vector.broadcast %cst_10 : f32 to vector<256x1xf32>
      %18 = arith.cmpf ogt, %16, %17 : vector<256x1xf32>
      %19 = math.rsqrt %16 : vector<256x1xf32>
      %cst_11 = arith.constant 0.000000e+00 : f32
      %20 = vector.broadcast %cst_11 : f32 to vector<256x1xf32>
      %21 = arith.select %18, %19, %20 : vector<256x1xi1>, vector<256x1xf32>
      %c0_12 = arith.constant 0 : index
      %c0_13 = arith.constant 0 : index
      %22 = vector.load %arg3[%c0_12, %c0_13] : memref<256x1xf32, #tpu.memory_space<vmem>>, vector<256x1xf32>
      tpu.vector_store %arg3[%c0_12, %c0_13], %21 {strides = array<i32>} : memref<256x1xf32, #tpu.memory_space<vmem>>, vector<256x1xf32>,
    } else {
    }
    return
  }
  func.func @transform_0(%arg0: i32, %arg1: i32) -> (i32, i32) {
    %c0_i32 = arith.constant 0 : i32
    return %arg0, %arg1 : i32, i32
  }
  func.func @transform_1(%arg0: i32, %arg1: i32) -> (i32, i32) {
    %c0_i32 = arith.constant 0 : i32
    %c0_i32_0 = arith.constant 0 : i32
    return %arg0, %c0_i32 : i32, i32
  }
}

module attributes {stable_mosaic.version = 11 : i64} {
  func.func @_aggregate_kernel(%arg0: i32, %arg1: i32, %arg2: memref<256x256xbf16, #tpu.memory_space<vmem>>, %arg3: memref<256x128xbf16, #tpu.memory_space<vmem>>, %arg4: memref<256x128xbf16, #tpu.memory_space<vmem>>, %arg5: memref<256x1xf32, #tpu.memory_space<vmem>>, %arg6: memref<1x128xf32, #tpu.memory_space<vmem>>, %arg7: memref<256x128xf32, #tpu.memory_space<vmem>>, %arg8: memref<256x128xf32, #tpu.memory_space<vmem>>) attributes {dimension_semantics = [#tpu.dimension_semantics<parallel>, #tpu.dimension_semantics<arbitrary>], iteration_bounds = array<i64: 2, 2>, scalar_prefetch = 0 : i64, scratch_operands = 1 : i64, tpu.core_type = #tpu.core_type<tc>, window_params = [{transform_indices = @transform_0, window_bounds = array<i64: 256, 256>}, {transform_indices = @transform_1, window_bounds = array<i64: 256, 128>}, {transform_indices = @transform_2, window_bounds = array<i64: 256, 128>}, {transform_indices = @transform_3, window_bounds = array<i64: 256, 1>}, {pipeline_mode = #tpu.pipeline_mode<synchronous>, transform_indices = @transform_4, window_bounds = array<i64: 1, 128>}, {transform_indices = @transform_5, window_bounds = array<i64: 256, 128>}]} {
    %c0_i32 = arith.constant 0 : i32
    %0 = arith.cmpi eq, %arg1, %c0_i32 : i32
    %1 = arith.extui %0 : i1 to i32
    %c0_i32_0 = arith.constant 0 : i32
    %2 = arith.cmpi ne, %1, %c0_i32_0 : i32
    scf.if %2 {
      %cst_9 = arith.constant 0.000000e+00 : f32
      %12 = vector.broadcast %cst_9 : f32 to vector<256x128xf32>
      %c0_10 = arith.constant 0 : index
      %c0_11 = arith.constant 0 : index
      %13 = vector.load %arg8[%c0_10, %c0_11] : memref<256x128xf32, #tpu.memory_space<vmem>>, vector<256x128xf32>
      tpu.vector_store %arg8[%c0_10, %c0_11], %12 {strides = array<i32>} : memref<256x128xf32, #tpu.memory_space<vmem>>, vector<256x128xf32>,
    } else {
    }
    %c0 = arith.constant 0 : index
    %c0_1 = arith.constant 0 : index
    %3 = vector.load %arg8[%c0, %c0_1] : memref<256x128xf32, #tpu.memory_space<vmem>>, vector<256x128xf32>
    %c0_2 = arith.constant 0 : index
    %c0_3 = arith.constant 0 : index
    %4 = vector.load %arg2[%c0_2, %c0_3] : memref<256x256xbf16, #tpu.memory_space<vmem>>, vector<256x256xbf16>
    %c0_4 = arith.constant 0 : index
    %c0_5 = arith.constant 0 : index
    %5 = vector.load %arg3[%c0_4, %c0_5] : memref<256x128xbf16, #tpu.memory_space<vmem>>, vector<256x128xbf16>
    %cst = arith.constant dense<0.000000e+00> : vector<256x128xf32>
    %6 = tpu.matmul %4, %5, %cst {dimension_numbers = #tpu.dot_dimension_numbers<[1], [0], [0], [1], [0, 0, 1, 1], [], []>} : vector<256x256xbf16>, vector<256x128xbf16>, vector<256x128xf32> -> vector<256x128xf32>
    %7 = arith.addf %3, %6 : vector<256x128xf32>
    %c0_6 = arith.constant 0 : index
    %c0_7 = arith.constant 0 : index
    %8 = vector.load %arg8[%c0_6, %c0_7] : memref<256x128xf32, #tpu.memory_space<vmem>>, vector<256x128xf32>
    tpu.vector_store %arg8[%c0_6, %c0_7], %7 {strides = array<i32>} : memref<256x128xf32, #tpu.memory_space<vmem>>, vector<256x128xf32>,
    %c1_i32 = arith.constant 1 : i32
    %9 = arith.cmpi eq, %arg1, %c1_i32 : i32
    %10 = arith.extui %9 : i1 to i32
    %c0_i32_8 = arith.constant 0 : i32
    %11 = arith.cmpi ne, %10, %c0_i32_8 : i32
    scf.if %11 {
      %c0_9 = arith.constant 0 : index
      %c0_10 = arith.constant 0 : index
      %12 = vector.load %arg5[%c0_9, %c0_10] : memref<256x1xf32, #tpu.memory_space<vmem>>, vector<256x1xf32>
      %c0_11 = arith.constant 0 : index
      %c0_12 = arith.constant 0 : index
      %13 = vector.load %arg8[%c0_11, %c0_12] : memref<256x128xf32, #tpu.memory_space<vmem>>, vector<256x128xf32>
      %c0_13 = arith.constant 0 : index
      %c0_14 = arith.constant 0 : index
      %14 = vector.load %arg4[%c0_13, %c0_14] : memref<256x128xbf16, #tpu.memory_space<vmem>>, vector<256x128xbf16>
      %15 = arith.extf %14 : vector<256x128xbf16> to vector<256x128xf32>
      %16 = arith.addf %13, %15 : vector<256x128xf32>
      %17 = vector.broadcast %12 : vector<256x1xf32> to vector<256x128xf32>
      %18 = arith.mulf %17, %16 : vector<256x128xf32>
      %c0_15 = arith.constant 0 : index
      %c0_16 = arith.constant 0 : index
      %19 = vector.load %arg6[%c0_15, %c0_16] : memref<1x128xf32, #tpu.memory_space<vmem>>, vector<1x128xf32>
      %20 = vector.broadcast %19 : vector<1x128xf32> to vector<256x128xf32>
      %21 = arith.addf %18, %20 : vector<256x128xf32>
      %cst_17 = arith.constant 0.000000e+00 : f32
      %22 = vector.broadcast %cst_17 : f32 to vector<256x128xf32>
      %23 = arith.cmpf ogt, %21, %22 : vector<256x128xf32>
      %cst_18 = arith.constant 0.000000e+00 : f32
      %24 = vector.broadcast %cst_18 : f32 to vector<256x128xf32>
      %25 = arith.minimumf %21, %24 : vector<256x128xf32>
      %26 = math.exp %25 : vector<256x128xf32>
      %cst_19 = arith.constant 1.000000e+00 : f32
      %27 = vector.broadcast %cst_19 : f32 to vector<256x128xf32>
      %28 = arith.subf %26, %27 : vector<256x128xf32>
      %29 = arith.select %23, %21, %28 : vector<256x128xi1>, vector<256x128xf32>
      %c0_20 = arith.constant 0 : index
      %c0_21 = arith.constant 0 : index
      %30 = vector.load %arg7[%c0_20, %c0_21] : memref<256x128xf32, #tpu.memory_space<vmem>>, vector<256x128xf32>
      tpu.vector_store %arg7[%c0_20, %c0_21], %29 {strides = array<i32>} : memref<256x128xf32, #tpu.memory_space<vmem>>, vector<256x128xf32>,
    } else {
    }
    return
  }
  func.func @transform_0(%arg0: i32, %arg1: i32) -> (i32, i32) {
    %c0_i32 = arith.constant 0 : i32
    return %arg0, %arg1 : i32, i32
  }
  func.func @transform_1(%arg0: i32, %arg1: i32) -> (i32, i32) {
    %c0_i32 = arith.constant 0 : i32
    %c0_i32_0 = arith.constant 0 : i32
    return %arg1, %c0_i32 : i32, i32
  }
  func.func @transform_2(%arg0: i32, %arg1: i32) -> (i32, i32) {
    %c0_i32 = arith.constant 0 : i32
    %c0_i32_0 = arith.constant 0 : i32
    return %arg0, %c0_i32 : i32, i32
  }
  func.func @transform_3(%arg0: i32, %arg1: i32) -> (i32, i32) {
    %c0_i32 = arith.constant 0 : i32
    %c0_i32_0 = arith.constant 0 : i32
    return %arg0, %c0_i32 : i32, i32
  }
  func.func @transform_4(%arg0: i32, %arg1: i32) -> (i32, i32) {
    %c0_i32 = arith.constant 0 : i32
    %c0_i32_0 = arith.constant 0 : i32
    %c0_i32_1 = arith.constant 0 : i32
    return %c0_i32, %c0_i32_0 : i32, i32
  }
  func.func @transform_5(%arg0: i32, %arg1: i32) -> (i32, i32) {
    %c0_i32 = arith.constant 0 : i32
    %c0_i32_0 = arith.constant 0 : i32
    return %arg0, %c0_i32 : i32, i32
  }
}

module attributes {stable_mosaic.version = 11 : i64} {
  func.func @_support_kernel(%arg0: i32, %arg1: memref<256x128xf32, #tpu.memory_space<vmem>>, %arg2: memref<128x128xf32, #tpu.memory_space<vmem>>, %arg3: memref<256x1xf32, #tpu.memory_space<vmem>>, %arg4: memref<256x128xbf16, #tpu.memory_space<vmem>>) attributes {dimension_semantics = [#tpu.dimension_semantics<parallel>], iteration_bounds = array<i64: 2>, scalar_prefetch = 0 : i64, scratch_operands = 0 : i64, tpu.core_type = #tpu.core_type<tc>, window_params = [{transform_indices = @transform_0, window_bounds = array<i64: 256, 128>}, {pipeline_mode = #tpu.pipeline_mode<synchronous>, transform_indices = @transform_1, window_bounds = array<i64: 128, 128>}, {transform_indices = @transform_2, window_bounds = array<i64: 256, 1>}, {transform_indices = @transform_3, window_bounds = array<i64: 256, 128>}]} {
    %c0 = arith.constant 0 : index
    %c0_0 = arith.constant 0 : index
    %0 = vector.load %arg1[%c0, %c0_0] : memref<256x128xf32, #tpu.memory_space<vmem>>, vector<256x128xf32>
    %c0_1 = arith.constant 0 : index
    %c0_2 = arith.constant 0 : index
    %1 = vector.load %arg2[%c0_1, %c0_2] : memref<128x128xf32, #tpu.memory_space<vmem>>, vector<128x128xf32>
    %cst = arith.constant dense<0.000000e+00> : vector<256x128xf32>
    %2 = tpu.matmul %0, %1, %cst {dimension_numbers = #tpu.dot_dimension_numbers<[1], [0], [0], [1], [0, 0, 1, 1], [], []>} : vector<256x128xf32>, vector<128x128xf32>, vector<256x128xf32> -> vector<256x128xf32>
    %c0_3 = arith.constant 0 : index
    %c0_4 = arith.constant 0 : index
    %3 = vector.load %arg3[%c0_3, %c0_4] : memref<256x1xf32, #tpu.memory_space<vmem>>, vector<256x1xf32>
    %4 = vector.broadcast %3 : vector<256x1xf32> to vector<256x128xf32>
    %5 = arith.mulf %4, %2 : vector<256x128xf32>
    %6 = arith.truncf %5 : vector<256x128xf32> to vector<256x128xbf16>
    %c0_5 = arith.constant 0 : index
    %c0_6 = arith.constant 0 : index
    %7 = vector.load %arg4[%c0_5, %c0_6] : memref<256x128xbf16, #tpu.memory_space<vmem>>, vector<256x128xbf16>
    tpu.vector_store %arg4[%c0_5, %c0_6], %6 {strides = array<i32>} : memref<256x128xbf16, #tpu.memory_space<vmem>>, vector<256x128xbf16>,
    return
  }
  func.func @transform_0(%arg0: i32) -> (i32, i32) {
    %c0_i32 = arith.constant 0 : i32
    %c0_i32_0 = arith.constant 0 : i32
    return %arg0, %c0_i32 : i32, i32
  }
  func.func @transform_1(%arg0: i32) -> (i32, i32) {
    %c0_i32 = arith.constant 0 : i32
    %c0_i32_0 = arith.constant 0 : i32
    %c0_i32_1 = arith.constant 0 : i32
    return %c0_i32, %c0_i32_0 : i32, i32
  }
  func.func @transform_2(%arg0: i32) -> (i32, i32) {
    %c0_i32 = arith.constant 0 : i32
    %c0_i32_0 = arith.constant 0 : i32
    return %arg0, %c0_i32 : i32, i32
  }
  func.func @transform_3(%arg0: i32) -> (i32, i32) {
    %c0_i32 = arith.constant 0 : i32
    %c0_i32_0 = arith.constant 0 : i32
    return %arg0, %c0_i32 : i32, i32
  }
}

module attributes {stable_mosaic.version = 11 : i64} {
  func.func @_aggregate_kernel(%arg0: i32, %arg1: i32, %arg2: memref<256x256xbf16, #tpu.memory_space<vmem>>, %arg3: memref<256x128xbf16, #tpu.memory_space<vmem>>, %arg4: memref<256x128xbf16, #tpu.memory_space<vmem>>, %arg5: memref<256x1xf32, #tpu.memory_space<vmem>>, %arg6: memref<1x128xf32, #tpu.memory_space<vmem>>, %arg7: memref<256x128xf32, #tpu.memory_space<vmem>>, %arg8: memref<256x128xf32, #tpu.memory_space<vmem>>) attributes {dimension_semantics = [#tpu.dimension_semantics<parallel>, #tpu.dimension_semantics<arbitrary>], iteration_bounds = array<i64: 2, 2>, scalar_prefetch = 0 : i64, scratch_operands = 1 : i64, tpu.core_type = #tpu.core_type<tc>, window_params = [{transform_indices = @transform_0, window_bounds = array<i64: 256, 256>}, {transform_indices = @transform_1, window_bounds = array<i64: 256, 128>}, {transform_indices = @transform_2, window_bounds = array<i64: 256, 128>}, {transform_indices = @transform_3, window_bounds = array<i64: 256, 1>}, {pipeline_mode = #tpu.pipeline_mode<synchronous>, transform_indices = @transform_4, window_bounds = array<i64: 1, 128>}, {transform_indices = @transform_5, window_bounds = array<i64: 256, 128>}]} {
    %c0_i32 = arith.constant 0 : i32
    %0 = arith.cmpi eq, %arg1, %c0_i32 : i32
    %1 = arith.extui %0 : i1 to i32
    %c0_i32_0 = arith.constant 0 : i32
    %2 = arith.cmpi ne, %1, %c0_i32_0 : i32
    scf.if %2 {
      %cst_9 = arith.constant 0.000000e+00 : f32
      %12 = vector.broadcast %cst_9 : f32 to vector<256x128xf32>
      %c0_10 = arith.constant 0 : index
      %c0_11 = arith.constant 0 : index
      %13 = vector.load %arg8[%c0_10, %c0_11] : memref<256x128xf32, #tpu.memory_space<vmem>>, vector<256x128xf32>
      tpu.vector_store %arg8[%c0_10, %c0_11], %12 {strides = array<i32>} : memref<256x128xf32, #tpu.memory_space<vmem>>, vector<256x128xf32>,
    } else {
    }
    %c0 = arith.constant 0 : index
    %c0_1 = arith.constant 0 : index
    %3 = vector.load %arg8[%c0, %c0_1] : memref<256x128xf32, #tpu.memory_space<vmem>>, vector<256x128xf32>
    %c0_2 = arith.constant 0 : index
    %c0_3 = arith.constant 0 : index
    %4 = vector.load %arg2[%c0_2, %c0_3] : memref<256x256xbf16, #tpu.memory_space<vmem>>, vector<256x256xbf16>
    %c0_4 = arith.constant 0 : index
    %c0_5 = arith.constant 0 : index
    %5 = vector.load %arg3[%c0_4, %c0_5] : memref<256x128xbf16, #tpu.memory_space<vmem>>, vector<256x128xbf16>
    %cst = arith.constant dense<0.000000e+00> : vector<256x128xf32>
    %6 = tpu.matmul %4, %5, %cst {dimension_numbers = #tpu.dot_dimension_numbers<[1], [0], [0], [1], [0, 0, 1, 1], [], []>} : vector<256x256xbf16>, vector<256x128xbf16>, vector<256x128xf32> -> vector<256x128xf32>
    %7 = arith.addf %3, %6 : vector<256x128xf32>
    %c0_6 = arith.constant 0 : index
    %c0_7 = arith.constant 0 : index
    %8 = vector.load %arg8[%c0_6, %c0_7] : memref<256x128xf32, #tpu.memory_space<vmem>>, vector<256x128xf32>
    tpu.vector_store %arg8[%c0_6, %c0_7], %7 {strides = array<i32>} : memref<256x128xf32, #tpu.memory_space<vmem>>, vector<256x128xf32>,
    %c1_i32 = arith.constant 1 : i32
    %9 = arith.cmpi eq, %arg1, %c1_i32 : i32
    %10 = arith.extui %9 : i1 to i32
    %c0_i32_8 = arith.constant 0 : i32
    %11 = arith.cmpi ne, %10, %c0_i32_8 : i32
    scf.if %11 {
      %c0_9 = arith.constant 0 : index
      %c0_10 = arith.constant 0 : index
      %12 = vector.load %arg5[%c0_9, %c0_10] : memref<256x1xf32, #tpu.memory_space<vmem>>, vector<256x1xf32>
      %c0_11 = arith.constant 0 : index
      %c0_12 = arith.constant 0 : index
      %13 = vector.load %arg8[%c0_11, %c0_12] : memref<256x128xf32, #tpu.memory_space<vmem>>, vector<256x128xf32>
      %c0_13 = arith.constant 0 : index
      %c0_14 = arith.constant 0 : index
      %14 = vector.load %arg4[%c0_13, %c0_14] : memref<256x128xbf16, #tpu.memory_space<vmem>>, vector<256x128xbf16>
      %15 = arith.extf %14 : vector<256x128xbf16> to vector<256x128xf32>
      %16 = arith.addf %13, %15 : vector<256x128xf32>
      %17 = vector.broadcast %12 : vector<256x1xf32> to vector<256x128xf32>
      %18 = arith.mulf %17, %16 : vector<256x128xf32>
      %c0_15 = arith.constant 0 : index
      %c0_16 = arith.constant 0 : index
      %19 = vector.load %arg6[%c0_15, %c0_16] : memref<1x128xf32, #tpu.memory_space<vmem>>, vector<1x128xf32>
      %20 = vector.broadcast %19 : vector<1x128xf32> to vector<256x128xf32>
      %21 = arith.addf %18, %20 : vector<256x128xf32>
      %c0_17 = arith.constant 0 : index
      %c0_18 = arith.constant 0 : index
      %22 = vector.load %arg7[%c0_17, %c0_18] : memref<256x128xf32, #tpu.memory_space<vmem>>, vector<256x128xf32>
      tpu.vector_store %arg7[%c0_17, %c0_18], %21 {strides = array<i32>} : memref<256x128xf32, #tpu.memory_space<vmem>>, vector<256x128xf32>,
    } else {
    }
    return
  }
  func.func @transform_0(%arg0: i32, %arg1: i32) -> (i32, i32) {
    %c0_i32 = arith.constant 0 : i32
    return %arg0, %arg1 : i32, i32
  }
  func.func @transform_1(%arg0: i32, %arg1: i32) -> (i32, i32) {
    %c0_i32 = arith.constant 0 : i32
    %c0_i32_0 = arith.constant 0 : i32
    return %arg1, %c0_i32 : i32, i32
  }
  func.func @transform_2(%arg0: i32, %arg1: i32) -> (i32, i32) {
    %c0_i32 = arith.constant 0 : i32
    %c0_i32_0 = arith.constant 0 : i32
    return %arg0, %c0_i32 : i32, i32
  }
  func.func @transform_3(%arg0: i32, %arg1: i32) -> (i32, i32) {
    %c0_i32 = arith.constant 0 : i32
    %c0_i32_0 = arith.constant 0 : i32
    return %arg0, %c0_i32 : i32, i32
  }
  func.func @transform_4(%arg0: i32, %arg1: i32) -> (i32, i32) {
    %c0_i32 = arith.constant 0 : i32
    %c0_i32_0 = arith.constant 0 : i32
    %c0_i32_1 = arith.constant 0 : i32
    return %c0_i32, %c0_i32_0 : i32, i32
  }
  func.func @transform_5(%arg0: i32, %arg1: i32) -> (i32, i32) {
    %c0_i32 = arith.constant 0 : i32
    %c0_i32_0 = arith.constant 0 : i32
    return %arg0, %c0_i32 : i32, i32
  }
}

</mosaic_0001>

<llo_original>
// kernel: protein_segmenter2_forward.10
$region0: #{protein_segmenter2_forward.10}
  #allocation0 [shape = 'u32[]', space=smem, size = 0x4, offset = 0x4, fixed_abs, tag = 'smem constant byte address 0x4 - core index']
  #allocation1 [shape = 'u32[72,128]{1,0:T(1,128)}', space=vmem, size = 0x9000, scoped, tag = 'internal scratch']
  %s0 = inlined_call_operand.vmem [shape: f32[512,128], index: 0, kind: input, shape index: {}]
  %s1 = inlined_call_operand.vmem [shape: f32[128,128], index: 1, kind: input, shape index: {}]
  %s2 = inlined_call_operand.vmem [shape: f32[512,1], index: 2, kind: input, shape index: {}]
  %s3 = inlined_call_operand.vmem [shape: bf16[512,128], index: 3, kind: output, shape index: {}]
  %s4 = sld [smem:[#allocation0]]
  $region45: #{protein_segmenter2_forward.10} parent=0
    _
  %s6 = ssub.s32 1, %s4
  %s7 = scalar_select 0, %s6, %s4
  loop: start=0, step=1, limit=4
  $region2: #{protein_segmenter2_forward.10} parent=0 // loop_pre_header
    _
  $region3: #{protein_segmenter2_forward.10} parent=0 // loop_header
    %s9 = sphi 0, %s13
    %p10 = scmp.ge.s32.totalorder %s9, 4
    %s19 = sphi 0, %s21
    %s22 = sphi 0, %s19
    %s23 = sphi 0, %s22
    %s39 = sphi 0, %s23
    %s43 = sphi 0, %s43
    %s45 = sphi 0, %s43
    %s46 = sphi 0, %s45
    %s60 = sphi 0, %s46
    %s66 = sphi 0, %s68
    %s69 = sphi 0, %s66
    %s70 = sphi 0, %s69
    %s86 = sphi 0, %s70
    %s92 = sphi 0, %s94
    %s95 = sphi 0, %s92
    %s96 = sphi 0, %s95
    %s112 = sphi 0, %s96
  $region4: #{protein_segmenter2_forward.10} parent=0 // loop_header_branch
    %12 = sbr.rel (%p10) target = $region8
  $region5: #{protein_segmenter2_forward.10} parent=0 // loop_body
    %s14 = ssub.s32 %s9, 1
    %s15 = ssub.s32 %s9, 2
    %s16 = sadd.s32 %s9, 1
    %s17 = ssub.s32 %s9, %s16
    %p18 = scmp.eq.s32.totalorder %s17, 0
    %s20 = sadd.s32 %s19, 1
    %s21 = scalar_select %p18, %s19, %s20
    %p24 = pneg %p18
    %p25 = scmp.eq.s32.totalorder %s9, 1
    %p26 = por %p24, %p25
    %p27 = scmp.ne.s32.totalorder %s19, %s22
    %p28 = scmp.eq.s32.totalorder %s9, 0
    %p29 = por %p27, %p28
    %p30 = scmp.ne.s32.totalorder %s19, %s22
    %p31 = scmp.eq.s32.totalorder %s14, 1
    %p32 = por %p30, %p31
    %p33 = scmp.ne.s32.totalorder %s22, %s23
    %p34 = scmp.eq.s32.totalorder %s14, 0
    %p35 = por %p33, %p34
    %p36 = scmp.ne.s32.totalorder %s22, %s23
    %p37 = scmp.eq.s32.totalorder %s15, 1
    %p38 = por %p36, %p37
    %p40 = scmp.ne.s32.totalorder %s23, %s39
    %p41 = scmp.eq.s32.totalorder %s15, 0
    %p42 = por %p40, %p41
    %s44 = sadd.s32 %s43, 1
    %p47 = scmp.eq.s32.totalorder %s9, 1
    %p48 = scmp.ne.s32.totalorder %s43, %s45
    %p49 = scmp.eq.s32.totalorder %s9, 0
    %p50 = por %p48, %p49
    %p51 = scmp.ne.s32.totalorder %s43, %s45
    %p52 = scmp.eq.s32.totalorder %s14, 1
    %p53 = por %p51, %p52
    %p54 = scmp.ne.s32.totalorder %s45, %s46
    %p55 = scmp.eq.s32.totalorder %s14, 0
    %p56 = por %p54, %p55
    %p57 = scmp.ne.s32.totalorder %s45, %s46
    %p58 = scmp.eq.s32.totalorder %s15, 1
    %p59 = por %p57, %p58
    %p61 = scmp.ne.s32.totalorder %s46, %s60
    %p62 = scmp.eq.s32.totalorder %s15, 0
    %p63 = por %p61, %p62
    %s64 = ssub.s32 %s9, %s16
    %p65 = scmp.eq.s32.totalorder %s64, 0
    %s67 = sadd.s32 %s66, 1
    %s68 = scalar_select %p65, %s66, %s67
    %p71 = pneg %p65
    %p72 = scmp.eq.s32.totalorder %s9, 1
    %p73 = por %p71, %p72
    %p74 = scmp.ne.s32.totalorder %s66, %s69
    %p75 = scmp.eq.s32.totalorder %s9, 0
    %p76 = por %p74, %p75
    %p77 = scmp.ne.s32.totalorder %s66, %s69
    %p78 = scmp.eq.s32.totalorder %s14, 1
    %p79 = por %p77, %p78
    %p80 = scmp.ne.s32.totalorder %s69, %s70
    %p81 = scmp.eq.s32.totalorder %s14, 0
    %p82 = por %p80, %p81
    %p83 = scmp.ne.s32.totalorder %s69, %s70
    %p84 = scmp.eq.s32.totalorder %s15, 1
    %p85 = por %p83, %p84
    %p87 = scmp.ne.s32.totalorder %s70, %s86
    %p88 = scmp.eq.s32.totalorder %s15, 0
    %p89 = por %p87, %p88
    %s90 = ssub.s32 %s9, %s16
    %p91 = scmp.eq.s32.totalorder %s90, 0
    %s93 = sadd.s32 %s92, 1
    %s94 = scalar_select %p91, %s92, %s93
    %p97 = pneg %p91
    %p98 = scmp.eq.s32.totalorder %s9, 1
    %p99 = por %p97, %p98
    %p100 = scmp.ne.s32.totalorder %s92, %s95
    %p101 = scmp.eq.s32.totalorder %s9, 0
    %p102 = por %p100, %p101
    %p103 = scmp.ne.s32.totalorder %s92, %s95
    %p104 = scmp.eq.s32.totalorder %s14, 1
    %p105 = por %p103, %p104
    %p106 = scmp.ne.s32.totalorder %s95, %s96
    %p107 = scmp.eq.s32.totalorder %s14, 0
    %p108 = por %p106, %p107
    %p109 = scmp.ne.s32.totalorder %s95, %s96
    %p110 = scmp.eq.s32.totalorder %s15, 1
    %p111 = por %p109, %p110
    %p113 = scmp.ne.s32.totalorder %s96, %s112
    %p114 = scmp.eq.s32.totalorder %s15, 0
    %p115 = por %p113, %p114
    %p116 = scmp.le.s32.totalorder 1, %s9
    %p117 = scmp.lt.s32.totalorder %s9, 3
    %p118 = pnand %p116, %p117
    %p119 = pneg %p118
    // Predicated region
    $region9: #{protein_segmenter2_forward.10} parent=5 // pred_check
      _
    $region10: #{protein_segmenter2_forward.10} parent=5 // pred_check_branch
      %121 = sbr.rel (%p118) target = $region12
    $region11: #{protein_segmenter2_forward.10} parent=5 // pred_region
      %s122 = ssub.s32 %s9, 1
      // Predicated region
      $region13: #{protein_segmenter2_forward.10} parent=11 // pred_check
        %p123 = pneg %p56
      $region14: #{protein_segmenter2_forward.10} parent=11 // pred_check_branch
        %125 = sbr.rel (%p123) target = $region16
      $region15: #{protein_segmenter2_forward.10} parent=11 // pred_region
        _
      $region16: #{protein_segmenter2_forward.10} parent=11 // pred_fallthru
        _
    $region12: #{protein_segmenter2_forward.10} parent=5 // pred_fallthru
      _
    %p126 = scmp.lt.s32.totalorder %s9, 2
    // Predicated region
    $region17: #{protein_segmenter2_forward.10} parent=5 // pred_check
      %p127 = pneg %p126
    $region18: #{protein_segmenter2_forward.10} parent=5 // pred_check_branch
      %129 = sbr.rel (%p127) target = $region20
    $region19: #{protein_segmenter2_forward.10} parent=5 // pred_region
      // Predicated region
      $region21: #{protein_segmenter2_forward.10} parent=19 // pred_check
        %p130 = pneg %p29
      $region22: #{protein_segmenter2_forward.10} parent=19 // pred_check_branch
        %132 = sbr.rel (%p130) target = $region24
      $region23: #{protein_segmenter2_forward.10} parent=19 // pred_region
        %s133 = smul.u32 32, %s9
        %p134 = scmp.lt.s32.totalorder %s133, 63
        %s135 = scalar_select %p134, %s133, 63
        %s136 = smul.addr %s135, 8
        %s137 = scalar_lea.vmem %s0, %s136
        %s138 = smul.u32 32, %s9
      $region24: #{protein_segmenter2_forward.10} parent=19 // pred_fallthru
        _
      // Predicated region
      $region25: #{protein_segmenter2_forward.10} parent=19 // pred_check
        %p139 = pneg %p76
      $region26: #{protein_segmenter2_forward.10} parent=19 // pred_check_branch
        %141 = sbr.rel (%p139) target = $region28
      $region27: #{protein_segmenter2_forward.10} parent=19 // pred_region
        %s142 = smul.u32 32, %s9
        %p143 = scmp.lt.s32.totalorder %s142, 63
        %s144 = scalar_select %p143, %s142, 63
        %s145 = smul.addr %s144, 8
        %s146 = scalar_lea.vmem %s2, %s145
        %s147 = smul.u32 32, %s9
      $region28: #{protein_segmenter2_forward.10} parent=19 // pred_fallthru
        _
    $region20: #{protein_segmenter2_forward.10} parent=5 // pred_fallthru
      _
    %p148 = scmp.le.s32.totalorder 1, %s9
    %p149 = scmp.lt.s32.totalorder %s9, 3
    %p150 = pnand %p148, %p149
    %p151 = pneg %p150
    // Predicated region
    $region29: #{protein_segmenter2_forward.10} parent=5 // pred_check
      _
    $region30: #{protein_segmenter2_forward.10} parent=5 // pred_check_branch
      %153 = sbr.rel (%p150) target = $region32
    $region31: #{protein_segmenter2_forward.10} parent=5 // pred_region
      %s154 = ssub.s32 %s9, 1
      %s155 = smul.u32 32, %s14
      %p156 = scmp.lt.s32.totalorder %s155, 63
      %s157 = scalar_select %p156, %s155, 63
      %s158 = smul.addr %s157, 8
      %s159 = scalar_lea.vmem %s0, %s158
      %p160 = pneg %p35
      %p161 = pneg %p32
      %p162 = pneg %p56
      %p163 = pneg %p53
      %s164 = smul.u32 32, %s14
      %p165 = scmp.lt.s32.totalorder %s164, 63
      %s166 = scalar_select %p165, %s164, 63
      %s167 = smul.addr %s166, 8
      %s168 = scalar_lea.vmem %s2, %s167
      %p169 = pneg %p82
      %p170 = pneg %p79
      %p171 = pneg %p108
      %p172 = pneg %p105
      %s173 = smul.u32 32, %s14
      %p174 = scmp.lt.s32.totalorder %s173, 63
      %s175 = scalar_select %p174, %s173, 63
      %s176 = smul.addr %s175, 4
      %s177 = scalar_lea.vmem %s3, %s176
      %s178 = smul.u32 32, %s14
      %p179 = scmp.lt.s32.totalorder %s178, 63
      %s180 = scalar_select %p179, %s178, 63
      %s181 = smul.addr %s180, 8
      %s182 = scalar_lea.vmem %s0, %s181
      %s183 = smul.u32 32, %s14
      %s184 = smul.u32 32, %s14
      %p185 = scmp.lt.s32.totalorder %s184, 63
      %s186 = scalar_select %p185, %s184, 63
      %s187 = smul.addr %s186, 8
      %s188 = scalar_lea.vmem %s2, %s187
      %s189 = smul.u32 32, %s14
      %s190 = smul.u32 32, %s14
      %p191 = scmp.lt.s32.totalorder %s190, 63
      %s192 = scalar_select %p191, %s190, 63
      %s193 = smul.addr %s192, 4
      %s194 = scalar_lea.vmem %s3, %s193
      %s195 = smul.u32 32, %s14
      %v196 = vld [vmem:[%s182] sm:$0xff]
      %v197 = vld [vmem:[%s182 + $0x8] sm:$0xff]
      %v198 = vld [vmem:[%s182 + $0x10] sm:$0xff]
      %v199 = vld [vmem:[%s182 + $0x18] sm:$0xff]
      %v200 = vld [vmem:[%s182 + $0x20] sm:$0xff]
      %v201 = vld [vmem:[%s182 + $0x28] sm:$0xff]
      %v202 = vld [vmem:[%s182 + $0x30] sm:$0xff]
      %v203 = vld [vmem:[%s182 + $0x38] sm:$0xff]
      %v204 = vld [vmem:[%s182 + $0x40] sm:$0xff]
      %v205 = vld [vmem:[%s182 + $0x48] sm:$0xff]
      %v206 = vld [vmem:[%s182 + $0x50] sm:$0xff]
      %v207 = vld [vmem:[%s182 + $0x58] sm:$0xff]
      %v208 = vld [vmem:[%s182 + $0x60] sm:$0xff]
      %v209 = vld [vmem:[%s182 + $0x68] sm:$0xff]
      %v210 = vld [vmem:[%s182 + $0x70] sm:$0xff]
      %v211 = vld [vmem:[%s182 + $0x78] sm:$0xff]
      %v212 = vld [vmem:[%s182 + $0x80] sm:$0xff]
      %v213 = vld [vmem:[%s182 + $0x88] sm:$0xff]
      %v214 = vld [vmem:[%s182 + $0x90] sm:$0xff]
      %v215 = vld [vmem:[%s182 + $0x98] sm:$0xff]
      %v216 = vld [vmem:[%s182 + $0xa0] sm:$0xff]
      %v217 = vld [vmem:[%s182 + $0xa8] sm:$0xff]
      %v218 = vld [vmem:[%s182 + $0xb0] sm:$0xff]
      %v219 = vld [vmem:[%s182 + $0xb8] sm:$0xff]
      %v220 = vld [vmem:[%s182 + $0xc0] sm:$0xff]
      %v221 = vld [vmem:[%s182 + $0xc8] sm:$0xff]
      %v222 = vld [vmem:[%s182 + $0xd0] sm:$0xff]
      %v223 = vld [vmem:[%s182 + $0xd8] sm:$0xff]
      %v224 = vld [vmem:[%s182 + $0xe0] sm:$0xff]
      %v225 = vld [vmem:[%s182 + $0xe8] sm:$0xff]
      %v226 = vld [vmem:[%s182 + $0xf0] sm:$0xff]
      %v227 = vld [vmem:[%s182 + $0xf8] sm:$0xff]
      %v228 = vld [vmem:[%s1] sm:$0xff]
      %v229 = vld [vmem:[%s1 + $0x8] sm:$0xff]
      %v230 = vld [vmem:[%s1 + $0x10] sm:$0xff]
      %v231 = vld [vmem:[%s1 + $0x18] sm:$0xff]
      %v232 = vld [vmem:[%s1 + $0x20] sm:$0xff]
      %v233 = vld [vmem:[%s1 + $0x28] sm:$0xff]
      %v234 = vld [vmem:[%s1 + $0x30] sm:$0xff]
      %v235 = vld [vmem:[%s1 + $0x38] sm:$0xff]
      %v236 = vld [vmem:[%s1 + $0x40] sm:$0xff]
      %v237 = vld [vmem:[%s1 + $0x48] sm:$0xff]
      %v238 = vld [vmem:[%s1 + $0x50] sm:$0xff]
      %v239 = vld [vmem:[%s1 + $0x58] sm:$0xff]
      %v240 = vld [vmem:[%s1 + $0x60] sm:$0xff]
      %v241 = vld [vmem:[%s1 + $0x68] sm:$0xff]
      %v242 = vld [vmem:[%s1 + $0x70] sm:$0xff]
      %v243 = vld [vmem:[%s1 + $0x78] sm:$0xff]
      %244 = vmatpush.msra.mxu0 %v243
      %245 = vmatpush.msra.mxu0 %v242
      %246 = vmatpush.msra.mxu0 %v241
      %247 = vmatpush.msra.mxu0 %v240
      %248 = vmatpush.msra.mxu0 %v239
      %249 = vmatpush.msra.mxu0 %v238
      %250 = vmatpush.msra.mxu0 %v237
      %251 = vmatpush.msra.mxu0 %v236
      %252 = vmatpush.msra.mxu0 %v235
      %253 = vmatpush.msra.mxu0 %v234
      %254 = vmatpush.msra.mxu0 %v233
      %255 = vmatpush.msra.mxu0 %v232
      %256 = vmatpush.msra.mxu0 %v231
      %257 = vmatpush.msra.mxu0 %v230
      %258 = vmatpush.msra.mxu0 %v229
      %259 = vmatpush.msra.mxu0 %v228
      %260 = vmatmul.f32.gmra.mxu0 %v196
      %v261 = vpop.f32.mrf.mxu0
      %v262 = vadd.f32 0.0, %v261
      %263 = vmatmul.f32.gmra.mxu0 %v197
      %v264 = vpop.f32.mrf.mxu0
      %v265 = vadd.f32 0.0, %v264
      %266 = vmatmul.f32.gmra.mxu0 %v198
      %v267 = vpop.f32.mrf.mxu0
      %v268 = vadd.f32 0.0, %v267
      %269 = vmatmul.f32.gmra.mxu0 %v199
      %v270 = vpop.f32.mrf.mxu0
      %v271 = vadd.f32 0.0, %v270
      %272 = vmatmul.f32.gmra.mxu0 %v200
      %v273 = vpop.f32.mrf.mxu0
      %v274 = vadd.f32 0.0, %v273
      %275 = vmatmul.f32.gmra.mxu0 %v201
      %v276 = vpop.f32.mrf.mxu0
      %v277 = vadd.f32 0.0, %v276
      %278 = vmatmul.f32.gmra.mxu0 %v202
      %v279 = vpop.f32.mrf.mxu0
      %v280 = vadd.f32 0.0, %v279
      %281 = vmatmul.f32.gmra.mxu0 %v203
      %v282 = vpop.f32.mrf.mxu0
      %v283 = vadd.f32 0.0, %v282
      %284 = vmatmul.f32.gmra.mxu0 %v204
      %v285 = vpop.f32.mrf.mxu0
      %v286 = vadd.f32 0.0, %v285
      %287 = vmatmul.f32.gmra.mxu0 %v205
      %v288 = vpop.f32.mrf.mxu0
      %v289 = vadd.f32 0.0, %v288
      %290 = vmatmul.f32.gmra.mxu0 %v206
      %v291 = vpop.f32.mrf.mxu0
      %v292 = vadd.f32 0.0, %v291
      %293 = vmatmul.f32.gmra.mxu0 %v207
      %v294 = vpop.f32.mrf.mxu0
      %v295 = vadd.f32 0.0, %v294
      %296 = vmatmul.f32.gmra.mxu0 %v208
      %v297 = vpop.f32.mrf.mxu0
      %v298 = vadd.f32 0.0, %v297
      %299 = vmatmul.f32.gmra.mxu0 %v209
      %v300 = vpop.f32.mrf.mxu0
      %v301 = vadd.f32 0.0, %v300
      %302 = vmatmul.f32.gmra.mxu0 %v210
      %v303 = vpop.f32.mrf.mxu0
      %v304 = vadd.f32 0.0, %v303
      %305 = vmatmul.f32.gmra.mxu0 %v211
      %v306 = vpop.f32.mrf.mxu0
      %v307 = vadd.f32 0.0, %v306
      %308 = vmatmul.f32.gmra.mxu0 %v212
      %v309 = vpop.f32.mrf.mxu0
      %v310 = vadd.f32 0.0, %v309
      %311 = vmatmul.f32.gmra.mxu0 %v213
      %v312 = vpop.f32.mrf.mxu0
      %v313 = vadd.f32 0.0, %v312
      %314 = vmatmul.f32.gmra.mxu0 %v214
      %v315 = vpop.f32.mrf.mxu0
      %v316 = vadd.f32 0.0, %v315
      %317 = vmatmul.f32.gmra.mxu0 %v215
      %v318 = vpop.f32.mrf.mxu0
      %v319 = vadd.f32 0.0, %v318
      %320 = vmatmul.f32.gmra.mxu0 %v216
      %v321 = vpop.f32.mrf.mxu0
      %v322 = vadd.f32 0.0, %v321
      %323 = vmatmul.f32.gmra.mxu0 %v217
      %v324 = vpop.f32.mrf.mxu0
      %v325 = vadd.f32 0.0, %v324
      %326 = vmatmul.f32.gmra.mxu0 %v218
      %v327 = vpop.f32.mrf.mxu0
      %v328 = vadd.f32 0.0, %v327
      %329 = vmatmul.f32.gmra.mxu0 %v219
      %v330 = vpop.f32.mrf.mxu0
      %v331 = vadd.f32 0.0, %v330
      %332 = vmatmul.f32.gmra.mxu0 %v220
      %v333 = vpop.f32.mrf.mxu0
      %v334 = vadd.f32 0.0, %v333
      %335 = vmatmul.f32.gmra.mxu0 %v221
      %v336 = vpop.f32.mrf.mxu0
      %v337 = vadd.f32 0.0, %v336
      %338 = vmatmul.f32.gmra.mxu0 %v222
      %v339 = vpop.f32.mrf.mxu0
      %v340 = vadd.f32 0.0, %v339
      %341 = vmatmul.f32.gmra.mxu0 %v223
      %v342 = vpop.f32.mrf.mxu0
      %v343 = vadd.f32 0.0, %v342
      %344 = vmatmul.f32.gmra.mxu0 %v224
      %v345 = vpop.f32.mrf.mxu0
      %v346 = vadd.f32 0.0, %v345
      %347 = vmatmul.f32.gmra.mxu0 %v225
      %v348 = vpop.f32.mrf.mxu0
      %v349 = vadd.f32 0.0, %v348
      %350 = vmatmul.f32.gmra.mxu0 %v226
      %v351 = vpop.f32.mrf.mxu0
      %v352 = vadd.f32 0.0, %v351
      %353 = vmatmul.f32.gmra.mxu0 %v227
      %v354 = vpop.f32.mrf.mxu0
      %v355 = vadd.f32 0.0, %v354
      %356 = vdwg.mxu0
      %v357 = vld [vmem:[%s188] sm:$0xff]
      %v358 = vld [vmem:[%s188 + $0x8] sm:$0xff]
      %v359 = vld [vmem:[%s188 + $0x10] sm:$0xff]
      %v360 = vld [vmem:[%s188 + $0x18] sm:$0xff]
      %v361 = vld [vmem:[%s188 + $0x20] sm:$0xff]
      %v362 = vld [vmem:[%s188 + $0x28] sm:$0xff]
      %v363 = vld [vmem:[%s188 + $0x30] sm:$0xff]
      %v364 = vld [vmem:[%s188 + $0x38] sm:$0xff]
      %v365 = vld [vmem:[%s188 + $0x40] sm:$0xff]
      %v366 = vld [vmem:[%s188 + $0x48] sm:$0xff]
      %v367 = vld [vmem:[%s188 + $0x50] sm:$0xff]
      %v368 = vld [vmem:[%s188 + $0x58] sm:$0xff]
      %v369 = vld [vmem:[%s188 + $0x60] sm:$0xff]
      %v370 = vld [vmem:[%s188 + $0x68] sm:$0xff]
      %v371 = vld [vmem:[%s188 + $0x70] sm:$0xff]
      %v372 = vld [vmem:[%s188 + $0x78] sm:$0xff]
      %v373 = vld [vmem:[%s188 + $0x80] sm:$0xff]
      %v374 = vld [vmem:[%s188 + $0x88] sm:$0xff]
      %v375 = vld [vmem:[%s188 + $0x90] sm:$0xff]
      %v376 = vld [vmem:[%s188 + $0x98] sm:$0xff]
      %v377 = vld [vmem:[%s188 + $0xa0] sm:$0xff]
      %v378 = vld [vmem:[%s188 + $0xa8] sm:$0xff]
      %v379 = vld [vmem:[%s188 + $0xb0] sm:$0xff]
      %v380 = vld [vmem:[%s188 + $0xb8] sm:$0xff]
      %v381 = vld [vmem:[%s188 + $0xc0] sm:$0xff]
      %v382 = vld [vmem:[%s188 + $0xc8] sm:$0xff]
      %v383 = vld [vmem:[%s188 + $0xd0] sm:$0xff]
      %v384 = vld [vmem:[%s188 + $0xd8] sm:$0xff]
      %v385 = vld [vmem:[%s188 + $0xe0] sm:$0xff]
      %v386 = vld [vmem:[%s188 + $0xe8] sm:$0xff]
      %v387 = vld [vmem:[%s188 + $0xf0] sm:$0xff]
      %v388 = vld [vmem:[%s188 + $0xf8] sm:$0xff]
      %390 = vset.pattern.permute.xlu0 0
      %391 = vperm.xlu0 %390, %v357
      %v392 = vpop.permute.xlu0 %391
      %395 = vset.pattern.permute.xlu0 0
      %396 = vperm.xlu0 %395, %v358
      %v397 = vpop.permute.xlu0 %396
      %400 = vset.pattern.permute.xlu0 0
      %401 = vperm.xlu0 %400, %v359
      %v402 = vpop.permute.xlu0 %401
      %405 = vset.pattern.permute.xlu0 0
      %406 = vperm.xlu0 %405, %v360
      %v407 = vpop.permute.xlu0 %406
      %410 = vset.pattern.permute.xlu0 0
      %411 = vperm.xlu0 %410, %v361
      %v412 = vpop.permute.xlu0 %411
      %415 = vset.pattern.permute.xlu0 0
      %416 = vperm.xlu0 %415, %v362
      %v417 = vpop.permute.xlu0 %416
      %420 = vset.pattern.permute.xlu0 0
      %421 = vperm.xlu0 %420, %v363
      %v422 = vpop.permute.xlu0 %421
      %425 = vset.pattern.permute.xlu0 0
      %426 = vperm.xlu0 %425, %v364
      %v427 = vpop.permute.xlu0 %426
      %430 = vset.pattern.permute.xlu0 0
      %431 = vperm.xlu0 %430, %v365
      %v432 = vpop.permute.xlu0 %431
      %435 = vset.pattern.permute.xlu0 0
      %436 = vperm.xlu0 %435, %v366
      %v437 = vpop.permute.xlu0 %436
      %440 = vset.pattern.permute.xlu0 0
      %441 = vperm.xlu0 %440, %v367
      %v442 = vpop.permute.xlu0 %441
      %445 = vset.pattern.permute.xlu0 0
      %446 = vperm.xlu0 %445, %v368
      %v447 = vpop.permute.xlu0 %446
      %450 = vset.pattern.permute.xlu0 0
      %451 = vperm.xlu0 %450, %v369
      %v452 = vpop.permute.xlu0 %451
      %455 = vset.pattern.permute.xlu0 0
      %456 = vperm.xlu0 %455, %v370
      %v457 = vpop.permute.xlu0 %456
      %460 = vset.pattern.permute.xlu0 0
      %461 = vperm.xlu0 %460, %v371
      %v462 = vpop.permute.xlu0 %461
      %465 = vset.pattern.permute.xlu0 0
      %466 = vperm.xlu0 %465, %v372
      %v467 = vpop.permute.xlu0 %466
      %470 = vset.pattern.permute.xlu0 0
      %471 = vperm.xlu0 %470, %v373
      %v472 = vpop.permute.xlu0 %471
      %475 = vset.pattern.permute.xlu0 0
      %476 = vperm.xlu0 %475, %v374
      %v477 = vpop.permute.xlu0 %476
      %480 = vset.pattern.permute.xlu0 0
      %481 = vperm.xlu0 %480, %v375
      %v482 = vpop.permute.xlu0 %481
      %485 = vset.pattern.permute.xlu0 0
      %486 = vperm.xlu0 %485, %v376
      %v487 = vpop.permute.xlu0 %486
      %490 = vset.pattern.permute.xlu0 0
      %491 = vperm.xlu0 %490, %v377
      %v492 = vpop.permute.xlu0 %491
      %495 = vset.pattern.permute.xlu0 0
      %496 = vperm.xlu0 %495, %v378
      %v497 = vpop.permute.xlu0 %496
      %500 = vset.pattern.permute.xlu0 0
      %501 = vperm.xlu0 %500, %v379
      %v502 = vpop.permute.xlu0 %501
      %505 = vset.pattern.permute.xlu0 0
      %506 = vperm.xlu0 %505, %v380
      %v507 = vpop.permute.xlu0 %506
      %510 = vset.pattern.permute.xlu0 0
      %511 = vperm.xlu0 %510, %v381
      %v512 = vpop.permute.xlu0 %511
      %515 = vset.pattern.permute.xlu0 0
      %516 = vperm.xlu0 %515, %v382
      %v517 = vpop.permute.xlu0 %516
      %520 = vset.pattern.permute.xlu0 0
      %521 = vperm.xlu0 %520, %v383
      %v522 = vpop.permute.xlu0 %521
      %525 = vset.pattern.permute.xlu0 0
      %526 = vperm.xlu0 %525, %v384
      %v527 = vpop.permute.xlu0 %526
      %530 = vset.pattern.permute.xlu0 0
      %531 = vperm.xlu0 %530, %v385
      %v532 = vpop.permute.xlu0 %531
      %535 = vset.pattern.permute.xlu0 0
      %536 = vperm.xlu0 %535, %v386
      %v537 = vpop.permute.xlu0 %536
      %540 = vset.pattern.permute.xlu0 0
      %541 = vperm.xlu0 %540, %v387
      %v542 = vpop.permute.xlu0 %541
      %545 = vset.pattern.permute.xlu0 0
      %546 = vperm.xlu0 %545, %v388
      %v547 = vpop.permute.xlu0 %546
      %v549 = vmul.f32 %v392, %v262
      %v550 = vmul.f32 %v397, %v265
      %v551 = vmul.f32 %v402, %v268
      %v552 = vmul.f32 %v407, %v271
      %v553 = vmul.f32 %v412, %v274
      %v554 = vmul.f32 %v417, %v277
      %v555 = vmul.f32 %v422, %v280
      %v556 = vmul.f32 %v427, %v283
      %v557 = vmul.f32 %v432, %v286
      %v558 = vmul.f32 %v437, %v289
      %v559 = vmul.f32 %v442, %v292
      %v560 = vmul.f32 %v447, %v295
      %v561 = vmul.f32 %v452, %v298
      %v562 = vmul.f32 %v457, %v301
      %v563 = vmul.f32 %v462, %v304
      %v564 = vmul.f32 %v467, %v307
      %v565 = vmul.f32 %v472, %v310
      %v566 = vmul.f32 %v477, %v313
      %v567 = vmul.f32 %v482, %v316
      %v568 = vmul.f32 %v487, %v319
      %v569 = vmul.f32 %v492, %v322
      %v570 = vmul.f32 %v497, %v325
      %v571 = vmul.f32 %v502, %v328
      %v572 = vmul.f32 %v507, %v331
      %v573 = vmul.f32 %v512, %v334
      %v574 = vmul.f32 %v517, %v337
      %v575 = vmul.f32 %v522, %v340
      %v576 = vmul.f32 %v527, %v343
      %v577 = vmul.f32 %v532, %v346
      %v578 = vmul.f32 %v537, %v349
      %v579 = vmul.f32 %v542, %v352
      %v580 = vmul.f32 %v547, %v355
      %v581 = vpack.c.bf16 %v549, %v549
      %v582 = vpack.c.bf16 %v550, %v550
      %v583 = vpack.c.bf16 %v551, %v551
      %v584 = vpack.c.bf16 %v552, %v552
      %v585 = vpack.c.bf16 %v553, %v553
      %v586 = vpack.c.bf16 %v554, %v554
      %v587 = vpack.c.bf16 %v555, %v555
      %v588 = vpack.c.bf16 %v556, %v556
      %v589 = vpack.c.bf16 %v557, %v557
      %v590 = vpack.c.bf16 %v558, %v558
      %v591 = vpack.c.bf16 %v559, %v559
      %v592 = vpack.c.bf16 %v560, %v560
      %v593 = vpack.c.bf16 %v561, %v561
      %v594 = vpack.c.bf16 %v562, %v562
      %v595 = vpack.c.bf16 %v563, %v563
      %v596 = vpack.c.bf16 %v564, %v564
      %v597 = vpack.c.bf16 %v565, %v565
      %v598 = vpack.c.bf16 %v566, %v566
      %v599 = vpack.c.bf16 %v567, %v567
      %v600 = vpack.c.bf16 %v568, %v568
      %v601 = vpack.c.bf16 %v569, %v569
      %v602 = vpack.c.bf16 %v570, %v570
      %v603 = vpack.c.bf16 %v571, %v571
      %v604 = vpack.c.bf16 %v572, %v572
      %v605 = vpack.c.bf16 %v573, %v573
      %v606 = vpack.c.bf16 %v574, %v574
      %v607 = vpack.c.bf16 %v575, %v575
      %v608 = vpack.c.bf16 %v576, %v576
      %v609 = vpack.c.bf16 %v577, %v577
      %v610 = vpack.c.bf16 %v578, %v578
      %v611 = vpack.c.bf16 %v579, %v579
      %v612 = vpack.c.bf16 %v580, %v580
      %613 = vst [vmem:[%s194] sm:$0xf] %v581
      %614 = vst [vmem:[%s194 + $0x4] sm:$0xf] %v582
      %615 = vst [vmem:[%s194 + $0x8] sm:$0xf] %v583
      %616 = vst [vmem:[%s194 + $0xc] sm:$0xf] %v584
      %617 = vst [vmem:[%s194 + $0x10] sm:$0xf] %v585
      %618 = vst [vmem:[%s194 + $0x14] sm:$0xf] %v586
      %619 = vst [vmem:[%s194 + $0x18] sm:$0xf] %v587
      %620 = vst [vmem:[%s194 + $0x1c] sm:$0xf] %v588
      %621 = vst [vmem:[%s194 + $0x20] sm:$0xf] %v589
      %622 = vst [vmem:[%s194 + $0x24] sm:$0xf] %v590
      %623 = vst [vmem:[%s194 + $0x28] sm:$0xf] %v591
      %624 = vst [vmem:[%s194 + $0x2c] sm:$0xf] %v592
      %625 = vst [vmem:[%s194 + $0x30] sm:$0xf] %v593
      %626 = vst [vmem:[%s194 + $0x34] sm:$0xf] %v594
      %627 = vst [vmem:[%s194 + $0x38] sm:$0xf] %v595
      %628 = vst [vmem:[%s194 + $0x3c] sm:$0xf] %v596
      %629 = vst [vmem:[%s194 + $0x40] sm:$0xf] %v597
      %630 = vst [vmem:[%s194 + $0x44] sm:$0xf] %v598
      %631 = vst [vmem:[%s194 + $0x48] sm:$0xf] %v599
      %632 = vst [vmem:[%s194 + $0x4c] sm:$0xf] %v600
      %633 = vst [vmem:[%s194 + $0x50] sm:$0xf] %v601
      %634 = vst [vmem:[%s194 + $0x54] sm:$0xf] %v602
      %635 = vst [vmem:[%s194 + $0x58] sm:$0xf] %v603
      %636 = vst [vmem:[%s194 + $0x5c] sm:$0xf] %v604
      %637 = vst [vmem:[%s194 + $0x60] sm:$0xf] %v605
      %638 = vst [vmem:[%s194 + $0x64] sm:$0xf] %v606
      %639 = vst [vmem:[%s194 + $0x68] sm:$0xf] %v607
      %640 = vst [vmem:[%s194 + $0x6c] sm:$0xf] %v608
      %641 = vst [vmem:[%s194 + $0x70] sm:$0xf] %v609
      %642 = vst [vmem:[%s194 + $0x74] sm:$0xf] %v610
      %643 = vst [vmem:[%s194 + $0x78] sm:$0xf] %v611
      %644 = vst [vmem:[%s194 + $0x7c] sm:$0xf] %v612
      %s645 = smul.u32 32, %s14
      %p646 = scmp.lt.s32.totalorder %s645, 63
      %s647 = scalar_select %p646, %s645, 63
      %s648 = smul.addr %s647, 4
      %s649 = scalar_lea.vmem %s3, %s648
      // Predicated region
      $region33: #{protein_segmenter2_forward.10} parent=31 // pred_check
        %p650 = pneg %p105
      $region34: #{protein_segmenter2_forward.10} parent=31 // pred_check_branch
        %652 = sbr.rel (%p650) target = $region36
      $region35: #{protein_segmenter2_forward.10} parent=31 // pred_region
        %s653 = smul.u32 32, %s14
      $region36: #{protein_segmenter2_forward.10} parent=31 // pred_fallthru
        _
    $region32: #{protein_segmenter2_forward.10} parent=5 // pred_fallthru
      _
    %p654 = scmp.le.s32.totalorder 2, %s9
    // Predicated region
    $region37: #{protein_segmenter2_forward.10} parent=5 // pred_check
      %p655 = pneg %p654
    $region38: #{protein_segmenter2_forward.10} parent=5 // pred_check_branch
      %657 = sbr.rel (%p655) target = $region40
    $region39: #{protein_segmenter2_forward.10} parent=5 // pred_region
      %s658 = ssub.s32 %s9, 2
      // Predicated region
      $region41: #{protein_segmenter2_forward.10} parent=39 // pred_check
        %p659 = pneg %p111
      $region42: #{protein_segmenter2_forward.10} parent=39 // pred_check_branch
        %661 = sbr.rel (%p659) target = $region44
      $region43: #{protein_segmenter2_forward.10} parent=39 // pred_region
        %s662 = smul.u32 32, %s15
        %p663 = scmp.lt.s32.totalorder %s662, 63
        %s664 = scalar_select %p663, %s662, 63
        %s665 = smul.addr %s664, 4
        %s666 = scalar_lea.vmem %s3, %s665
      $region44: #{protein_segmenter2_forward.10} parent=39 // pred_fallthru
        _
    $region40: #{protein_segmenter2_forward.10} parent=5 // pred_fallthru
      _
  $region6: #{protein_segmenter2_forward.10} parent=0 // loop_footer
    %s13 = sadd.s32 1, %s9
  $region7: #{protein_segmenter2_forward.10} parent=0 // loop_footer_branch
    %8 = sbr.rel target = $region3
  $region8: #{protein_segmenter2_forward.10} parent=0 // loop_exit
    _

// kernel: protein_segmenter2_forward.9
$region0: #{protein_segmenter2_forward.9}
  #allocation0 [shape = 'u32[]', space=smem, size = 0x4, offset = 0x4, fixed_abs, tag = 'smem constant byte address 0x4 - core index']
  #allocation1 [shape = 'u32[72,128]{1,0:T(1,128)}', space=vmem, size = 0x9000, scoped, tag = 'internal scratch']
  #allocation2 [shape = 'f32[256,1]{1,0:T(8,128)}', space=vmem, size = 0x20000, scoped, tag = 'scratch operand']
  %s0 = inlined_call_operand.vmem [shape: bf16[512,512], index: 0, kind: input, shape index: {}]
  %s1 = inlined_call_operand.vmem [shape: f32[512,1], index: 1, kind: output, shape index: {}]
  %s2 = sld [smem:[#allocation0]]
  $region83: #{protein_segmenter2_forward.9} parent=0
    _
  %s4 = ssub.s32 1, %s2
  %s5 = scalar_select 0, %s4, %s2
  $region1: #{protein_segmenter2_forward.9} parent=0
    #allocation3 [shape = 'u8[262144]{0}', space=vmem, size = 0x40000, scoped, tag = 'input window, operand 0']
    loop: start=0, step=1, limit=6
    $region2: #{protein_segmenter2_forward.9} parent=1 // loop_pre_header
      _
    $region3: #{protein_segmenter2_forward.9} parent=1 // loop_header
      %s7 = sphi 0, %s11
      %p8 = scmp.ge.s32.totalorder %s7, 6
      %s14 = sphi 0, %s26
      %s15 = sphi 0, %s22
      %s16 = sphi 0, %s14
      %s17 = sphi 0, %s15
      %s18 = sphi 0, %s16
      %s19 = sphi 0, %s17
      %s31 = sphi 0, %s33
      %s34 = sphi 0, %s31
      %s35 = sphi 0, %s34
      %s51 = sphi 0, %s35
      %s57 = sphi 0, %s59
      %s60 = sphi 0, %s57
      %s61 = sphi 0, %s60
      %s77 = sphi 0, %s61
    $region4: #{protein_segmenter2_forward.9} parent=1 // loop_header_branch
      %10 = sbr.rel (%p8) target = $region8
    $region5: #{protein_segmenter2_forward.9} parent=1 // loop_body
      %s12 = ssub.s32 %s7, 1
      %s13 = ssub.s32 %s7, 2
      %s20 = sadd.s32 1, %s15
      %p21 = scmp.ge.s32.totalorder %s20, 2
      %s22 = scalar_select %p21, 0, %s20
      %s23 = sadd.s32 1, %s14
      %s24 = scalar_select %p21, %s23, %s14
      %p25 = scmp.ge.s32.totalorder %s24, 2
      %s26 = scalar_select %p25, 0, %s24
      %s27 = ssub.s32 %s14, %s26
      %s28 = ssub.s32 %s15, %s22
      %s29 = sor.u32 %s27, %s28
      %p30 = scmp.eq.s32.totalorder %s29, 0
      %s32 = sadd.s32 %s31, 1
      %s33 = scalar_select %p30, %s31, %s32
      %p36 = pneg %p30
      %p37 = scmp.eq.s32.totalorder %s7, 3
      %p38 = por %p36, %p37
      %p39 = scmp.ne.s32.totalorder %s31, %s34
      %p40 = scmp.eq.s32.totalorder %s7, 0
      %p41 = por %p39, %p40
      %p42 = scmp.ne.s32.totalorder %s31, %s34
      %p43 = scmp.eq.s32.totalorder %s12, 3
      %p44 = por %p42, %p43
      %p45 = scmp.ne.s32.totalorder %s34, %s35
      %p46 = scmp.eq.s32.totalorder %s12, 0
      %p47 = por %p45, %p46
      %p48 = scmp.ne.s32.totalorder %s34, %s35
      %p49 = scmp.eq.s32.totalorder %s13, 3
      %p50 = por %p48, %p49
      %p52 = scmp.ne.s32.totalorder %s35, %s51
      %p53 = scmp.eq.s32.totalorder %s13, 0
      %p54 = por %p52, %p53
      %s55 = ssub.s32 %s14, %s26
      %p56 = scmp.eq.s32.totalorder %s55, 0
      %s58 = sadd.s32 %s57, 1
      %s59 = scalar_select %p56, %s57, %s58
      %p62 = pneg %p56
      %p63 = scmp.eq.s32.totalorder %s7, 3
      %p64 = por %p62, %p63
      %p65 = scmp.ne.s32.totalorder %s57, %s60
      %p66 = scmp.eq.s32.totalorder %s7, 0
      %p67 = por %p65, %p66
      %p68 = scmp.ne.s32.totalorder %s57, %s60
      %p69 = scmp.eq.s32.totalorder %s12, 3
      %p70 = por %p68, %p69
      %p71 = scmp.ne.s32.totalorder %s60, %s61
      %p72 = scmp.eq.s32.totalorder %s12, 0
      %p73 = por %p71, %p72
      %p74 = scmp.ne.s32.totalorder %s60, %s61
      %p75 = scmp.eq.s32.totalorder %s13, 3
      %p76 = por %p74, %p75
      %p78 = scmp.ne.s32.totalorder %s61, %s77
      %p79 = scmp.eq.s32.totalorder %s13, 0
      %p80 = por %p78, %p79
      %p81 = scmp.le.s32.totalorder 1, %s7
      %p82 = scmp.lt.s32.totalorder %s7, 5
      %p83 = pnand %p81, %p82
      %p84 = pneg %p83
      // Predicated region
      $region9: #{protein_segmenter2_forward.9} parent=5 // pred_check
        _
      $region10: #{protein_segmenter2_forward.9} parent=5 // pred_check_branch
        %86 = sbr.rel (%p83) target = $region12
      $region11: #{protein_segmenter2_forward.9} parent=5 // pred_region
        %s87 = ssub.s32 %s7, 1
      $region12: #{protein_segmenter2_forward.9} parent=5 // pred_fallthru
        _
      %p88 = scmp.lt.s32.totalorder %s7, 4
      // Predicated region
      $region13: #{protein_segmenter2_forward.9} parent=5 // pred_check
        %p89 = pneg %p88
      $region14: #{protein_segmenter2_forward.9} parent=5 // pred_check_branch
        %91 = sbr.rel (%p89) target = $region16
      $region15: #{protein_segmenter2_forward.9} parent=5 // pred_region
        // Predicated region
        $region17: #{protein_segmenter2_forward.9} parent=15 // pred_check
          %p92 = pneg %p41
        $region18: #{protein_segmenter2_forward.9} parent=15 // pred_check_branch
          %94 = sbr.rel (%p92) target = $region20
        $region19: #{protein_segmenter2_forward.9} parent=15 // pred_region
          %s95 = sand.u32 %s31, 1
          %s96 = sand.u32 %s31, 1
          %s97 = smul.addr %s96, 256
          %s98 = scalar_lea.vmem [#allocation3], %s97
          %s99 = smul.u32 32, %s14
          %s100 = smul.u32 2, %s15
          %s101 = smul.addr %s99, 4
          %s102 = sadd.s32 %s100, %s101
          %s103 = smul.addr %s102, 4
          %s104 = scalar_lea.vmem %s0, %s103
          // Predicated region
          $region21: #{protein_segmenter2_forward.9} parent=19 // pred_check
            _
          $region22: #{protein_segmenter2_forward.9} parent=19 // pred_check_branch
            %106 = sbr.rel (0) target = $region24
          $region23: #{protein_segmenter2_forward.9} parent=19 // pred_region
            // Predicated region
            $region25: #{protein_segmenter2_forward.9} parent=23 // pred_check
              _
            $region26: #{protein_segmenter2_forward.9} parent=23 // pred_check_branch
              %108 = sbr.rel (0) target = $region28
            $region27: #{protein_segmenter2_forward.9} parent=23 // pred_region
              // Predicated region
              $region40: #{protein_segmenter2_forward.9} parent=27 // pred_check
                _
              $region41: #{protein_segmenter2_forward.9} parent=27 // pred_check_branch
                %186 = sbr.rel (0) target = $region43
              $region42: #{protein_segmenter2_forward.9} parent=27 // pred_region
                loop: start=0, step=1, limit=1
                $region44: #{protein_segmenter2_forward.9} parent=42 // loop_pre_header
                  _
                $region45: #{protein_segmenter2_forward.9} parent=42 // loop_header
                  %s188 = sphi 0, %s192
                  %p189 = scmp.ge.s32.totalorder %s188, 1
                  %s193 = sphi %s104, %s104
                  %s194 = sphi %s98, %s98
                $region46: #{protein_segmenter2_forward.9} parent=42 // loop_header_branch
                  %191 = sbr.rel (%p189) target = $region50
                $region47: #{protein_segmenter2_forward.9} parent=42 // loop_body
                  %v195 = vld [vmem:[%s193] sm:$0xff]
                  %196 = vst [vmem:[%s194] sm:$0xff] %v195
                  %v197 = vld [vmem:[%s193 + $0x10] sm:$0xff]
                  %198 = vst [vmem:[%s194 + $0x8] sm:$0xff] %v197
                  %v199 = vld [vmem:[%s193 + $0x20] sm:$0xff]
                  %200 = vst [vmem:[%s194 + $0x10] sm:$0xff] %v199
                  %v201 = vld [vmem:[%s193 + $0x30] sm:$0xff]
                  %202 = vst [vmem:[%s194 + $0x18] sm:$0xff] %v201
                  %v203 = vld [vmem:[%s193 + $0x40] sm:$0xff]
                  %204 = vst [vmem:[%s194 + $0x20] sm:$0xff] %v203
                  %v205 = vld [vmem:[%s193 + $0x50] sm:$0xff]
                  %206 = vst [vmem:[%s194 + $0x28] sm:$0xff] %v205
                  %v207 = vld [vmem:[%s193 + $0x60] sm:$0xff]
                  %208 = vst [vmem:[%s194 + $0x30] sm:$0xff] %v207
                  %v209 = vld [vmem:[%s193 + $0x70] sm:$0xff]
                  %210 = vst [vmem:[%s194 + $0x38] sm:$0xff] %v209
                  %v211 = vld [vmem:[%s193 + $0x80] sm:$0xff]
                  %212 = vst [vmem:[%s194 + $0x40] sm:$0xff] %v211
                  %v213 = vld [vmem:[%s193 + $0x90] sm:$0xff]
                  %214 = vst [vmem:[%s194 + $0x48] sm:$0xff] %v213
                  %v215 = vld [vmem:[%s193 + $0xa0] sm:$0xff]
                  %216 = vst [vmem:[%s194 + $0x50] sm:$0xff] %v215
                  %v217 = vld [vmem:[%s193 + $0xb0] sm:$0xff]
                  %218 = vst [vmem:[%s194 + $0x58] sm:$0xff] %v217
                  %v219 = vld [vmem:[%s193 + $0xc0] sm:$0xff]
                  %220 = vst [vmem:[%s194 + $0x60] sm:$0xff] %v219
                  %v221 = vld [vmem:[%s193 + $0xd0] sm:$0xff]
                  %222 = vst [vmem:[%s194 + $0x68] sm:$0xff] %v221
                  %v223 = vld [vmem:[%s193 + $0xe0] sm:$0xff]
                  %224 = vst [vmem:[%s194 + $0x70] sm:$0xff] %v223
                  %v225 = vld [vmem:[%s193 + $0xf0] sm:$0xff]
                  %226 = vst [vmem:[%s194 + $0x78] sm:$0xff] %v225
                  %v227 = vld [vmem:[%s193 + $0x100] sm:$0xff]
                  %228 = vst [vmem:[%s194 + $0x80] sm:$0xff] %v227
                  %v229 = vld [vmem:[%s193 + $0x110] sm:$0xff]
                  %230 = vst [vmem:[%s194 + $0x88] sm:$0xff] %v229
                  %v231 = vld [vmem:[%s193 + $0x120] sm:$0xff]
                  %232 = vst [vmem:[%s194 + $0x90] sm:$0xff] %v231
                  %v233 = vld [vmem:[%s193 + $0x130] sm:$0xff]
                  %234 = vst [vmem:[%s194 + $0x98] sm:$0xff] %v233
                  %v235 = vld [vmem:[%s193 + $0x140] sm:$0xff]
                  %236 = vst [vmem:[%s194 + $0xa0] sm:$0xff] %v235
                  %v237 = vld [vmem:[%s193 + $0x150] sm:$0xff]
                  %238 = vst [vmem:[%s194 + $0xa8] sm:$0xff] %v237
                  %v239 = vld [vmem:[%s193 + $0x160] sm:$0xff]
                  %240 = vst [vmem:[%s194 + $0xb0] sm:$0xff] %v239
                  %v241 = vld [vmem:[%s193 + $0x170] sm:$0xff]
                  %242 = vst [vmem:[%s194 + $0xb8] sm:$0xff] %v241
                  %v243 = vld [vmem:[%s193 + $0x180] sm:$0xff]
                  %244 = vst [vmem:[%s194 + $0xc0] sm:$0xff] %v243
                  %v245 = vld [vmem:[%s193 + $0x190] sm:$0xff]
                  %246 = vst [vmem:[%s194 + $0xc8] sm:$0xff] %v245
                  %v247 = vld [vmem:[%s193 + $0x1a0] sm:$0xff]
                  %248 = vst [vmem:[%s194 + $0xd0] sm:$0xff] %v247
                  %v249 = vld [vmem:[%s193 + $0x1b0] sm:$0xff]
                  %250 = vst [vmem:[%s194 + $0xd8] sm:$0xff] %v249
                  %v251 = vld [vmem:[%s193 + $0x1c0] sm:$0xff]
                  %252 = vst [vmem:[%s194 + $0xe0] sm:$0xff] %v251
                  %v253 = vld [vmem:[%s193 + $0x1d0] sm:$0xff]
                  %254 = vst [vmem:[%s194 + $0xe8] sm:$0xff] %v253
                  %v255 = vld [vmem:[%s193 + $0x1e0] sm:$0xff]
                  %256 = vst [vmem:[%s194 + $0xf0] sm:$0xff] %v255
                  %v257 = vld [vmem:[%s193 + $0x1f0] sm:$0xff]
                  %258 = vst [vmem:[%s194 + $0xf8] sm:$0xff] %v257
                $region48: #{protein_segmenter2_forward.9} parent=42 // loop_footer
                  %s192 = sadd.s32 1, %s188
                $region49: #{protein_segmenter2_forward.9} parent=42 // loop_footer_branch
                  %187 = sbr.rel target = $region45
                $region50: #{protein_segmenter2_forward.9} parent=42 // loop_exit
                  _
              $region43: #{protein_segmenter2_forward.9} parent=27 // pred_fallthru
                _
              // Predicated region
              $region51: #{protein_segmenter2_forward.9} parent=27 // pred_check
                _
              $region52: #{protein_segmenter2_forward.9} parent=27 // pred_check_branch
                %260 = sbr.rel target = $region54
              $region53: #{protein_segmenter2_forward.9} parent=27 // pred_region
                _
              $region54: #{protein_segmenter2_forward.9} parent=27 // pred_fallthru
                _
            $region28: #{protein_segmenter2_forward.9} parent=23 // pred_fallthru
              _
            // Predicated region
            $region29: #{protein_segmenter2_forward.9} parent=23 // pred_check
              _
            $region30: #{protein_segmenter2_forward.9} parent=23 // pred_check_branch
              %110 = sbr.rel target = $region32
            $region31: #{protein_segmenter2_forward.9} parent=23 // pred_region
              %s112 = ssub.s32 256, 1
              loop: start=0, step=1, limit=1
              $region33: #{protein_segmenter2_forward.9} parent=31 // loop_pre_header
                _
              $region34: #{protein_segmenter2_forward.9} parent=31 // loop_header
                %s114 = sphi 0, %s118
                %p115 = scmp.ge.s32.totalorder %s114, 1
                %s119 = sphi %s104, %s104
                %s120 = sphi %s98, %s98
              $region35: #{protein_segmenter2_forward.9} parent=31 // loop_header_branch
                %117 = sbr.rel (%p115) target = $region39
              $region36: #{protein_segmenter2_forward.9} parent=31 // loop_body
                %v121 = vld [vmem:[%s119] sm:%s112]
                %122 = vst [vmem:[%s120] sm:%s112] %v121
                %v123 = vld [vmem:[%s119 + $0x10] sm:%s112]
                %124 = vst [vmem:[%s120 + $0x8] sm:%s112] %v123
                %v125 = vld [vmem:[%s119 + $0x20] sm:%s112]
                %126 = vst [vmem:[%s120 + $0x10] sm:%s112] %v125
                %v127 = vld [vmem:[%s119 + $0x30] sm:%s112]
                %128 = vst [vmem:[%s120 + $0x18] sm:%s112] %v127
                %v129 = vld [vmem:[%s119 + $0x40] sm:%s112]
                %130 = vst [vmem:[%s120 + $0x20] sm:%s112] %v129
                %v131 = vld [vmem:[%s119 + $0x50] sm:%s112]
                %132 = vst [vmem:[%s120 + $0x28] sm:%s112] %v131
                %v133 = vld [vmem:[%s119 + $0x60] sm:%s112]
                %134 = vst [vmem:[%s120 + $0x30] sm:%s112] %v133
                %v135 = vld [vmem:[%s119 + $0x70] sm:%s112]
                %136 = vst [vmem:[%s120 + $0x38] sm:%s112] %v135
                %v137 = vld [vmem:[%s119 + $0x80] sm:%s112]
                %138 = vst [vmem:[%s120 + $0x40] sm:%s112] %v137
                %v139 = vld [vmem:[%s119 + $0x90] sm:%s112]
                %140 = vst [vmem:[%s120 + $0x48] sm:%s112] %v139
                %v141 = vld [vmem:[%s119 + $0xa0] sm:%s112]
                %142 = vst [vmem:[%s120 + $0x50] sm:%s112] %v141
                %v143 = vld [vmem:[%s119 + $0xb0] sm:%s112]
                %144 = vst [vmem:[%s120 + $0x58] sm:%s112] %v143
                %v145 = vld [vmem:[%s119 + $0xc0] sm:%s112]
                %146 = vst [vmem:[%s120 + $0x60] sm:%s112] %v145
                %v147 = vld [vmem:[%s119 + $0xd0] sm:%s112]
                %148 = vst [vmem:[%s120 + $0x68] sm:%s112] %v147
                %v149 = vld [vmem:[%s119 + $0xe0] sm:%s112]
                %150 = vst [vmem:[%s120 + $0x70] sm:%s112] %v149
                %v151 = vld [vmem:[%s119 + $0xf0] sm:%s112]
                %152 = vst [vmem:[%s120 + $0x78] sm:%s112] %v151
                %v153 = vld [vmem:[%s119 + $0x100] sm:%s112]
                %154 = vst [vmem:[%s120 + $0x80] sm:%s112] %v153
                %v155 = vld [vmem:[%s119 + $0x110] sm:%s112]
                %156 = vst [vmem:[%s120 + $0x88] sm:%s112] %v155
                %v157 = vld [vmem:[%s119 + $0x120] sm:%s112]
                %158 = vst [vmem:[%s120 + $0x90] sm:%s112] %v157
                %v159 = vld [vmem:[%s119 + $0x130] sm:%s112]
                %160 = vst [vmem:[%s120 + $0x98] sm:%s112] %v159
                %v161 = vld [vmem:[%s119 + $0x140] sm:%s112]
                %162 = vst [vmem:[%s120 + $0xa0] sm:%s112] %v161
                %v163 = vld [vmem:[%s119 + $0x150] sm:%s112]
                %164 = vst [vmem:[%s120 + $0xa8] sm:%s112] %v163
                %v165 = vld [vmem:[%s119 + $0x160] sm:%s112]
                %166 = vst [vmem:[%s120 + $0xb0] sm:%s112] %v165
                %v167 = vld [vmem:[%s119 + $0x170] sm:%s112]
                %168 = vst [vmem:[%s120 + $0xb8] sm:%s112] %v167
                %v169 = vld [vmem:[%s119 + $0x180] sm:%s112]
                %170 = vst [vmem:[%s120 + $0xc0] sm:%s112] %v169
                %v171 = vld [vmem:[%s119 + $0x190] sm:%s112]
                %172 = vst [vmem:[%s120 + $0xc8] sm:%s112] %v171
                %v173 = vld [vmem:[%s119 + $0x1a0] sm:%s112]
                %174 = vst [vmem:[%s120 + $0xd0] sm:%s112] %v173
                %v175 = vld [vmem:[%s119 + $0x1b0] sm:%s112]
                %176 = vst [vmem:[%s120 + $0xd8] sm:%s112] %v175
                %v177 = vld [vmem:[%s119 + $0x1c0] sm:%s112]
                %178 = vst [vmem:[%s120 + $0xe0] sm:%s112] %v177
                %v179 = vld [vmem:[%s119 + $0x1d0] sm:%s112]
                %180 = vst [vmem:[%s120 + $0xe8] sm:%s112] %v179
                %v181 = vld [vmem:[%s119 + $0x1e0] sm:%s112]
                %182 = vst [vmem:[%s120 + $0xf0] sm:%s112] %v181
                %v183 = vld [vmem:[%s119 + $0x1f0] sm:%s112]
                %184 = vst [vmem:[%s120 + $0xf8] sm:%s112] %v183
              $region37: #{protein_segmenter2_forward.9} parent=31 // loop_footer
                %s118 = sadd.s32 1, %s114
              $region38: #{protein_segmenter2_forward.9} parent=31 // loop_footer_branch
                %113 = sbr.rel target = $region34
              $region39: #{protein_segmenter2_forward.9} parent=31 // loop_exit
                _
            $region32: #{protein_segmenter2_forward.9} parent=23 // pred_fallthru
              _
          $region24: #{protein_segmenter2_forward.9} parent=19 // pred_fallthru
            _
          %261 = vnop
        $region20: #{protein_segmenter2_forward.9} parent=15 // pred_fallthru
          _
      $region16: #{protein_segmenter2_forward.9} parent=5 // pred_fallthru
        _
      %p262 = scmp.le.s32.totalorder 1, %s7
      %p263 = scmp.lt.s32.totalorder %s7, 5
      %p264 = pnand %p262, %p263
      %p265 = pneg %p264
      // Predicated region
      $region55: #{protein_segmenter2_forward.9} parent=5 // pred_check
        _
      $region56: #{protein_segmenter2_forward.9} parent=5 // pred_check_branch
        %267 = sbr.rel (%p264) target = $region58
      $region57: #{protein_segmenter2_forward.9} parent=5 // pred_region
        %s268 = ssub.s32 %s7, 1
        %s269 = sand.u32 %s34, 1
        %s270 = sand.u32 %s34, 1
        %s271 = smul.addr %s270, 256
        %s272 = scalar_lea.vmem [#allocation3], %s271
        // Predicated region
        $region59: #{protein_segmenter2_forward.9} parent=57 // pred_check
          %p273 = pneg %p47
        $region60: #{protein_segmenter2_forward.9} parent=57 // pred_check_branch
          %275 = sbr.rel (%p273) target = $region62
        $region61: #{protein_segmenter2_forward.9} parent=57 // pred_region
          _
        $region62: #{protein_segmenter2_forward.9} parent=57 // pred_fallthru
          _
        %s276 = sand.u32 %s34, 1
        %s277 = sand.u32 %s34, 1
        %s278 = smul.addr %s277, 256
        %s279 = scalar_lea.vmem [#allocation3], %s278
        %p280 = pneg %p47
        %p281 = pneg %p44
        %p282 = pneg %p73
        %p283 = pneg %p70
        %s284 = smul.u32 32, %s16
        %p285 = scmp.lt.s32.totalorder %s284, 63
        %s286 = scalar_select %p285, %s284, 63
        %s287 = smul.addr %s286, 8
        %s288 = scalar_lea.vmem %s1, %s287
        %s289 = smul.u32 32, %s16
        %s290 = smul.u32 2, %s17
        %s291 = smul.u32 32, %s16
        %p292 = scmp.lt.s32.totalorder %s291, 63
        %s293 = scalar_select %p292, %s291, 63
        %s294 = smul.addr %s293, 8
        %s295 = scalar_lea.vmem %s1, %s294
        %s296 = smul.u32 32, %s16
        %p297 = scmp.eq.s32.totalorder %s17, 0
        // Predicated region
        $region63: #{protein_segmenter2_forward.9} parent=57 // pred_check
          %p298 = pneg %p297
        $region64: #{protein_segmenter2_forward.9} parent=57 // pred_check_branch
          %300 = sbr.rel (%p298) target = $region66
        $region65: #{protein_segmenter2_forward.9} parent=57 // pred_region
          %vm301 = vcmask 7168
          %302 = vst.msk [vmem:[#allocation2] sm:$0xff] %vm301, 0.0
          %303 = vst.msk [vmem:[#allocation2 + $0x8] sm:$0xff] %vm301, 0.0
          %304 = vst.msk [vmem:[#allocation2 + $0x10] sm:$0xff] %vm301, 0.0
          %305 = vst.msk [vmem:[#allocation2 + $0x18] sm:$0xff] %vm301, 0.0
          %306 = vst.msk [vmem:[#allocation2 + $0x20] sm:$0xff] %vm301, 0.0
          %307 = vst.msk [vmem:[#allocation2 + $0x28] sm:$0xff] %vm301, 0.0
          %308 = vst.msk [vmem:[#allocation2 + $0x30] sm:$0xff] %vm301, 0.0
          %309 = vst.msk [vmem:[#allocation2 + $0x38] sm:$0xff] %vm301, 0.0
          %310 = vst.msk [vmem:[#allocation2 + $0x40] sm:$0xff] %vm301, 0.0
          %311 = vst.msk [vmem:[#allocation2 + $0x48] sm:$0xff] %vm301, 0.0
          %312 = vst.msk [vmem:[#allocation2 + $0x50] sm:$0xff] %vm301, 0.0
          %313 = vst.msk [vmem:[#allocation2 + $0x58] sm:$0xff] %vm301, 0.0
          %314 = vst.msk [vmem:[#allocation2 + $0x60] sm:$0xff] %vm301, 0.0
          %315 = vst.msk [vmem:[#allocation2 + $0x68] sm:$0xff] %vm301, 0.0
          %316 = vst.msk [vmem:[#allocation2 + $0x70] sm:$0xff] %vm301, 0.0
          %317 = vst.msk [vmem:[#allocation2 + $0x78] sm:$0xff] %vm301, 0.0
          %318 = vst.msk [vmem:[#allocation2 + $0x80] sm:$0xff] %vm301, 0.0
          %319 = vst.msk [vmem:[#allocation2 + $0x88] sm:$0xff] %vm301, 0.0
          %320 = vst.msk [vmem:[#allocation2 + $0x90] sm:$0xff] %vm301, 0.0
          %321 = vst.msk [vmem:[#allocation2 + $0x98] sm:$0xff] %vm301, 0.0
          %322 = vst.msk [vmem:[#allocation2 + $0xa0] sm:$0xff] %vm301, 0.0
          %323 = vst.msk [vmem:[#allocation2 + $0xa8] sm:$0xff] %vm301, 0.0
          %324 = vst.msk [vmem:[#allocation2 + $0xb0] sm:$0xff] %vm301, 0.0
          %325 = vst.msk [vmem:[#allocation2 + $0xb8] sm:$0xff] %vm301, 0.0
          %326 = vst.msk [vmem:[#allocation2 + $0xc0] sm:$0xff] %vm301, 0.0
          %327 = vst.msk [vmem:[#allocation2 + $0xc8] sm:$0xff] %vm301, 0.0
          %328 = vst.msk [vmem:[#allocation2 + $0xd0] sm:$0xff] %vm301, 0.0
          %329 = vst.msk [vmem:[#allocation2 + $0xd8] sm:$0xff] %vm301, 0.0
          %330 = vst.msk [vmem:[#allocation2 + $0xe0] sm:$0xff] %vm301, 0.0
          %331 = vst.msk [vmem:[#allocation2 + $0xe8] sm:$0xff] %vm301, 0.0
          %332 = vst.msk [vmem:[#allocation2 + $0xf0] sm:$0xff] %vm301, 0.0
          %333 = vst.msk [vmem:[#allocation2 + $0xf8] sm:$0xff] %vm301, 0.0
        $region66: #{protein_segmenter2_forward.9} parent=57 // pred_fallthru
          _
        %v334 = vld [vmem:[#allocation2] sm:$0xff]
        %v335 = vld [vmem:[#allocation2 + $0x8] sm:$0xff]
        %v336 = vld [vmem:[#allocation2 + $0x10] sm:$0xff]
        %v337 = vld [vmem:[#allocation2 + $0x18] sm:$0xff]
        %v338 = vld [vmem:[#allocation2 + $0x20] sm:$0xff]
        %v339 = vld [vmem:[#allocation2 + $0x28] sm:$0xff]
        %v340 = vld [vmem:[#allocation2 + $0x30] sm:$0xff]
        %v341 = vld [vmem:[#allocation2 + $0x38] sm:$0xff]
        %v342 = vld [vmem:[#allocation2 + $0x40] sm:$0xff]
        %v343 = vld [vmem:[#allocation2 + $0x48] sm:$0xff]
        %v344 = vld [vmem:[#allocation2 + $0x50] sm:$0xff]
        %v345 = vld [vmem:[#allocation2 + $0x58] sm:$0xff]
        %v346 = vld [vmem:[#allocation2 + $0x60] sm:$0xff]
        %v347 = vld [vmem:[#allocation2 + $0x68] sm:$0xff]
        %v348 = vld [vmem:[#allocation2 + $0x70] sm:$0xff]
        %v349 = vld [vmem:[#allocation2 + $0x78] sm:$0xff]
        %v350 = vld [vmem:[#allocation2 + $0x80] sm:$0xff]
        %v351 = vld [vmem:[#allocation2 + $0x88] sm:$0xff]
        %v352 = vld [vmem:[#allocation2 + $0x90] sm:$0xff]
        %v353 = vld [vmem:[#allocation2 + $0x98] sm:$0xff]
        %v354 = vld [vmem:[#allocation2 + $0xa0] sm:$0xff]
        %v355 = vld [vmem:[#allocation2 + $0xa8] sm:$0xff]
        %v356 = vld [vmem:[#allocation2 + $0xb0] sm:$0xff]
        %v357 = vld [vmem:[#allocation2 + $0xb8] sm:$0xff]
        %v358 = vld [vmem:[#allocation2 + $0xc0] sm:$0xff]
        %v359 = vld [vmem:[#allocation2 + $0xc8] sm:$0xff]
        %v360 = vld [vmem:[#allocation2 + $0xd0] sm:$0xff]
        %v361 = vld [vmem:[#allocation2 + $0xd8] sm:$0xff]
        %v362 = vld [vmem:[#allocation2 + $0xe0] sm:$0xff]
        %v363 = vld [vmem:[#allocation2 + $0xe8] sm:$0xff]
        %v364 = vld [vmem:[#allocation2 + $0xf0] sm:$0xff]
        %v365 = vld [vmem:[#allocation2 + $0xf8] sm:$0xff]
        %v366 = vld [vmem:[%s272] sm:$0xff]
        %v367 = vld [vmem:[%s272 + $0x8] sm:$0xff]
        %v368 = vld [vmem:[%s272 + $0x10] sm:$0xff]
        %v369 = vld [vmem:[%s272 + $0x18] sm:$0xff]
        %v370 = vld [vmem:[%s272 + $0x20] sm:$0xff]
        %v371 = vld [vmem:[%s272 + $0x28] sm:$0xff]
        %v372 = vld [vmem:[%s272 + $0x30] sm:$0xff]
        %v373 = vld [vmem:[%s272 + $0x38] sm:$0xff]
        %v374 = vld [vmem:[%s272 + $0x40] sm:$0xff]
        %v375 = vld [vmem:[%s272 + $0x48] sm:$0xff]
        %v376 = vld [vmem:[%s272 + $0x50] sm:$0xff]
        %v377 = vld [vmem:[%s272 + $0x58] sm:$0xff]
        %v378 = vld [vmem:[%s272 + $0x60] sm:$0xff]
        %v379 = vld [vmem:[%s272 + $0x68] sm:$0xff]
        %v380 = vld [vmem:[%s272 + $0x70] sm:$0xff]
        %v381 = vld [vmem:[%s272 + $0x78] sm:$0xff]
        %v382 = vld [vmem:[%s272 + $0x80] sm:$0xff]
        %v383 = vld [vmem:[%s272 + $0x88] sm:$0xff]
        %v384 = vld [vmem:[%s272 + $0x90] sm:$0xff]
        %v385 = vld [vmem:[%s272 + $0x98] sm:$0xff]
        %v386 = vld [vmem:[%s272 + $0xa0] sm:$0xff]
        %v387 = vld [vmem:[%s272 + $0xa8] sm:$0xff]
        %v388 = vld [vmem:[%s272 + $0xb0] sm:$0xff]
        %v389 = vld [vmem:[%s272 + $0xb8] sm:$0xff]
        %v390 = vld [vmem:[%s272 + $0xc0] sm:$0xff]
        %v391 = vld [vmem:[%s272 + $0xc8] sm:$0xff]
        %v392 = vld [vmem:[%s272 + $0xd0] sm:$0xff]
        %v393 = vld [vmem:[%s272 + $0xd8] sm:$0xff]
        %v394 = vld [vmem:[%s272 + $0xe0] sm:$0xff]
        %v395 = vld [vmem:[%s272 + $0xe8] sm:$0xff]
        %v396 = vld [vmem:[%s272 + $0xf0] sm:$0xff]
        %v397 = vld [vmem:[%s272 + $0xf8] sm:$0xff]
        %v398 = vunpack.c.l.bf16 %v366
        %v399 = vunpack.c.h.bf16 %v366
        %v400 = vunpack.c.l.bf16 %v367
        %v401 = vunpack.c.h.bf16 %v367
        %v402 = vunpack.c.l.bf16 %v368
        %v403 = vunpack.c.h.bf16 %v368
        %v404 = vunpack.c.l.bf16 %v369
        %v405 = vunpack.c.h.bf16 %v369
        %v406 = vunpack.c.l.bf16 %v370
        %v407 = vunpack.c.h.bf16 %v370
        %v408 = vunpack.c.l.bf16 %v371
        %v409 = vunpack.c.h.bf16 %v371
        %v410 = vunpack.c.l.bf16 %v372
        %v411 = vunpack.c.h.bf16 %v372
        %v412 = vunpack.c.l.bf16 %v373
        %v413 = vunpack.c.h.bf16 %v373
        %v414 = vunpack.c.l.bf16 %v374
        %v415 = vunpack.c.h.bf16 %v374
        %v416 = vunpack.c.l.bf16 %v375
        %v417 = vunpack.c.h.bf16 %v375
        %v418 = vunpack.c.l.bf16 %v376
        %v419 = vunpack.c.h.bf16 %v376
        %v420 = vunpack.c.l.bf16 %v377
        %v421 = vunpack.c.h.bf16 %v377
        %v422 = vunpack.c.l.bf16 %v378
        %v423 = vunpack.c.h.bf16 %v378
        %v424 = vunpack.c.l.bf16 %v379
        %v425 = vunpack.c.h.bf16 %v379
        %v426 = vunpack.c.l.bf16 %v380
        %v427 = vunpack.c.h.bf16 %v380
        %v428 = vunpack.c.l.bf16 %v381
        %v429 = vunpack.c.h.bf16 %v381
        %v430 = vunpack.c.l.bf16 %v382
        %v431 = vunpack.c.h.bf16 %v382
        %v432 = vunpack.c.l.bf16 %v383
        %v433 = vunpack.c.h.bf16 %v383
        %v434 = vunpack.c.l.bf16 %v384
        %v435 = vunpack.c.h.bf16 %v384
        %v436 = vunpack.c.l.bf16 %v385
        %v437 = vunpack.c.h.bf16 %v385
        %v438 = vunpack.c.l.bf16 %v386
        %v439 = vunpack.c.h.bf16 %v386
        %v440 = vunpack.c.l.bf16 %v387
        %v441 = vunpack.c.h.bf16 %v387
        %v442 = vunpack.c.l.bf16 %v388
        %v443 = vunpack.c.h.bf16 %v388
        %v444 = vunpack.c.l.bf16 %v389
        %v445 = vunpack.c.h.bf16 %v389
        %v446 = vunpack.c.l.bf16 %v390
        %v447 = vunpack.c.h.bf16 %v390
        %v448 = vunpack.c.l.bf16 %v391
        %v449 = vunpack.c.h.bf16 %v391
        %v450 = vunpack.c.l.bf16 %v392
        %v451 = vunpack.c.h.bf16 %v392
        %v452 = vunpack.c.l.bf16 %v393
        %v453 = vunpack.c.h.bf16 %v393
        %v454 = vunpack.c.l.bf16 %v394
        %v455 = vunpack.c.h.bf16 %v394
        %v456 = vunpack.c.l.bf16 %v395
        %v457 = vunpack.c.h.bf16 %v395
        %v458 = vunpack.c.l.bf16 %v396
        %v459 = vunpack.c.h.bf16 %v396
        %v460 = vunpack.c.l.bf16 %v397
        %v461 = vunpack.c.h.bf16 %v397
        %vm462 = vcmp.gt.f32.partialorder %v398, 0.0
        %vm463 = vcmp.gt.f32.partialorder %v399, 0.0
        %vm464 = vcmp.gt.f32.partialorder %v400, 0.0
        %vm465 = vcmp.gt.f32.partialorder %v401, 0.0
        %vm466 = vcmp.gt.f32.partialorder %v402, 0.0
        %vm467 = vcmp.gt.f32.partialorder %v403, 0.0
        %vm468 = vcmp.gt.f32.partialorder %v404, 0.0
        %vm469 = vcmp.gt.f32.partialorder %v405, 0.0
        %vm470 = vcmp.gt.f32.partialorder %v406, 0.0
        %vm471 = vcmp.gt.f32.partialorder %v407, 0.0
        %vm472 = vcmp.gt.f32.partialorder %v408, 0.0
        %vm473 = vcmp.gt.f32.partialorder %v409, 0.0
        %vm474 = vcmp.gt.f32.partialorder %v410, 0.0
        %vm475 = vcmp.gt.f32.partialorder %v411, 0.0
        %vm476 = vcmp.gt.f32.partialorder %v412, 0.0
        %vm477 = vcmp.gt.f32.partialorder %v413, 0.0
        %vm478 = vcmp.gt.f32.partialorder %v414, 0.0
        %vm479 = vcmp.gt.f32.partialorder %v415, 0.0
        %vm480 = vcmp.gt.f32.partialorder %v416, 0.0
        %vm481 = vcmp.gt.f32.partialorder %v417, 0.0
        %vm482 = vcmp.gt.f32.partialorder %v418, 0.0
        %vm483 = vcmp.gt.f32.partialorder %v419, 0.0
        %vm484 = vcmp.gt.f32.partialorder %v420, 0.0
        %vm485 = vcmp.gt.f32.partialorder %v421, 0.0
        %vm486 = vcmp.gt.f32.partialorder %v422, 0.0
        %vm487 = vcmp.gt.f32.partialorder %v423, 0.0
        %vm488 = vcmp.gt.f32.partialorder %v424, 0.0
        %vm489 = vcmp.gt.f32.partialorder %v425, 0.0
        %vm490 = vcmp.gt.f32.partialorder %v426, 0.0
        %vm491 = vcmp.gt.f32.partialorder %v427, 0.0
        %vm492 = vcmp.gt.f32.partialorder %v428, 0.0
        %vm493 = vcmp.gt.f32.partialorder %v429, 0.0
        %vm494 = vcmp.gt.f32.partialorder %v430, 0.0
        %vm495 = vcmp.gt.f32.partialorder %v431, 0.0
        %vm496 = vcmp.gt.f32.partialorder %v432, 0.0
        %vm497 = vcmp.gt.f32.partialorder %v433, 0.0
        %vm498 = vcmp.gt.f32.partialorder %v434, 0.0
        %vm499 = vcmp.gt.f32.partialorder %v435, 0.0
        %vm500 = vcmp.gt.f32.partialorder %v436, 0.0
        %vm501 = vcmp.gt.f32.partialorder %v437, 0.0
        %vm502 = vcmp.gt.f32.partialorder %v438, 0.0
        %vm503 = vcmp.gt.f32.partialorder %v439, 0.0
        %vm504 = vcmp.gt.f32.partialorder %v440, 0.0
        %vm505 = vcmp.gt.f32.partialorder %v441, 0.0
        %vm506 = vcmp.gt.f32.partialorder %v442, 0.0
        %vm507 = vcmp.gt.f32.partialorder %v443, 0.0
        %vm508 = vcmp.gt.f32.partialorder %v444, 0.0
        %vm509 = vcmp.gt.f32.partialorder %v445, 0.0
        %vm510 = vcmp.gt.f32.partialorder %v446, 0.0
        %vm511 = vcmp.gt.f32.partialorder %v447, 0.0
        %vm512 = vcmp.gt.f32.partialorder %v448, 0.0
        %vm513 = vcmp.gt.f32.partialorder %v449, 0.0
        %vm514 = vcmp.gt.f32.partialorder %v450, 0.0
        %vm515 = vcmp.gt.f32.partialorder %v451, 0.0
        %vm516 = vcmp.gt.f32.partialorder %v452, 0.0
        %vm517 = vcmp.gt.f32.partialorder %v453, 0.0
        %vm518 = vcmp.gt.f32.partialorder %v454, 0.0
        %vm519 = vcmp.gt.f32.partialorder %v455, 0.0
        %vm520 = vcmp.gt.f32.partialorder %v456, 0.0
        %vm521 = vcmp.gt.f32.partialorder %v457, 0.0
        %vm522 = vcmp.gt.f32.partialorder %v458, 0.0
        %vm523 = vcmp.gt.f32.partialorder %v459, 0.0
        %vm524 = vcmp.gt.f32.partialorder %v460, 0.0
        %vm525 = vcmp.gt.f32.partialorder %v461, 0.0
        %v526 = vsel %vm462, 1, 0
        %v527 = vsel %vm463, 1, 0
        %v528 = vsel %vm464, 1, 0
        %v529 = vsel %vm465, 1, 0
        %v530 = vsel %vm466, 1, 0
        %v531 = vsel %vm467, 1, 0
        %v532 = vsel %vm468, 1, 0
        %v533 = vsel %vm469, 1, 0
        %v534 = vsel %vm470, 1, 0
        %v535 = vsel %vm471, 1, 0
        %v536 = vsel %vm472, 1, 0
        %v537 = vsel %vm473, 1, 0
        %v538 = vsel %vm474, 1, 0
        %v539 = vsel %vm475, 1, 0
        %v540 = vsel %vm476, 1, 0
        %v541 = vsel %vm477, 1, 0
        %v542 = vsel %vm478, 1, 0
        %v543 = vsel %vm479, 1, 0
        %v544 = vsel %vm480, 1, 0
        %v545 = vsel %vm481, 1, 0
        %v546 = vsel %vm482, 1, 0
        %v547 = vsel %vm483, 1, 0
        %v548 = vsel %vm484, 1, 0
        %v549 = vsel %vm485, 1, 0
        %v550 = vsel %vm486, 1, 0
        %v551 = vsel %vm487, 1, 0
        %v552 = vsel %vm488, 1, 0
        %v553 = vsel %vm489, 1, 0
        %v554 = vsel %vm490, 1, 0
        %v555 = vsel %vm491, 1, 0
        %v556 = vsel %vm492, 1, 0
        %v557 = vsel %vm493, 1, 0
        %v558 = vsel %vm494, 1, 0
        %v559 = vsel %vm495, 1, 0
        %v560 = vsel %vm496, 1, 0
        %v561 = vsel %vm497, 1, 0
        %v562 = vsel %vm498, 1, 0
        %v563 = vsel %vm499, 1, 0
        %v564 = vsel %vm500, 1, 0
        %v565 = vsel %vm501, 1, 0
        %v566 = vsel %vm502, 1, 0
        %v567 = vsel %vm503, 1, 0
        %v568 = vsel %vm504, 1, 0
        %v569 = vsel %vm505, 1, 0
        %v570 = vsel %vm506, 1, 0
        %v571 = vsel %vm507, 1, 0
        %v572 = vsel %vm508, 1, 0
        %v573 = vsel %vm509, 1, 0
        %v574 = vsel %vm510, 1, 0
        %v575 = vsel %vm511, 1, 0
        %v576 = vsel %vm512, 1, 0
        %v577 = vsel %vm513, 1, 0
        %v578 = vsel %vm514, 1, 0
        %v579 = vsel %vm515, 1, 0
        %v580 = vsel %vm516, 1, 0
        %v581 = vsel %vm517, 1, 0
        %v582 = vsel %vm518, 1, 0
        %v583 = vsel %vm519, 1, 0
        %v584 = vsel %vm520, 1, 0
        %v585 = vsel %vm521, 1, 0
        %v586 = vsel %vm522, 1, 0
        %v587 = vsel %vm523, 1, 0
        %v588 = vsel %vm524, 1, 0
        %v589 = vsel %vm525, 1, 0
        %v590 = vcvt.s32.f32 %v526
        %v591 = vcvt.s32.f32 %v527
        %v592 = vcvt.s32.f32 %v528
        %v593 = vcvt.s32.f32 %v529
        %v594 = vcvt.s32.f32 %v530
        %v595 = vcvt.s32.f32 %v531
        %v596 = vcvt.s32.f32 %v532
        %v597 = vcvt.s32.f32 %v533
        %v598 = vcvt.s32.f32 %v534
        %v599 = vcvt.s32.f32 %v535
        %v600 = vcvt.s32.f32 %v536
        %v601 = vcvt.s32.f32 %v537
        %v602 = vcvt.s32.f32 %v538
        %v603 = vcvt.s32.f32 %v539
        %v604 = vcvt.s32.f32 %v540
        %v605 = vcvt.s32.f32 %v541
        %v606 = vcvt.s32.f32 %v542
        %v607 = vcvt.s32.f32 %v543
        %v608 = vcvt.s32.f32 %v544
        %v609 = vcvt.s32.f32 %v545
        %v610 = vcvt.s32.f32 %v546
        %v611 = vcvt.s32.f32 %v547
        %v612 = vcvt.s32.f32 %v548
        %v613 = vcvt.s32.f32 %v549
        %v614 = vcvt.s32.f32 %v550
        %v615 = vcvt.s32.f32 %v551
        %v616 = vcvt.s32.f32 %v552
        %v617 = vcvt.s32.f32 %v553
        %v618 = vcvt.s32.f32 %v554
        %v619 = vcvt.s32.f32 %v555
        %v620 = vcvt.s32.f32 %v556
        %v621 = vcvt.s32.f32 %v557
        %v622 = vcvt.s32.f32 %v558
        %v623 = vcvt.s32.f32 %v559
        %v624 = vcvt.s32.f32 %v560
        %v625 = vcvt.s32.f32 %v561
        %v626 = vcvt.s32.f32 %v562
        %v627 = vcvt.s32.f32 %v563
        %v628 = vcvt.s32.f32 %v564
        %v629 = vcvt.s32.f32 %v565
        %v630 = vcvt.s32.f32 %v566
        %v631 = vcvt.s32.f32 %v567
        %v632 = vcvt.s32.f32 %v568
        %v633 = vcvt.s32.f32 %v569
        %v634 = vcvt.s32.f32 %v570
        %v635 = vcvt.s32.f32 %v571
        %v636 = vcvt.s32.f32 %v572
        %v637 = vcvt.s32.f32 %v573
        %v638 = vcvt.s32.f32 %v574
        %v639 = vcvt.s32.f32 %v575
        %v640 = vcvt.s32.f32 %v576
        %v641 = vcvt.s32.f32 %v577
        %v642 = vcvt.s32.f32 %v578
        %v643 = vcvt.s32.f32 %v579
        %v644 = vcvt.s32.f32 %v580
        %v645 = vcvt.s32.f32 %v581
        %v646 = vcvt.s32.f32 %v582
        %v647 = vcvt.s32.f32 %v583
        %v648 = vcvt.s32.f32 %v584
        %v649 = vcvt.s32.f32 %v585
        %v650 = vcvt.s32.f32 %v586
        %v651 = vcvt.s32.f32 %v587
        %v652 = vcvt.s32.f32 %v588
        %v653 = vcvt.s32.f32 %v589
        %v654 = vadd.f32 %v590, %v591
        %655 = vadd.xlane.f32.xlu0 %v654
        %v656 = vpop.xlane.xlu0 %655
        %v657 = vadd.f32 %v592, %v593
        %658 = vadd.xlane.f32.xlu0 %v657
        %v659 = vpop.xlane.xlu0 %658
        %v660 = vadd.f32 %v594, %v595
        %661 = vadd.xlane.f32.xlu0 %v660
        %v662 = vpop.xlane.xlu0 %661
        %v663 = vadd.f32 %v596, %v597
        %664 = vadd.xlane.f32.xlu0 %v663
        %v665 = vpop.xlane.xlu0 %664
        %v666 = vadd.f32 %v598, %v599
        %667 = vadd.xlane.f32.xlu0 %v666
        %v668 = vpop.xlane.xlu0 %667
        %v669 = vadd.f32 %v600, %v601
        %670 = vadd.xlane.f32.xlu0 %v669
        %v671 = vpop.xlane.xlu0 %670
        %v672 = vadd.f32 %v602, %v603
        %673 = vadd.xlane.f32.xlu0 %v672
        %v674 = vpop.xlane.xlu0 %673
        %v675 = vadd.f32 %v604, %v605
        %676 = vadd.xlane.f32.xlu0 %v675
        %v677 = vpop.xlane.xlu0 %676
        %v678 = vadd.f32 %v606, %v607
        %679 = vadd.xlane.f32.xlu0 %v678
        %v680 = vpop.xlane.xlu0 %679
        %v681 = vadd.f32 %v608, %v609
        %682 = vadd.xlane.f32.xlu0 %v681
        %v683 = vpop.xlane.xlu0 %682
        %v684 = vadd.f32 %v610, %v611
        %685 = vadd.xlane.f32.xlu0 %v684
        %v686 = vpop.xlane.xlu0 %685
        %v687 = vadd.f32 %v612, %v613
        %688 = vadd.xlane.f32.xlu0 %v687
        %v689 = vpop.xlane.xlu0 %688
        %v690 = vadd.f32 %v614, %v615
        %691 = vadd.xlane.f32.xlu0 %v690
        %v692 = vpop.xlane.xlu0 %691
        %v693 = vadd.f32 %v616, %v617
        %694 = vadd.xlane.f32.xlu0 %v693
        %v695 = vpop.xlane.xlu0 %694
        %v696 = vadd.f32 %v618, %v619
        %697 = vadd.xlane.f32.xlu0 %v696
        %v698 = vpop.xlane.xlu0 %697
        %v699 = vadd.f32 %v620, %v621
        %700 = vadd.xlane.f32.xlu0 %v699
        %v701 = vpop.xlane.xlu0 %700
        %v702 = vadd.f32 %v622, %v623
        %703 = vadd.xlane.f32.xlu0 %v702
        %v704 = vpop.xlane.xlu0 %703
        %v705 = vadd.f32 %v624, %v625
        %706 = vadd.xlane.f32.xlu0 %v705
        %v707 = vpop.xlane.xlu0 %706
        %v708 = vadd.f32 %v626, %v627
        %709 = vadd.xlane.f32.xlu0 %v708
        %v710 = vpop.xlane.xlu0 %709
        %v711 = vadd.f32 %v628, %v629
        %712 = vadd.xlane.f32.xlu0 %v711
        %v713 = vpop.xlane.xlu0 %712
        %v714 = vadd.f32 %v630, %v631
        %715 = vadd.xlane.f32.xlu0 %v714
        %v716 = vpop.xlane.xlu0 %715
        %v717 = vadd.f32 %v632, %v633
        %718 = vadd.xlane.f32.xlu0 %v717
        %v719 = vpop.xlane.xlu0 %718
        %v720 = vadd.f32 %v634, %v635
        %721 = vadd.xlane.f32.xlu0 %v720
        %v722 = vpop.xlane.xlu0 %721
        %v723 = vadd.f32 %v636, %v637
        %724 = vadd.xlane.f32.xlu0 %v723
        %v725 = vpop.xlane.xlu0 %724
        %v726 = vadd.f32 %v638, %v639
        %727 = vadd.xlane.f32.xlu0 %v726
        %v728 = vpop.xlane.xlu0 %727
        %v729 = vadd.f32 %v640, %v641
        %730 = vadd.xlane.f32.xlu0 %v729
        %v731 = vpop.xlane.xlu0 %730
        %v732 = vadd.f32 %v642, %v643
        %733 = vadd.xlane.f32.xlu0 %v732
        %v734 = vpop.xlane.xlu0 %733
        %v735 = vadd.f32 %v644, %v645
        %736 = vadd.xlane.f32.xlu0 %v735
        %v737 = vpop.xlane.xlu0 %736
        %v738 = vadd.f32 %v646, %v647
        %739 = vadd.xlane.f32.xlu0 %v738
        %v740 = vpop.xlane.xlu0 %739
        %v741 = vadd.f32 %v648, %v649
        %742 = vadd.xlane.f32.xlu0 %v741
        %v743 = vpop.xlane.xlu0 %742
        %v744 = vadd.f32 %v650, %v651
        %745 = vadd.xlane.f32.xlu0 %v744
        %v746 = vpop.xlane.xlu0 %745
        %v747 = vadd.f32 %v652, %v653
        %748 = vadd.xlane.f32.xlu0 %v747
        %v749 = vpop.xlane.xlu0 %748
        %v750 = vadd.f32 %v334, %v656
        %v751 = vadd.f32 %v335, %v659
        %v752 = vadd.f32 %v336, %v662
        %v753 = vadd.f32 %v337, %v665
        %v754 = vadd.f32 %v338, %v668
        %v755 = vadd.f32 %v339, %v671
        %v756 = vadd.f32 %v340, %v674
        %v757 = vadd.f32 %v341, %v677
        %v758 = vadd.f32 %v342, %v680
        %v759 = vadd.f32 %v343, %v683
        %v760 = vadd.f32 %v344, %v686
        %v761 = vadd.f32 %v345, %v689
        %v762 = vadd.f32 %v346, %v692
        %v763 = vadd.f32 %v347, %v695
        %v764 = vadd.f32 %v348, %v698
        %v765 = vadd.f32 %v349, %v701
        %v766 = vadd.f32 %v350, %v704
        %v767 = vadd.f32 %v351, %v707
        %v768 = vadd.f32 %v352, %v710
        %v769 = vadd.f32 %v353, %v713
        %v770 = vadd.f32 %v354, %v716
        %v771 = vadd.f32 %v355, %v719
        %v772 = vadd.f32 %v356, %v722
        %v773 = vadd.f32 %v357, %v725
        %v774 = vadd.f32 %v358, %v728
        %v775 = vadd.f32 %v359, %v731
        %v776 = vadd.f32 %v360, %v734
        %v777 = vadd.f32 %v361, %v737
        %v778 = vadd.f32 %v362, %v740
        %v779 = vadd.f32 %v363, %v743
        %v780 = vadd.f32 %v364, %v746
        %v781 = vadd.f32 %v365, %v749
        %vm782 = vcmask 7168
        %783 = vst.msk [vmem:[#allocation2] sm:$0xff] %vm782, %v750
        %784 = vst.msk [vmem:[#allocation2 + $0x8] sm:$0xff] %vm782, %v751
        %785 = vst.msk [vmem:[#allocation2 + $0x10] sm:$0xff] %vm782, %v752
        %786 = vst.msk [vmem:[#allocation2 + $0x18] sm:$0xff] %vm782, %v753
        %787 = vst.msk [vmem:[#allocation2 + $0x20] sm:$0xff] %vm782, %v754
        %788 = vst.msk [vmem:[#allocation2 + $0x28] sm:$0xff] %vm782, %v755
        %789 = vst.msk [vmem:[#allocation2 + $0x30] sm:$0xff] %vm782, %v756
        %790 = vst.msk [vmem:[#allocation2 + $0x38] sm:$0xff] %vm782, %v757
        %791 = vst.msk [vmem:[#allocation2 + $0x40] sm:$0xff] %vm782, %v758
        %792 = vst.msk [vmem:[#allocation2 + $0x48] sm:$0xff] %vm782, %v759
        %793 = vst.msk [vmem:[#allocation2 + $0x50] sm:$0xff] %vm782, %v760
        %794 = vst.msk [vmem:[#allocation2 + $0x58] sm:$0xff] %vm782, %v761
        %795 = vst.msk [vmem:[#allocation2 + $0x60] sm:$0xff] %vm782, %v762
        %796 = vst.msk [vmem:[#allocation2 + $0x68] sm:$0xff] %vm782, %v763
        %797 = vst.msk [vmem:[#allocation2 + $0x70] sm:$0xff] %vm782, %v764
        %798 = vst.msk [vmem:[#allocation2 + $0x78] sm:$0xff] %vm782, %v765
        %799 = vst.msk [vmem:[#allocation2 + $0x80] sm:$0xff] %vm782, %v766
        %800 = vst.msk [vmem:[#allocation2 + $0x88] sm:$0xff] %vm782, %v767
        %801 = vst.msk [vmem:[#allocation2 + $0x90] sm:$0xff] %vm782, %v768
        %802 = vst.msk [vmem:[#allocation2 + $0x98] sm:$0xff] %vm782, %v769
        %803 = vst.msk [vmem:[#allocation2 + $0xa0] sm:$0xff] %vm782, %v770
        %804 = vst.msk [vmem:[#allocation2 + $0xa8] sm:$0xff] %vm782, %v771
        %805 = vst.msk [vmem:[#allocation2 + $0xb0] sm:$0xff] %vm782, %v772
        %806 = vst.msk [vmem:[#allocation2 + $0xb8] sm:$0xff] %vm782, %v773
        %807 = vst.msk [vmem:[#allocation2 + $0xc0] sm:$0xff] %vm782, %v774
        %808 = vst.msk [vmem:[#allocation2 + $0xc8] sm:$0xff] %vm782, %v775
        %809 = vst.msk [vmem:[#allocation2 + $0xd0] sm:$0xff] %vm782, %v776
        %810 = vst.msk [vmem:[#allocation2 + $0xd8] sm:$0xff] %vm782, %v777
        %811 = vst.msk [vmem:[#allocation2 + $0xe0] sm:$0xff] %vm782, %v778
        %812 = vst.msk [vmem:[#allocation2 + $0xe8] sm:$0xff] %vm782, %v779
        %813 = vst.msk [vmem:[#allocation2 + $0xf0] sm:$0xff] %vm782, %v780
        %814 = vst.msk [vmem:[#allocation2 + $0xf8] sm:$0xff] %vm782, %v781
        %p815 = scmp.eq.s32.totalorder %s17, 1
        // Predicated region
        $region67: #{protein_segmenter2_forward.9} parent=57 // pred_check
          %p816 = pneg %p815
        $region68: #{protein_segmenter2_forward.9} parent=57 // pred_check_branch
          %818 = sbr.rel (%p816) target = $region70
        $region69: #{protein_segmenter2_forward.9} parent=57 // pred_region
          %v819 = vld [vmem:[#allocation2] sm:$0xff]
          %v820 = vld [vmem:[#allocation2 + $0x8] sm:$0xff]
          %v821 = vld [vmem:[#allocation2 + $0x10] sm:$0xff]
          %v822 = vld [vmem:[#allocation2 + $0x18] sm:$0xff]
          %v823 = vld [vmem:[#allocation2 + $0x20] sm:$0xff]
          %v824 = vld [vmem:[#allocation2 + $0x28] sm:$0xff]
          %v825 = vld [vmem:[#allocation2 + $0x30] sm:$0xff]
          %v826 = vld [vmem:[#allocation2 + $0x38] sm:$0xff]
          %v827 = vld [vmem:[#allocation2 + $0x40] sm:$0xff]
          %v828 = vld [vmem:[#allocation2 + $0x48] sm:$0xff]
          %v829 = vld [vmem:[#allocation2 + $0x50] sm:$0xff]
          %v830 = vld [vmem:[#allocation2 + $0x58] sm:$0xff]
          %v831 = vld [vmem:[#allocation2 + $0x60] sm:$0xff]
          %v832 = vld [vmem:[#allocation2 + $0x68] sm:$0xff]
          %v833 = vld [vmem:[#allocation2 + $0x70] sm:$0xff]
          %v834 = vld [vmem:[#allocation2 + $0x78] sm:$0xff]
          %v835 = vld [vmem:[#allocation2 + $0x80] sm:$0xff]
          %v836 = vld [vmem:[#allocation2 + $0x88] sm:$0xff]
          %v837 = vld [vmem:[#allocation2 + $0x90] sm:$0xff]
          %v838 = vld [vmem:[#allocation2 + $0x98] sm:$0xff]
          %v839 = vld [vmem:[#allocation2 + $0xa0] sm:$0xff]
          %v840 = vld [vmem:[#allocation2 + $0xa8] sm:$0xff]
          %v841 = vld [vmem:[#allocation2 + $0xb0] sm:$0xff]
          %v842 = vld [vmem:[#allocation2 + $0xb8] sm:$0xff]
          %v843 = vld [vmem:[#allocation2 + $0xc0] sm:$0xff]
          %v844 = vld [vmem:[#allocation2 + $0xc8] sm:$0xff]
          %v845 = vld [vmem:[#allocation2 + $0xd0] sm:$0xff]
          %v846 = vld [vmem:[#allocation2 + $0xd8] sm:$0xff]
          %v847 = vld [vmem:[#allocation2 + $0xe0] sm:$0xff]
          %v848 = vld [vmem:[#allocation2 + $0xe8] sm:$0xff]
          %v849 = vld [vmem:[#allocation2 + $0xf0] sm:$0xff]
          %v850 = vld [vmem:[#allocation2 + $0xf8] sm:$0xff]
          %vm851 = vcmp.gt.f32.partialorder %v819, 0.0
          %vm852 = vcmp.gt.f32.partialorder %v820, 0.0
          %vm853 = vcmp.gt.f32.partialorder %v821, 0.0
          %vm854 = vcmp.gt.f32.partialorder %v822, 0.0
          %vm855 = vcmp.gt.f32.partialorder %v823, 0.0
          %vm856 = vcmp.gt.f32.partialorder %v824, 0.0
          %vm857 = vcmp.gt.f32.partialorder %v825, 0.0
          %vm858 = vcmp.gt.f32.partialorder %v826, 0.0
          %vm859 = vcmp.gt.f32.partialorder %v827, 0.0
          %vm860 = vcmp.gt.f32.partialorder %v828, 0.0
          %vm861 = vcmp.gt.f32.partialorder %v829, 0.0
          %vm862 = vcmp.gt.f32.partialorder %v830, 0.0
          %vm863 = vcmp.gt.f32.partialorder %v831, 0.0
          %vm864 = vcmp.gt.f32.partialorder %v832, 0.0
          %vm865 = vcmp.gt.f32.partialorder %v833, 0.0
          %vm866 = vcmp.gt.f32.partialorder %v834, 0.0
          %vm867 = vcmp.gt.f32.partialorder %v835, 0.0
          %vm868 = vcmp.gt.f32.partialorder %v836, 0.0
          %vm869 = vcmp.gt.f32.partialorder %v837, 0.0
          %vm870 = vcmp.gt.f32.partialorder %v838, 0.0
          %vm871 = vcmp.gt.f32.partialorder %v839, 0.0
          %vm872 = vcmp.gt.f32.partialorder %v840, 0.0
          %vm873 = vcmp.gt.f32.partialorder %v841, 0.0
          %vm874 = vcmp.gt.f32.partialorder %v842, 0.0
          %vm875 = vcmp.gt.f32.partialorder %v843, 0.0
          %vm876 = vcmp.gt.f32.partialorder %v844, 0.0
          %vm877 = vcmp.gt.f32.partialorder %v845, 0.0
          %vm878 = vcmp.gt.f32.partialorder %v846, 0.0
          %vm879 = vcmp.gt.f32.partialorder %v847, 0.0
          %vm880 = vcmp.gt.f32.partialorder %v848, 0.0
          %vm881 = vcmp.gt.f32.partialorder %v849, 0.0
          %vm882 = vcmp.gt.f32.partialorder %v850, 0.0
          %v883 = vrsqrt.pop %v819
          %v884 = vmul.f32 %v883, %v819
          %v885 = vmul.f32 %v884, %v883
          %v886 = vmul.f32 0.5, %v885
          %v887 = vsub.f32 1.5, %v886
          %v888 = vmul.f32 %v883, %v887
          %vm889 = vweird.f32 %v819
          %vm890 = vweird.f32 %v883
          %vm891 = vmor %vm889, %vm890
          %v892 = vsel %vm891, %v883, %v888
          %v893 = vrsqrt.pop %v820
          %v894 = vmul.f32 %v893, %v820
          %v895 = vmul.f32 %v894, %v893
          %v896 = vmul.f32 0.5, %v895
          %v897 = vsub.f32 1.5, %v896
          %v898 = vmul.f32 %v893, %v897
          %vm899 = vweird.f32 %v820
          %vm900 = vweird.f32 %v893
          %vm901 = vmor %vm899, %vm900
          %v902 = vsel %vm901, %v893, %v898
          %v903 = vrsqrt.pop %v821
          %v904 = vmul.f32 %v903, %v821
          %v905 = vmul.f32 %v904, %v903
          %v906 = vmul.f32 0.5, %v905
          %v907 = vsub.f32 1.5, %v906
          %v908 = vmul.f32 %v903, %v907
          %vm909 = vweird.f32 %v821
          %vm910 = vweird.f32 %v903
          %vm911 = vmor %vm909, %vm910
          %v912 = vsel %vm911, %v903, %v908
          %v913 = vrsqrt.pop %v822
          %v914 = vmul.f32 %v913, %v822
          %v915 = vmul.f32 %v914, %v913
          %v916 = vmul.f32 0.5, %v915
          %v917 = vsub.f32 1.5, %v916
          %v918 = vmul.f32 %v913, %v917
          %vm919 = vweird.f32 %v822
          %vm920 = vweird.f32 %v913
          %vm921 = vmor %vm919, %vm920
          %v922 = vsel %vm921, %v913, %v918
          %v923 = vrsqrt.pop %v823
          %v924 = vmul.f32 %v923, %v823
          %v925 = vmul.f32 %v924, %v923
          %v926 = vmul.f32 0.5, %v925
          %v927 = vsub.f32 1.5, %v926
          %v928 = vmul.f32 %v923, %v927
          %vm929 = vweird.f32 %v823
          %vm930 = vweird.f32 %v923
          %vm931 = vmor %vm929, %vm930
          %v932 = vsel %vm931, %v923, %v928
          %v933 = vrsqrt.pop %v824
          %v934 = vmul.f32 %v933, %v824
          %v935 = vmul.f32 %v934, %v933
          %v936 = vmul.f32 0.5, %v935
          %v937 = vsub.f32 1.5, %v936
          %v938 = vmul.f32 %v933, %v937
          %vm939 = vweird.f32 %v824
          %vm940 = vweird.f32 %v933
          %vm941 = vmor %vm939, %vm940
          %v942 = vsel %vm941, %v933, %v938
          %v943 = vrsqrt.pop %v825
          %v944 = vmul.f32 %v943, %v825
          %v945 = vmul.f32 %v944, %v943
          %v946 = vmul.f32 0.5, %v945
          %v947 = vsub.f32 1.5, %v946
          %v948 = vmul.f32 %v943, %v947
          %vm949 = vweird.f32 %v825
          %vm950 = vweird.f32 %v943
          %vm951 = vmor %vm949, %vm950
          %v952 = vsel %vm951, %v943, %v948
          %v953 = vrsqrt.pop %v826
          %v954 = vmul.f32 %v953, %v826
          %v955 = vmul.f32 %v954, %v953
          %v956 = vmul.f32 0.5, %v955
          %v957 = vsub.f32 1.5, %v956
          %v958 = vmul.f32 %v953, %v957
          %vm959 = vweird.f32 %v826
          %vm960 = vweird.f32 %v953
          %vm961 = vmor %vm959, %vm960
          %v962 = vsel %vm961, %v953, %v958
          %v963 = vrsqrt.pop %v827
          %v964 = vmul.f32 %v963, %v827
          %v965 = vmul.f32 %v964, %v963
          %v966 = vmul.f32 0.5, %v965
          %v967 = vsub.f32 1.5, %v966
          %v968 = vmul.f32 %v963, %v967
          %vm969 = vweird.f32 %v827
          %vm970 = vweird.f32 %v963
          %vm971 = vmor %vm969, %vm970
          %v972 = vsel %vm971, %v963, %v968
          %v973 = vrsqrt.pop %v828
          %v974 = vmul.f32 %v973, %v828
          %v975 = vmul.f32 %v974, %v973
          %v976 = vmul.f32 0.5, %v975
          %v977 = vsub.f32 1.5, %v976
          %v978 = vmul.f32 %v973, %v977
          %vm979 = vweird.f32 %v828
          %vm980 = vweird.f32 %v973
          %vm981 = vmor %vm979, %vm980
          %v982 = vsel %vm981, %v973, %v978
          %v983 = vrsqrt.pop %v829
          %v984 = vmul.f32 %v983, %v829
          %v985 = vmul.f32 %v984, %v983
          %v986 = vmul.f32 0.5, %v985
          %v987 = vsub.f32 1.5, %v986
          %v988 = vmul.f32 %v983, %v987
          %vm989 = vweird.f32 %v829
          %vm990 = vweird.f32 %v983
          %vm991 = vmor %vm989, %vm990
          %v992 = vsel %vm991, %v983, %v988
          %v993 = vrsqrt.pop %v830
          %v994 = vmul.f32 %v993, %v830
          %v995 = vmul.f32 %v994, %v993
          %v996 = vmul.f32 0.5, %v995
          %v997 = vsub.f32 1.5, %v996
          %v998 = vmul.f32 %v993, %v997
          %vm999 = vweird.f32 %v830
          %vm1000 = vweird.f32 %v993
          %vm1001 = vmor %vm999, %vm1000
          %v1002 = vsel %vm1001, %v993, %v998
          %v1003 = vrsqrt.pop %v831
          %v1004 = vmul.f32 %v1003, %v831
          %v1005 = vmul.f32 %v1004, %v1003
          %v1006 = vmul.f32 0.5, %v1005
          %v1007 = vsub.f32 1.5, %v1006
          %v1008 = vmul.f32 %v1003, %v1007
          %vm1009 = vweird.f32 %v831
          %vm1010 = vweird.f32 %v1003
          %vm1011 = vmor %vm1009, %vm1010
          %v1012 = vsel %vm1011, %v1003, %v1008
          %v1013 = vrsqrt.pop %v832
          %v1014 = vmul.f32 %v1013, %v832
          %v1015 = vmul.f32 %v1014, %v1013
          %v1016 = vmul.f32 0.5, %v1015
          %v1017 = vsub.f32 1.5, %v1016
          %v1018 = vmul.f32 %v1013, %v1017
          %vm1019 = vweird.f32 %v832
          %vm1020 = vweird.f32 %v1013
          %vm1021 = vmor %vm1019, %vm1020
          %v1022 = vsel %vm1021, %v1013, %v1018
          %v1023 = vrsqrt.pop %v833
          %v1024 = vmul.f32 %v1023, %v833
          %v1025 = vmul.f32 %v1024, %v1023
          %v1026 = vmul.f32 0.5, %v1025
          %v1027 = vsub.f32 1.5, %v1026
          %v1028 = vmul.f32 %v1023, %v1027
          %vm1029 = vweird.f32 %v833
          %vm1030 = vweird.f32 %v1023
          %vm1031 = vmor %vm1029, %vm1030
          %v1032 = vsel %vm1031, %v1023, %v1028
          %v1033 = vrsqrt.pop %v834
          %v1034 = vmul.f32 %v1033, %v834
          %v1035 = vmul.f32 %v1034, %v1033
          %v1036 = vmul.f32 0.5, %v1035
          %v1037 = vsub.f32 1.5, %v1036
          %v1038 = vmul.f32 %v1033, %v1037
          %vm1039 = vweird.f32 %v834
          %vm1040 = vweird.f32 %v1033
          %vm1041 = vmor %vm1039, %vm1040
          %v1042 = vsel %vm1041, %v1033, %v1038
          %v1043 = vrsqrt.pop %v835
          %v1044 = vmul.f32 %v1043, %v835
          %v1045 = vmul.f32 %v1044, %v1043
          %v1046 = vmul.f32 0.5, %v1045
          %v1047 = vsub.f32 1.5, %v1046
          %v1048 = vmul.f32 %v1043, %v1047
          %vm1049 = vweird.f32 %v835
          %vm1050 = vweird.f32 %v1043
          %vm1051 = vmor %vm1049, %vm1050
          %v1052 = vsel %vm1051, %v1043, %v1048
          %v1053 = vrsqrt.pop %v836
          %v1054 = vmul.f32 %v1053, %v836
          %v1055 = vmul.f32 %v1054, %v1053
          %v1056 = vmul.f32 0.5, %v1055
          %v1057 = vsub.f32 1.5, %v1056
          %v1058 = vmul.f32 %v1053, %v1057
          %vm1059 = vweird.f32 %v836
          %vm1060 = vweird.f32 %v1053
          %vm1061 = vmor %vm1059, %vm1060
          %v1062 = vsel %vm1061, %v1053, %v1058
          %v1063 = vrsqrt.pop %v837
          %v1064 = vmul.f32 %v1063, %v837
          %v1065 = vmul.f32 %v1064, %v1063
          %v1066 = vmul.f32 0.5, %v1065
          %v1067 = vsub.f32 1.5, %v1066
          %v1068 = vmul.f32 %v1063, %v1067
          %vm1069 = vweird.f32 %v837
          %vm1070 = vweird.f32 %v1063
          %vm1071 = vmor %vm1069, %vm1070
          %v1072 = vsel %vm1071, %v1063, %v1068
          %v1073 = vrsqrt.pop %v838
          %v1074 = vmul.f32 %v1073, %v838
          %v1075 = vmul.f32 %v1074, %v1073
          %v1076 = vmul.f32 0.5, %v1075
          %v1077 = vsub.f32 1.5, %v1076
          %v1078 = vmul.f32 %v1073, %v1077
          %vm1079 = vweird.f32 %v838
          %vm1080 = vweird.f32 %v1073
          %vm1081 = vmor %vm1079, %vm1080
          %v1082 = vsel %vm1081, %v1073, %v1078
          %v1083 = vrsqrt.pop %v839
          %v1084 = vmul.f32 %v1083, %v839
          %v1085 = vmul.f32 %v1084, %v1083
          %v1086 = vmul.f32 0.5, %v1085
          %v1087 = vsub.f32 1.5, %v1086
          %v1088 = vmul.f32 %v1083, %v1087
          %vm1089 = vweird.f32 %v839
          %vm1090 = vweird.f32 %v1083
          %vm1091 = vmor %vm1089, %vm1090
          %v1092 = vsel %vm1091, %v1083, %v1088
          %v1093 = vrsqrt.pop %v840
          %v1094 = vmul.f32 %v1093, %v840
          %v1095 = vmul.f32 %v1094, %v1093
          %v1096 = vmul.f32 0.5, %v1095
          %v1097 = vsub.f32 1.5, %v1096
          %v1098 = vmul.f32 %v1093, %v1097
          %vm1099 = vweird.f32 %v840
          %vm1100 = vweird.f32 %v1093
          %vm1101 = vmor %vm1099, %vm1100
          %v1102 = vsel %vm1101, %v1093, %v1098
          %v1103 = vrsqrt.pop %v841
          %v1104 = vmul.f32 %v1103, %v841
          %v1105 = vmul.f32 %v1104, %v1103
          %v1106 = vmul.f32 0.5, %v1105
          %v1107 = vsub.f32 1.5, %v1106
          %v1108 = vmul.f32 %v1103, %v1107
          %vm1109 = vweird.f32 %v841
          %vm1110 = vweird.f32 %v1103
          %vm1111 = vmor %vm1109, %vm1110
          %v1112 = vsel %vm1111, %v1103, %v1108
          %v1113 = vrsqrt.pop %v842
          %v1114 = vmul.f32 %v1113, %v842
          %v1115 = vmul.f32 %v1114, %v1113
          %v1116 = vmul.f32 0.5, %v1115
          %v1117 = vsub.f32 1.5, %v1116
          %v1118 = vmul.f32 %v1113, %v1117
          %vm1119 = vweird.f32 %v842
          %vm1120 = vweird.f32 %v1113
          %vm1121 = vmor %vm1119, %vm1120
          %v1122 = vsel %vm1121, %v1113, %v1118
          %v1123 = vrsqrt.pop %v843
          %v1124 = vmul.f32 %v1123, %v843
          %v1125 = vmul.f32 %v1124, %v1123
          %v1126 = vmul.f32 0.5, %v1125
          %v1127 = vsub.f32 1.5, %v1126
          %v1128 = vmul.f32 %v1123, %v1127
          %vm1129 = vweird.f32 %v843
          %vm1130 = vweird.f32 %v1123
          %vm1131 = vmor %vm1129, %vm1130
          %v1132 = vsel %vm1131, %v1123, %v1128
          %v1133 = vrsqrt.pop %v844
          %v1134 = vmul.f32 %v1133, %v844
          %v1135 = vmul.f32 %v1134, %v1133
          %v1136 = vmul.f32 0.5, %v1135
          %v1137 = vsub.f32 1.5, %v1136
          %v1138 = vmul.f32 %v1133, %v1137
          %vm1139 = vweird.f32 %v844
          %vm1140 = vweird.f32 %v1133
          %vm1141 = vmor %vm1139, %vm1140
          %v1142 = vsel %vm1141, %v1133, %v1138
          %v1143 = vrsqrt.pop %v845
          %v1144 = vmul.f32 %v1143, %v845
          %v1145 = vmul.f32 %v1144, %v1143
          %v1146 = vmul.f32 0.5, %v1145
          %v1147 = vsub.f32 1.5, %v1146
          %v1148 = vmul.f32 %v1143, %v1147
          %vm1149 = vweird.f32 %v845
          %vm1150 = vweird.f32 %v1143
          %vm1151 = vmor %vm1149, %vm1150
          %v1152 = vsel %vm1151, %v1143, %v1148
          %v1153 = vrsqrt.pop %v846
          %v1154 = vmul.f32 %v1153, %v846
          %v1155 = vmul.f32 %v1154, %v1153
          %v1156 = vmul.f32 0.5, %v1155
          %v1157 = vsub.f32 1.5, %v1156
          %v1158 = vmul.f32 %v1153, %v1157
          %vm1159 = vweird.f32 %v846
          %vm1160 = vweird.f32 %v1153
          %vm1161 = vmor %vm1159, %vm1160
          %v1162 = vsel %vm1161, %v1153, %v1158
          %v1163 = vrsqrt.pop %v847
          %v1164 = vmul.f32 %v1163, %v847
          %v1165 = vmul.f32 %v1164, %v1163
          %v1166 = vmul.f32 0.5, %v1165
          %v1167 = vsub.f32 1.5, %v1166
          %v1168 = vmul.f32 %v1163, %v1167
          %vm1169 = vweird.f32 %v847
          %vm1170 = vweird.f32 %v1163
          %vm1171 = vmor %vm1169, %vm1170
          %v1172 = vsel %vm1171, %v1163, %v1168
          %v1173 = vrsqrt.pop %v848
          %v1174 = vmul.f32 %v1173, %v848
          %v1175 = vmul.f32 %v1174, %v1173
          %v1176 = vmul.f32 0.5, %v1175
          %v1177 = vsub.f32 1.5, %v1176
          %v1178 = vmul.f32 %v1173, %v1177
          %vm1179 = vweird.f32 %v848
          %vm1180 = vweird.f32 %v1173
          %vm1181 = vmor %vm1179, %vm1180
          %v1182 = vsel %vm1181, %v1173, %v1178
          %v1183 = vrsqrt.pop %v849
          %v1184 = vmul.f32 %v1183, %v849
          %v1185 = vmul.f32 %v1184, %v1183
          %v1186 = vmul.f32 0.5, %v1185
          %v1187 = vsub.f32 1.5, %v1186
          %v1188 = vmul.f32 %v1183, %v1187
          %vm1189 = vweird.f32 %v849
          %vm1190 = vweird.f32 %v1183
          %vm1191 = vmor %vm1189, %vm1190
          %v1192 = vsel %vm1191, %v1183, %v1188
          %v1193 = vrsqrt.pop %v850
          %v1194 = vmul.f32 %v1193, %v850
          %v1195 = vmul.f32 %v1194, %v1193
          %v1196 = vmul.f32 0.5, %v1195
          %v1197 = vsub.f32 1.5, %v1196
          %v1198 = vmul.f32 %v1193, %v1197
          %vm1199 = vweird.f32 %v850
          %vm1200 = vweird.f32 %v1193
          %vm1201 = vmor %vm1199, %vm1200
          %v1202 = vsel %vm1201, %v1193, %v1198
          %v1203 = vsel %vm851, %v892, 0.0
          %v1204 = vsel %vm852, %v902, 0.0
          %v1205 = vsel %vm853, %v912, 0.0
          %v1206 = vsel %vm854, %v922, 0.0
          %v1207 = vsel %vm855, %v932, 0.0
          %v1208 = vsel %vm856, %v942, 0.0
          %v1209 = vsel %vm857, %v952, 0.0
          %v1210 = vsel %vm858, %v962, 0.0
          %v1211 = vsel %vm859, %v972, 0.0
          %v1212 = vsel %vm860, %v982, 0.0
          %v1213 = vsel %vm861, %v992, 0.0
          %v1214 = vsel %vm862, %v1002, 0.0
          %v1215 = vsel %vm863, %v1012, 0.0
          %v1216 = vsel %vm864, %v1022, 0.0
          %v1217 = vsel %vm865, %v1032, 0.0
          %v1218 = vsel %vm866, %v1042, 0.0
          %v1219 = vsel %vm867, %v1052, 0.0
          %v1220 = vsel %vm868, %v1062, 0.0
          %v1221 = vsel %vm869, %v1072, 0.0
          %v1222 = vsel %vm870, %v1082, 0.0
          %v1223 = vsel %vm871, %v1092, 0.0
          %v1224 = vsel %vm872, %v1102, 0.0
          %v1225 = vsel %vm873, %v1112, 0.0
          %v1226 = vsel %vm874, %v1122, 0.0
          %v1227 = vsel %vm875, %v1132, 0.0
          %v1228 = vsel %vm876, %v1142, 0.0
          %v1229 = vsel %vm877, %v1152, 0.0
          %v1230 = vsel %vm878, %v1162, 0.0
          %v1231 = vsel %vm879, %v1172, 0.0
          %v1232 = vsel %vm880, %v1182, 0.0
          %v1233 = vsel %vm881, %v1192, 0.0
          %v1234 = vsel %vm882, %v1202, 0.0
          %1235 = vst.msk [vmem:[%s295] sm:$0xff] %vm782, %v1203
          %1236 = vst.msk [vmem:[%s295 + $0x8] sm:$0xff] %vm782, %v1204
          %1237 = vst.msk [vmem:[%s295 + $0x10] sm:$0xff] %vm782, %v1205
          %1238 = vst.msk [vmem:[%s295 + $0x18] sm:$0xff] %vm782, %v1206
          %1239 = vst.msk [vmem:[%s295 + $0x20] sm:$0xff] %vm782, %v1207
          %1240 = vst.msk [vmem:[%s295 + $0x28] sm:$0xff] %vm782, %v1208
          %1241 = vst.msk [vmem:[%s295 + $0x30] sm:$0xff] %vm782, %v1209
          %1242 = vst.msk [vmem:[%s295 + $0x38] sm:$0xff] %vm782, %v1210
          %1243 = vst.msk [vmem:[%s295 + $0x40] sm:$0xff] %vm782, %v1211
          %1244 = vst.msk [vmem:[%s295 + $0x48] sm:$0xff] %vm782, %v1212
          %1245 = vst.msk [vmem:[%s295 + $0x50] sm:$0xff] %vm782, %v1213
          %1246 = vst.msk [vmem:[%s295 + $0x58] sm:$0xff] %vm782, %v1214
          %1247 = vst.msk [vmem:[%s295 + $0x60] sm:$0xff] %vm782, %v1215
          %1248 = vst.msk [vmem:[%s295 + $0x68] sm:$0xff] %vm782, %v1216
          %1249 = vst.msk [vmem:[%s295 + $0x70] sm:$0xff] %vm782, %v1217
          %1250 = vst.msk [vmem:[%s295 + $0x78] sm:$0xff] %vm782, %v1218
          %1251 = vst.msk [vmem:[%s295 + $0x80] sm:$0xff] %vm782, %v1219
          %1252 = vst.msk [vmem:[%s295 + $0x88] sm:$0xff] %vm782, %v1220
          %1253 = vst.msk [vmem:[%s295 + $0x90] sm:$0xff] %vm782, %v1221
          %1254 = vst.msk [vmem:[%s295 + $0x98] sm:$0xff] %vm782, %v1222
          %1255 = vst.msk [vmem:[%s295 + $0xa0] sm:$0xff] %vm782, %v1223
          %1256 = vst.msk [vmem:[%s295 + $0xa8] sm:$0xff] %vm782, %v1224
          %1257 = vst.msk [vmem:[%s295 + $0xb0] sm:$0xff] %vm782, %v1225
          %1258 = vst.msk [vmem:[%s295 + $0xb8] sm:$0xff] %vm782, %v1226
          %1259 = vst.msk [vmem:[%s295 + $0xc0] sm:$0xff] %vm782, %v1227
          %1260 = vst.msk [vmem:[%s295 + $0xc8] sm:$0xff] %vm782, %v1228
          %1261 = vst.msk [vmem:[%s295 + $0xd0] sm:$0xff] %vm782, %v1229
          %1262 = vst.msk [vmem:[%s295 + $0xd8] sm:$0xff] %vm782, %v1230
          %1263 = vst.msk [vmem:[%s295 + $0xe0] sm:$0xff] %vm782, %v1231
          %1264 = vst.msk [vmem:[%s295 + $0xe8] sm:$0xff] %vm782, %v1232
          %1265 = vst.msk [vmem:[%s295 + $0xf0] sm:$0xff] %vm782, %v1233
          %1266 = vst.msk [vmem:[%s295 + $0xf8] sm:$0xff] %vm782, %v1234
        $region70: #{protein_segmenter2_forward.9} parent=57 // pred_fallthru
          _
        %s1267 = smul.u32 32, %s16
        %p1268 = scmp.lt.s32.totalorder %s1267, 63
        %s1269 = scalar_select %p1268, %s1267, 63
        %s1270 = smul.addr %s1269, 8
        %s1271 = scalar_lea.vmem %s1, %s1270
        // Predicated region
        $region71: #{protein_segmenter2_forward.9} parent=57 // pred_check
          %p1272 = pneg %p70
        $region72: #{protein_segmenter2_forward.9} parent=57 // pred_check_branch
          %1274 = sbr.rel (%p1272) target = $region74
        $region73: #{protein_segmenter2_forward.9} parent=57 // pred_region
          %s1275 = smul.u32 32, %s16
        $region74: #{protein_segmenter2_forward.9} parent=57 // pred_fallthru
          _
      $region58: #{protein_segmenter2_forward.9} parent=5 // pred_fallthru
        _
      %p1276 = scmp.le.s32.totalorder 2, %s7
      // Predicated region
      $region75: #{protein_segmenter2_forward.9} parent=5 // pred_check
        %p1277 = pneg %p1276
      $region76: #{protein_segmenter2_forward.9} parent=5 // pred_check_branch
        %1279 = sbr.rel (%p1277) target = $region78
      $region77: #{protein_segmenter2_forward.9} parent=5 // pred_region
        %s1280 = ssub.s32 %s7, 2
        // Predicated region
        $region79: #{protein_segmenter2_forward.9} parent=77 // pred_check
          %p1281 = pneg %p76
        $region80: #{protein_segmenter2_forward.9} parent=77 // pred_check_branch
          %1283 = sbr.rel (%p1281) target = $region82
        $region81: #{protein_segmenter2_forward.9} parent=77 // pred_region
          %s1284 = smul.u32 32, %s18
          %p1285 = scmp.lt.s32.totalorder %s1284, 63
          %s1286 = scalar_select %p1285, %s1284, 63
          %s1287 = smul.addr %s1286, 8
          %s1288 = scalar_lea.vmem %s1, %s1287
        $region82: #{protein_segmenter2_forward.9} parent=77 // pred_fallthru
          _
      $region78: #{protein_segmenter2_forward.9} parent=5 // pred_fallthru
        _
    $region6: #{protein_segmenter2_forward.9} parent=1 // loop_footer
      %s11 = sadd.s32 1, %s7
    $region7: #{protein_segmenter2_forward.9} parent=1 // loop_footer_branch
      %6 = sbr.rel target = $region3
    $region8: #{protein_segmenter2_forward.9} parent=1 // loop_exit
      _

// kernel: protein_segmenter2_forward.11
$region0: #{protein_segmenter2_forward.11}
  #allocation0 [shape = 'u32[]', space=smem, size = 0x4, offset = 0x4, fixed_abs, tag = 'smem constant byte address 0x4 - core index']
  #allocation1 [shape = 'u32[72,128]{1,0:T(1,128)}', space=vmem, size = 0x9000, scoped, tag = 'internal scratch']
  #allocation2 [shape = 'f32[256,128]{1,0:T(8,128)}', space=vmem, size = 0x20000, scoped, tag = 'scratch operand']
  %s0 = inlined_call_operand.vmem [shape: bf16[512,512], index: 0, kind: input, shape index: {}]
  %s1 = inlined_call_operand.vmem [shape: bf16[512,128], index: 1, kind: input, shape index: {}, may-alias: {1,2}]
  %s2 = inlined_call_operand.vmem [shape: bf16[512,128], index: 2, kind: input, shape index: {}, may-alias: {1,2}]
  %s3 = inlined_call_operand.vmem [shape: f32[512,1], index: 3, kind: input, shape index: {}]
  %s4 = inlined_call_operand.vmem [shape: f32[1,128], index: 4, kind: input, shape index: {}]
  %s5 = inlined_call_operand.vmem [shape: f32[512,128], index: 5, kind: output, shape index: {}]
  %s6 = sld [smem:[#allocation0]]
  $region99: #{protein_segmenter2_forward.11} parent=0
    _
  %s8 = ssub.s32 1, %s6
  %s9 = scalar_select 0, %s8, %s6
  $region1: #{protein_segmenter2_forward.11} parent=0
    #allocation3 [shape = 'u8[262144]{0}', space=vmem, size = 0x40000, scoped, tag = 'input window, operand 0']
    loop: start=0, step=1, limit=6
    $region2: #{protein_segmenter2_forward.11} parent=1 // loop_pre_header
      _
    $region3: #{protein_segmenter2_forward.11} parent=1 // loop_header
      %s11 = sphi 0, %s15
      %p12 = scmp.ge.s32.totalorder %s11, 6
      %s18 = sphi 0, %s30
      %s19 = sphi 0, %s26
      %s20 = sphi 0, %s18
      %s21 = sphi 0, %s19
      %s22 = sphi 0, %s20
      %s23 = sphi 0, %s21
      %s35 = sphi 0, %s37
      %s38 = sphi 0, %s35
      %s39 = sphi 0, %s38
      %s55 = sphi 0, %s39
      %s61 = sphi 0, %s63
      %s64 = sphi 0, %s61
      %s65 = sphi 0, %s64
      %s81 = sphi 0, %s65
      %s87 = sphi 0, %s89
      %s90 = sphi 0, %s87
      %s91 = sphi 0, %s90
      %s107 = sphi 0, %s91
      %s113 = sphi 0, %s115
      %s116 = sphi 0, %s113
      %s117 = sphi 0, %s116
      %s133 = sphi 0, %s117
      %s137 = sphi 0, %s137
      %s139 = sphi 0, %s137
      %s140 = sphi 0, %s139
      %s154 = sphi 0, %s140
      %s160 = sphi 0, %s162
      %s163 = sphi 0, %s160
      %s164 = sphi 0, %s163
      %s180 = sphi 0, %s164
    $region4: #{protein_segmenter2_forward.11} parent=1 // loop_header_branch
      %14 = sbr.rel (%p12) target = $region8
    $region5: #{protein_segmenter2_forward.11} parent=1 // loop_body
      %s16 = ssub.s32 %s11, 1
      %s17 = ssub.s32 %s11, 2
      %s24 = sadd.s32 1, %s19
      %p25 = scmp.ge.s32.totalorder %s24, 2
      %s26 = scalar_select %p25, 0, %s24
      %s27 = sadd.s32 1, %s18
      %s28 = scalar_select %p25, %s27, %s18
      %p29 = scmp.ge.s32.totalorder %s28, 2
      %s30 = scalar_select %p29, 0, %s28
      %s31 = ssub.s32 %s18, %s30
      %s32 = ssub.s32 %s19, %s26
      %s33 = sor.u32 %s31, %s32
      %p34 = scmp.eq.s32.totalorder %s33, 0
      %s36 = sadd.s32 %s35, 1
      %s37 = scalar_select %p34, %s35, %s36
      %p40 = pneg %p34
      %p41 = scmp.eq.s32.totalorder %s11, 3
      %p42 = por %p40, %p41
      %p43 = scmp.ne.s32.totalorder %s35, %s38
      %p44 = scmp.eq.s32.totalorder %s11, 0
      %p45 = por %p43, %p44
      %p46 = scmp.ne.s32.totalorder %s35, %s38
      %p47 = scmp.eq.s32.totalorder %s16, 3
      %p48 = por %p46, %p47
      %p49 = scmp.ne.s32.totalorder %s38, %s39
      %p50 = scmp.eq.s32.totalorder %s16, 0
      %p51 = por %p49, %p50
      %p52 = scmp.ne.s32.totalorder %s38, %s39
      %p53 = scmp.eq.s32.totalorder %s17, 3
      %p54 = por %p52, %p53
      %p56 = scmp.ne.s32.totalorder %s39, %s55
      %p57 = scmp.eq.s32.totalorder %s17, 0
      %p58 = por %p56, %p57
      %s59 = ssub.s32 %s19, %s26
      %p60 = scmp.eq.s32.totalorder %s59, 0
      %s62 = sadd.s32 %s61, 1
      %s63 = scalar_select %p60, %s61, %s62
      %p66 = pneg %p60
      %p67 = scmp.eq.s32.totalorder %s11, 3
      %p68 = por %p66, %p67
      %p69 = scmp.ne.s32.totalorder %s61, %s64
      %p70 = scmp.eq.s32.totalorder %s11, 0
      %p71 = por %p69, %p70
      %p72 = scmp.ne.s32.totalorder %s61, %s64
      %p73 = scmp.eq.s32.totalorder %s16, 3
      %p74 = por %p72, %p73
      %p75 = scmp.ne.s32.totalorder %s64, %s65
      %p76 = scmp.eq.s32.totalorder %s16, 0
      %p77 = por %p75, %p76
      %p78 = scmp.ne.s32.totalorder %s64, %s65
      %p79 = scmp.eq.s32.totalorder %s17, 3
      %p80 = por %p78, %p79
      %p82 = scmp.ne.s32.totalorder %s65, %s81
      %p83 = scmp.eq.s32.totalorder %s17, 0
      %p84 = por %p82, %p83
      %s85 = ssub.s32 %s18, %s30
      %p86 = scmp.eq.s32.totalorder %s85, 0
      %s88 = sadd.s32 %s87, 1
      %s89 = scalar_select %p86, %s87, %s88
      %p92 = pneg %p86
      %p93 = scmp.eq.s32.totalorder %s11, 3
      %p94 = por %p92, %p93
      %p95 = scmp.ne.s32.totalorder %s87, %s90
      %p96 = scmp.eq.s32.totalorder %s11, 0
      %p97 = por %p95, %p96
      %p98 = scmp.ne.s32.totalorder %s87, %s90
      %p99 = scmp.eq.s32.totalorder %s16, 3
      %p100 = por %p98, %p99
      %p101 = scmp.ne.s32.totalorder %s90, %s91
      %p102 = scmp.eq.s32.totalorder %s16, 0
      %p103 = por %p101, %p102
      %p104 = scmp.ne.s32.totalorder %s90, %s91
      %p105 = scmp.eq.s32.totalorder %s17, 3
      %p106 = por %p104, %p105
      %p108 = scmp.ne.s32.totalorder %s91, %s107
      %p109 = scmp.eq.s32.totalorder %s17, 0
      %p110 = por %p108, %p109
      %s111 = ssub.s32 %s18, %s30
      %p112 = scmp.eq.s32.totalorder %s111, 0
      %s114 = sadd.s32 %s113, 1
      %s115 = scalar_select %p112, %s113, %s114
      %p118 = pneg %p112
      %p119 = scmp.eq.s32.totalorder %s11, 3
      %p120 = por %p118, %p119
      %p121 = scmp.ne.s32.totalorder %s113, %s116
      %p122 = scmp.eq.s32.totalorder %s11, 0
      %p123 = por %p121, %p122
      %p124 = scmp.ne.s32.totalorder %s113, %s116
      %p125 = scmp.eq.s32.totalorder %s16, 3
      %p126 = por %p124, %p125
      %p127 = scmp.ne.s32.totalorder %s116, %s117
      %p128 = scmp.eq.s32.totalorder %s16, 0
      %p129 = por %p127, %p128
      %p130 = scmp.ne.s32.totalorder %s116, %s117
      %p131 = scmp.eq.s32.totalorder %s17, 3
      %p132 = por %p130, %p131
      %p134 = scmp.ne.s32.totalorder %s117, %s133
      %p135 = scmp.eq.s32.totalorder %s17, 0
      %p136 = por %p134, %p135
      %s138 = sadd.s32 %s137, 1
      %p141 = scmp.eq.s32.totalorder %s11, 3
      %p142 = scmp.ne.s32.totalorder %s137, %s139
      %p143 = scmp.eq.s32.totalorder %s11, 0
      %p144 = por %p142, %p143
      %p145 = scmp.ne.s32.totalorder %s137, %s139
      %p146 = scmp.eq.s32.totalorder %s16, 3
      %p147 = por %p145, %p146
      %p148 = scmp.ne.s32.totalorder %s139, %s140
      %p149 = scmp.eq.s32.totalorder %s16, 0
      %p150 = por %p148, %p149
      %p151 = scmp.ne.s32.totalorder %s139, %s140
      %p152 = scmp.eq.s32.totalorder %s17, 3
      %p153 = por %p151, %p152
      %p155 = scmp.ne.s32.totalorder %s140, %s154
      %p156 = scmp.eq.s32.totalorder %s17, 0
      %p157 = por %p155, %p156
      %s158 = ssub.s32 %s18, %s30
      %p159 = scmp.eq.s32.totalorder %s158, 0
      %s161 = sadd.s32 %s160, 1
      %s162 = scalar_select %p159, %s160, %s161
      %p165 = pneg %p159
      %p166 = scmp.eq.s32.totalorder %s11, 3
      %p167 = por %p165, %p166
      %p168 = scmp.ne.s32.totalorder %s160, %s163
      %p169 = scmp.eq.s32.totalorder %s11, 0
      %p170 = por %p168, %p169
      %p171 = scmp.ne.s32.totalorder %s160, %s163
      %p172 = scmp.eq.s32.totalorder %s16, 3
      %p173 = por %p171, %p172
      %p174 = scmp.ne.s32.totalorder %s163, %s164
      %p175 = scmp.eq.s32.totalorder %s16, 0
      %p176 = por %p174, %p175
      %p177 = scmp.ne.s32.totalorder %s163, %s164
      %p178 = scmp.eq.s32.totalorder %s17, 3
      %p179 = por %p177, %p178
      %p181 = scmp.ne.s32.totalorder %s164, %s180
      %p182 = scmp.eq.s32.totalorder %s17, 0
      %p183 = por %p181, %p182
      %p184 = scmp.le.s32.totalorder 1, %s11
      %p185 = scmp.lt.s32.totalorder %s11, 5
      %p186 = pnand %p184, %p185
      %p187 = pneg %p186
      // Predicated region
      $region9: #{protein_segmenter2_forward.11} parent=5 // pred_check
        _
      $region10: #{protein_segmenter2_forward.11} parent=5 // pred_check_branch
        %189 = sbr.rel (%p186) target = $region12
      $region11: #{protein_segmenter2_forward.11} parent=5 // pred_region
        %s190 = ssub.s32 %s11, 1
        // Predicated region
        $region13: #{protein_segmenter2_forward.11} parent=11 // pred_check
          %p191 = pneg %p150
        $region14: #{protein_segmenter2_forward.11} parent=11 // pred_check_branch
          %193 = sbr.rel (%p191) target = $region16
        $region15: #{protein_segmenter2_forward.11} parent=11 // pred_region
          _
        $region16: #{protein_segmenter2_forward.11} parent=11 // pred_fallthru
          _
      $region12: #{protein_segmenter2_forward.11} parent=5 // pred_fallthru
        _
      %p194 = scmp.lt.s32.totalorder %s11, 4
      // Predicated region
      $region17: #{protein_segmenter2_forward.11} parent=5 // pred_check
        %p195 = pneg %p194
      $region18: #{protein_segmenter2_forward.11} parent=5 // pred_check_branch
        %197 = sbr.rel (%p195) target = $region20
      $region19: #{protein_segmenter2_forward.11} parent=5 // pred_region
        // Predicated region
        $region21: #{protein_segmenter2_forward.11} parent=19 // pred_check
          %p198 = pneg %p45
        $region22: #{protein_segmenter2_forward.11} parent=19 // pred_check_branch
          %200 = sbr.rel (%p198) target = $region24
        $region23: #{protein_segmenter2_forward.11} parent=19 // pred_region
          %s201 = sand.u32 %s35, 1
          %s202 = sand.u32 %s35, 1
          %s203 = smul.addr %s202, 256
          %s204 = scalar_lea.vmem [#allocation3], %s203
          %s205 = smul.u32 32, %s18
          %s206 = smul.u32 2, %s19
          %s207 = smul.addr %s205, 4
          %s208 = sadd.s32 %s206, %s207
          %s209 = smul.addr %s208, 4
          %s210 = scalar_lea.vmem %s0, %s209
          // Predicated region
          $region25: #{protein_segmenter2_forward.11} parent=23 // pred_check
            _
          $region26: #{protein_segmenter2_forward.11} parent=23 // pred_check_branch
            %212 = sbr.rel (0) target = $region28
          $region27: #{protein_segmenter2_forward.11} parent=23 // pred_region
            // Predicated region
            $region29: #{protein_segmenter2_forward.11} parent=27 // pred_check
              _
            $region30: #{protein_segmenter2_forward.11} parent=27 // pred_check_branch
              %214 = sbr.rel (0) target = $region32
            $region31: #{protein_segmenter2_forward.11} parent=27 // pred_region
              // Predicated region
              $region44: #{protein_segmenter2_forward.11} parent=31 // pred_check
                _
              $region45: #{protein_segmenter2_forward.11} parent=31 // pred_check_branch
                %292 = sbr.rel (0) target = $region47
              $region46: #{protein_segmenter2_forward.11} parent=31 // pred_region
                loop: start=0, step=1, limit=1
                $region48: #{protein_segmenter2_forward.11} parent=46 // loop_pre_header
                  _
                $region49: #{protein_segmenter2_forward.11} parent=46 // loop_header
                  %s294 = sphi 0, %s298
                  %p295 = scmp.ge.s32.totalorder %s294, 1
                  %s299 = sphi %s210, %s210
                  %s300 = sphi %s204, %s204
                $region50: #{protein_segmenter2_forward.11} parent=46 // loop_header_branch
                  %297 = sbr.rel (%p295) target = $region54
                $region51: #{protein_segmenter2_forward.11} parent=46 // loop_body
                  %v301 = vld [vmem:[%s299] sm:$0xff]
                  %302 = vst [vmem:[%s300] sm:$0xff] %v301
                  %v303 = vld [vmem:[%s299 + $0x10] sm:$0xff]
                  %304 = vst [vmem:[%s300 + $0x8] sm:$0xff] %v303
                  %v305 = vld [vmem:[%s299 + $0x20] sm:$0xff]
                  %306 = vst [vmem:[%s300 + $0x10] sm:$0xff] %v305
                  %v307 = vld [vmem:[%s299 + $0x30] sm:$0xff]
                  %308 = vst [vmem:[%s300 + $0x18] sm:$0xff] %v307
                  %v309 = vld [vmem:[%s299 + $0x40] sm:$0xff]
                  %310 = vst [vmem:[%s300 + $0x20] sm:$0xff] %v309
                  %v311 = vld [vmem:[%s299 + $0x50] sm:$0xff]
                  %312 = vst [vmem:[%s300 + $0x28] sm:$0xff] %v311
                  %v313 = vld [vmem:[%s299 + $0x60] sm:$0xff]
                  %314 = vst [vmem:[%s300 + $0x30] sm:$0xff] %v313
                  %v315 = vld [vmem:[%s299 + $0x70] sm:$0xff]
                  %316 = vst [vmem:[%s300 + $0x38] sm:$0xff] %v315
                  %v317 = vld [vmem:[%s299 + $0x80] sm:$0xff]
                  %318 = vst [vmem:[%s300 + $0x40] sm:$0xff] %v317
                  %v319 = vld [vmem:[%s299 + $0x90] sm:$0xff]
                  %320 = vst [vmem:[%s300 + $0x48] sm:$0xff] %v319
                  %v321 = vld [vmem:[%s299 + $0xa0] sm:$0xff]
                  %322 = vst [vmem:[%s300 + $0x50] sm:$0xff] %v321
                  %v323 = vld [vmem:[%s299 + $0xb0] sm:$0xff]
                  %324 = vst [vmem:[%s300 + $0x58] sm:$0xff] %v323
                  %v325 = vld [vmem:[%s299 + $0xc0] sm:$0xff]
                  %326 = vst [vmem:[%s300 + $0x60] sm:$0xff] %v325
                  %v327 = vld [vmem:[%s299 + $0xd0] sm:$0xff]
                  %328 = vst [vmem:[%s300 + $0x68] sm:$0xff] %v327
                  %v329 = vld [vmem:[%s299 + $0xe0] sm:$0xff]
                  %330 = vst [vmem:[%s300 + $0x70] sm:$0xff] %v329
                  %v331 = vld [vmem:[%s299 + $0xf0] sm:$0xff]
                  %332 = vst [vmem:[%s300 + $0x78] sm:$0xff] %v331
                  %v333 = vld [vmem:[%s299 + $0x100] sm:$0xff]
                  %334 = vst [vmem:[%s300 + $0x80] sm:$0xff] %v333
                  %v335 = vld [vmem:[%s299 + $0x110] sm:$0xff]
                  %336 = vst [vmem:[%s300 + $0x88] sm:$0xff] %v335
                  %v337 = vld [vmem:[%s299 + $0x120] sm:$0xff]
                  %338 = vst [vmem:[%s300 + $0x90] sm:$0xff] %v337
                  %v339 = vld [vmem:[%s299 + $0x130] sm:$0xff]
                  %340 = vst [vmem:[%s300 + $0x98] sm:$0xff] %v339
                  %v341 = vld [vmem:[%s299 + $0x140] sm:$0xff]
                  %342 = vst [vmem:[%s300 + $0xa0] sm:$0xff] %v341
                  %v343 = vld [vmem:[%s299 + $0x150] sm:$0xff]
                  %344 = vst [vmem:[%s300 + $0xa8] sm:$0xff] %v343
                  %v345 = vld [vmem:[%s299 + $0x160] sm:$0xff]
                  %346 = vst [vmem:[%s300 + $0xb0] sm:$0xff] %v345
                  %v347 = vld [vmem:[%s299 + $0x170] sm:$0xff]
                  %348 = vst [vmem:[%s300 + $0xb8] sm:$0xff] %v347
                  %v349 = vld [vmem:[%s299 + $0x180] sm:$0xff]
                  %350 = vst [vmem:[%s300 + $0xc0] sm:$0xff] %v349
                  %v351 = vld [vmem:[%s299 + $0x190] sm:$0xff]
                  %352 = vst [vmem:[%s300 + $0xc8] sm:$0xff] %v351
                  %v353 = vld [vmem:[%s299 + $0x1a0] sm:$0xff]
                  %354 = vst [vmem:[%s300 + $0xd0] sm:$0xff] %v353
                  %v355 = vld [vmem:[%s299 + $0x1b0] sm:$0xff]
                  %356 = vst [vmem:[%s300 + $0xd8] sm:$0xff] %v355
                  %v357 = vld [vmem:[%s299 + $0x1c0] sm:$0xff]
                  %358 = vst [vmem:[%s300 + $0xe0] sm:$0xff] %v357
                  %v359 = vld [vmem:[%s299 + $0x1d0] sm:$0xff]
                  %360 = vst [vmem:[%s300 + $0xe8] sm:$0xff] %v359
                  %v361 = vld [vmem:[%s299 + $0x1e0] sm:$0xff]
                  %362 = vst [vmem:[%s300 + $0xf0] sm:$0xff] %v361
                  %v363 = vld [vmem:[%s299 + $0x1f0] sm:$0xff]
                  %364 = vst [vmem:[%s300 + $0xf8] sm:$0xff] %v363
                $region52: #{protein_segmenter2_forward.11} parent=46 // loop_footer
                  %s298 = sadd.s32 1, %s294
                $region53: #{protein_segmenter2_forward.11} parent=46 // loop_footer_branch
                  %293 = sbr.rel target = $region49
                $region54: #{protein_segmenter2_forward.11} parent=46 // loop_exit
                  _
              $region47: #{protein_segmenter2_forward.11} parent=31 // pred_fallthru
                _
              // Predicated region
              $region55: #{protein_segmenter2_forward.11} parent=31 // pred_check
                _
              $region56: #{protein_segmenter2_forward.11} parent=31 // pred_check_branch
                %366 = sbr.rel target = $region58
              $region57: #{protein_segmenter2_forward.11} parent=31 // pred_region
                _
              $region58: #{protein_segmenter2_forward.11} parent=31 // pred_fallthru
                _
            $region32: #{protein_segmenter2_forward.11} parent=27 // pred_fallthru
              _
            // Predicated region
            $region33: #{protein_segmenter2_forward.11} parent=27 // pred_check
              _
            $region34: #{protein_segmenter2_forward.11} parent=27 // pred_check_branch
              %216 = sbr.rel target = $region36
            $region35: #{protein_segmenter2_forward.11} parent=27 // pred_region
              %s218 = ssub.s32 256, 1
              loop: start=0, step=1, limit=1
              $region37: #{protein_segmenter2_forward.11} parent=35 // loop_pre_header
                _
              $region38: #{protein_segmenter2_forward.11} parent=35 // loop_header
                %s220 = sphi 0, %s224
                %p221 = scmp.ge.s32.totalorder %s220, 1
                %s225 = sphi %s210, %s210
                %s226 = sphi %s204, %s204
              $region39: #{protein_segmenter2_forward.11} parent=35 // loop_header_branch
                %223 = sbr.rel (%p221) target = $region43
              $region40: #{protein_segmenter2_forward.11} parent=35 // loop_body
                %v227 = vld [vmem:[%s225] sm:%s218]
                %228 = vst [vmem:[%s226] sm:%s218] %v227
                %v229 = vld [vmem:[%s225 + $0x10] sm:%s218]
                %230 = vst [vmem:[%s226 + $0x8] sm:%s218] %v229
                %v231 = vld [vmem:[%s225 + $0x20] sm:%s218]
                %232 = vst [vmem:[%s226 + $0x10] sm:%s218] %v231
                %v233 = vld [vmem:[%s225 + $0x30] sm:%s218]
                %234 = vst [vmem:[%s226 + $0x18] sm:%s218] %v233
                %v235 = vld [vmem:[%s225 + $0x40] sm:%s218]
                %236 = vst [vmem:[%s226 + $0x20] sm:%s218] %v235
                %v237 = vld [vmem:[%s225 + $0x50] sm:%s218]
                %238 = vst [vmem:[%s226 + $0x28] sm:%s218] %v237
                %v239 = vld [vmem:[%s225 + $0x60] sm:%s218]
                %240 = vst [vmem:[%s226 + $0x30] sm:%s218] %v239
                %v241 = vld [vmem:[%s225 + $0x70] sm:%s218]
                %242 = vst [vmem:[%s226 + $0x38] sm:%s218] %v241
                %v243 = vld [vmem:[%s225 + $0x80] sm:%s218]
                %244 = vst [vmem:[%s226 + $0x40] sm:%s218] %v243
                %v245 = vld [vmem:[%s225 + $0x90] sm:%s218]
                %246 = vst [vmem:[%s226 + $0x48] sm:%s218] %v245
                %v247 = vld [vmem:[%s225 + $0xa0] sm:%s218]
                %248 = vst [vmem:[%s226 + $0x50] sm:%s218] %v247
                %v249 = vld [vmem:[%s225 + $0xb0] sm:%s218]
                %250 = vst [vmem:[%s226 + $0x58] sm:%s218] %v249
                %v251 = vld [vmem:[%s225 + $0xc0] sm:%s218]
                %252 = vst [vmem:[%s226 + $0x60] sm:%s218] %v251
                %v253 = vld [vmem:[%s225 + $0xd0] sm:%s218]
                %254 = vst [vmem:[%s226 + $0x68] sm:%s218] %v253
                %v255 = vld [vmem:[%s225 + $0xe0] sm:%s218]
                %256 = vst [vmem:[%s226 + $0x70] sm:%s218] %v255
                %v257 = vld [vmem:[%s225 + $0xf0] sm:%s218]
                %258 = vst [vmem:[%s226 + $0x78] sm:%s218] %v257
                %v259 = vld [vmem:[%s225 + $0x100] sm:%s218]
                %260 = vst [vmem:[%s226 + $0x80] sm:%s218] %v259
                %v261 = vld [vmem:[%s225 + $0x110] sm:%s218]
                %262 = vst [vmem:[%s226 + $0x88] sm:%s218] %v261
                %v263 = vld [vmem:[%s225 + $0x120] sm:%s218]
                %264 = vst [vmem:[%s226 + $0x90] sm:%s218] %v263
                %v265 = vld [vmem:[%s225 + $0x130] sm:%s218]
                %266 = vst [vmem:[%s226 + $0x98] sm:%s218] %v265
                %v267 = vld [vmem:[%s225 + $0x140] sm:%s218]
                %268 = vst [vmem:[%s226 + $0xa0] sm:%s218] %v267
                %v269 = vld [vmem:[%s225 + $0x150] sm:%s218]
                %270 = vst [vmem:[%s226 + $0xa8] sm:%s218] %v269
                %v271 = vld [vmem:[%s225 + $0x160] sm:%s218]
                %272 = vst [vmem:[%s226 + $0xb0] sm:%s218] %v271
                %v273 = vld [vmem:[%s225 + $0x170] sm:%s218]
                %274 = vst [vmem:[%s226 + $0xb8] sm:%s218] %v273
                %v275 = vld [vmem:[%s225 + $0x180] sm:%s218]
                %276 = vst [vmem:[%s226 + $0xc0] sm:%s218] %v275
                %v277 = vld [vmem:[%s225 + $0x190] sm:%s218]
                %278 = vst [vmem:[%s226 + $0xc8] sm:%s218] %v277
                %v279 = vld [vmem:[%s225 + $0x1a0] sm:%s218]
                %280 = vst [vmem:[%s226 + $0xd0] sm:%s218] %v279
                %v281 = vld [vmem:[%s225 + $0x1b0] sm:%s218]
                %282 = vst [vmem:[%s226 + $0xd8] sm:%s218] %v281
                %v283 = vld [vmem:[%s225 + $0x1c0] sm:%s218]
                %284 = vst [vmem:[%s226 + $0xe0] sm:%s218] %v283
                %v285 = vld [vmem:[%s225 + $0x1d0] sm:%s218]
                %286 = vst [vmem:[%s226 + $0xe8] sm:%s218] %v285
                %v287 = vld [vmem:[%s225 + $0x1e0] sm:%s218]
                %288 = vst [vmem:[%s226 + $0xf0] sm:%s218] %v287
                %v289 = vld [vmem:[%s225 + $0x1f0] sm:%s218]
                %290 = vst [vmem:[%s226 + $0xf8] sm:%s218] %v289
              $region41: #{protein_segmenter2_forward.11} parent=35 // loop_footer
                %s224 = sadd.s32 1, %s220
              $region42: #{protein_segmenter2_forward.11} parent=35 // loop_footer_branch
                %219 = sbr.rel target = $region38
              $region43: #{protein_segmenter2_forward.11} parent=35 // loop_exit
                _
            $region36: #{protein_segmenter2_forward.11} parent=27 // pred_fallthru
              _
          $region28: #{protein_segmenter2_forward.11} parent=23 // pred_fallthru
            _
          %367 = vnop
        $region24: #{protein_segmenter2_forward.11} parent=19 // pred_fallthru
          _
        // Predicated region
        $region59: #{protein_segmenter2_forward.11} parent=19 // pred_check
          %p368 = pneg %p71
        $region60: #{protein_segmenter2_forward.11} parent=19 // pred_check_branch
          %370 = sbr.rel (%p368) target = $region62
        $region61: #{protein_segmenter2_forward.11} parent=19 // pred_region
          %s371 = smul.u32 32, %s19
          %p372 = scmp.lt.s32.totalorder %s371, 63
          %s373 = scalar_select %p372, %s371, 63
          %s374 = smul.addr %s373, 4
          %s375 = scalar_lea.vmem %s1, %s374
          %s376 = smul.u32 32, %s19
        $region62: #{protein_segmenter2_forward.11} parent=19 // pred_fallthru
          _
        // Predicated region
        $region63: #{protein_segmenter2_forward.11} parent=19 // pred_check
          %p377 = pneg %p97
        $region64: #{protein_segmenter2_forward.11} parent=19 // pred_check_branch
          %379 = sbr.rel (%p377) target = $region66
        $region65: #{protein_segmenter2_forward.11} parent=19 // pred_region
          %s380 = smul.u32 32, %s18
          %p381 = scmp.lt.s32.totalorder %s380, 63
          %s382 = scalar_select %p381, %s380, 63
          %s383 = smul.addr %s382, 4
          %s384 = scalar_lea.vmem %s2, %s383
          %s385 = smul.u32 32, %s18
        $region66: #{protein_segmenter2_forward.11} parent=19 // pred_fallthru
          _
        // Predicated region
        $region67: #{protein_segmenter2_forward.11} parent=19 // pred_check
          %p386 = pneg %p123
        $region68: #{protein_segmenter2_forward.11} parent=19 // pred_check_branch
          %388 = sbr.rel (%p386) target = $region70
        $region69: #{protein_segmenter2_forward.11} parent=19 // pred_region
          %s389 = smul.u32 32, %s18
          %p390 = scmp.lt.s32.totalorder %s389, 63
          %s391 = scalar_select %p390, %s389, 63
          %s392 = smul.addr %s391, 8
          %s393 = scalar_lea.vmem %s3, %s392
          %s394 = smul.u32 32, %s18
        $region70: #{protein_segmenter2_forward.11} parent=19 // pred_fallthru
          _
      $region20: #{protein_segmenter2_forward.11} parent=5 // pred_fallthru
        _
      %p395 = scmp.le.s32.totalorder 1, %s11
      %p396 = scmp.lt.s32.totalorder %s11, 5
      %p397 = pnand %p395, %p396
      %p398 = pneg %p397
      // Predicated region
      $region71: #{protein_segmenter2_forward.11} parent=5 // pred_check
        _
      $region72: #{protein_segmenter2_forward.11} parent=5 // pred_check_branch
        %400 = sbr.rel (%p397) target = $region74
      $region73: #{protein_segmenter2_forward.11} parent=5 // pred_region
        %s401 = ssub.s32 %s11, 1
        %s402 = sand.u32 %s38, 1
        %s403 = sand.u32 %s38, 1
        %s404 = smul.addr %s403, 256
        %s405 = scalar_lea.vmem [#allocation3], %s404
        // Predicated region
        $region75: #{protein_segmenter2_forward.11} parent=73 // pred_check
          %p406 = pneg %p51
        $region76: #{protein_segmenter2_forward.11} parent=73 // pred_check_branch
          %408 = sbr.rel (%p406) target = $region78
        $region77: #{protein_segmenter2_forward.11} parent=73 // pred_region
          _
        $region78: #{protein_segmenter2_forward.11} parent=73 // pred_fallthru
          _
        %s409 = sand.u32 %s38, 1
        %s410 = sand.u32 %s38, 1
        %s411 = smul.addr %s410, 256
        %s412 = scalar_lea.vmem [#allocation3], %s411
        %p413 = pneg %p51
        %p414 = pneg %p48
        %s415 = smul.u32 32, %s21
        %p416 = scmp.lt.s32.totalorder %s415, 63
        %s417 = scalar_select %p416, %s415, 63
        %s418 = smul.addr %s417, 4
        %s419 = scalar_lea.vmem %s1, %s418
        %p420 = pneg %p77
        %p421 = pneg %p74
        %s422 = smul.u32 32, %s20
        %p423 = scmp.lt.s32.totalorder %s422, 63
        %s424 = scalar_select %p423, %s422, 63
        %s425 = smul.addr %s424, 4
        %s426 = scalar_lea.vmem %s2, %s425
        %p427 = pneg %p103
        %p428 = pneg %p100
        %s429 = smul.u32 32, %s20
        %p430 = scmp.lt.s32.totalorder %s429, 63
        %s431 = scalar_select %p430, %s429, 63
        %s432 = smul.addr %s431, 8
        %s433 = scalar_lea.vmem %s3, %s432
        %p434 = pneg %p129
        %p435 = pneg %p126
        %p436 = pneg %p150
        %p437 = pneg %p147
        %p438 = pneg %p176
        %p439 = pneg %p173
        %s440 = smul.u32 32, %s20
        %p441 = scmp.lt.s32.totalorder %s440, 63
        %s442 = scalar_select %p441, %s440, 63
        %s443 = smul.addr %s442, 8
        %s444 = scalar_lea.vmem %s5, %s443
        %s445 = smul.u32 32, %s20
        %s446 = smul.u32 2, %s21
        %s447 = smul.u32 32, %s21
        %p448 = scmp.lt.s32.totalorder %s447, 63
        %s449 = scalar_select %p448, %s447, 63
        %s450 = smul.addr %s449, 4
        %s451 = scalar_lea.vmem %s1, %s450
        %s452 = smul.u32 32, %s21
        %s453 = smul.u32 32, %s20
        %p454 = scmp.lt.s32.totalorder %s453, 63
        %s455 = scalar_select %p454, %s453, 63
        %s456 = smul.addr %s455, 4
        %s457 = scalar_lea.vmem %s2, %s456
        %s458 = smul.u32 32, %s20
        %s459 = smul.u32 32, %s20
        %p460 = scmp.lt.s32.totalorder %s459, 63
        %s461 = scalar_select %p460, %s459, 63
        %s462 = smul.addr %s461, 8
        %s463 = scalar_lea.vmem %s3, %s462
        %s464 = smul.u32 32, %s20
        %s465 = smul.u32 32, %s20
        %p466 = scmp.lt.s32.totalorder %s465, 63
        %s467 = scalar_select %p466, %s465, 63
        %s468 = smul.addr %s467, 8
        %s469 = scalar_lea.vmem %s5, %s468
        %s470 = smul.u32 32, %s20
        %p471 = scmp.eq.s32.totalorder %s21, 0
        // Predicated region
        $region79: #{protein_segmenter2_forward.11} parent=73 // pred_check
          %p472 = pneg %p471
        $region80: #{protein_segmenter2_forward.11} parent=73 // pred_check_branch
          %474 = sbr.rel (%p472) target = $region82
        $region81: #{protein_segmenter2_forward.11} parent=73 // pred_region
          %475 = vst [vmem:[#allocation2] sm:$0xff] 0.0
          %476 = vst [vmem:[#allocation2 + $0x8] sm:$0xff] 0.0
          %477 = vst [vmem:[#allocation2 + $0x10] sm:$0xff] 0.0
          %478 = vst [vmem:[#allocation2 + $0x18] sm:$0xff] 0.0
          %479 = vst [vmem:[#allocation2 + $0x20] sm:$0xff] 0.0
          %480 = vst [vmem:[#allocation2 + $0x28] sm:$0xff] 0.0
          %481 = vst [vmem:[#allocation2 + $0x30] sm:$0xff] 0.0
          %482 = vst [vmem:[#allocation2 + $0x38] sm:$0xff] 0.0
          %483 = vst [vmem:[#allocation2 + $0x40] sm:$0xff] 0.0
          %484 = vst [vmem:[#allocation2 + $0x48] sm:$0xff] 0.0
          %485 = vst [vmem:[#allocation2 + $0x50] sm:$0xff] 0.0
          %486 = vst [vmem:[#allocation2 + $0x58] sm:$0xff] 0.0
          %487 = vst [vmem:[#allocation2 + $0x60] sm:$0xff] 0.0
          %488 = vst [vmem:[#allocation2 + $0x68] sm:$0xff] 0.0
          %489 = vst [vmem:[#allocation2 + $0x70] sm:$0xff] 0.0
          %490 = vst [vmem:[#allocation2 + $0x78] sm:$0xff] 0.0
          %491 = vst [vmem:[#allocation2 + $0x80] sm:$0xff] 0.0
          %492 = vst [vmem:[#allocation2 + $0x88] sm:$0xff] 0.0
          %493 = vst [vmem:[#allocation2 + $0x90] sm:$0xff] 0.0
          %494 = vst [vmem:[#allocation2 + $0x98] sm:$0xff] 0.0
          %495 = vst [vmem:[#allocation2 + $0xa0] sm:$0xff] 0.0
          %496 = vst [vmem:[#allocation2 + $0xa8] sm:$0xff] 0.0
          %497 = vst [vmem:[#allocation2 + $0xb0] sm:$0xff] 0.0
          %498 = vst [vmem:[#allocation2 + $0xb8] sm:$0xff] 0.0
          %499 = vst [vmem:[#allocation2 + $0xc0] sm:$0xff] 0.0
          %500 = vst [vmem:[#allocation2 + $0xc8] sm:$0xff] 0.0
          %501 = vst [vmem:[#allocation2 + $0xd0] sm:$0xff] 0.0
          %502 = vst [vmem:[#allocation2 + $0xd8] sm:$0xff] 0.0
          %503 = vst [vmem:[#allocation2 + $0xe0] sm:$0xff] 0.0
          %504 = vst [vmem:[#allocation2 + $0xe8] sm:$0xff] 0.0
          %505 = vst [vmem:[#allocation2 + $0xf0] sm:$0xff] 0.0
          %506 = vst [vmem:[#allocation2 + $0xf8] sm:$0xff] 0.0
        $region82: #{protein_segmenter2_forward.11} parent=73 // pred_fallthru
          _
        %v507 = vld [vmem:[#allocation2] sm:$0xff]
        %v508 = vld [vmem:[#allocation2 + $0x8] sm:$0xff]
        %v509 = vld [vmem:[#allocation2 + $0x10] sm:$0xff]
        %v510 = vld [vmem:[#allocation2 + $0x18] sm:$0xff]
        %v511 = vld [vmem:[#allocation2 + $0x20] sm:$0xff]
        %v512 = vld [vmem:[#allocation2 + $0x28] sm:$0xff]
        %v513 = vld [vmem:[#allocation2 + $0x30] sm:$0xff]
        %v514 = vld [vmem:[#allocation2 + $0x38] sm:$0xff]
        %v515 = vld [vmem:[#allocation2 + $0x40] sm:$0xff]
        %v516 = vld [vmem:[#allocation2 + $0x48] sm:$0xff]
        %v517 = vld [vmem:[#allocation2 + $0x50] sm:$0xff]
        %v518 = vld [vmem:[#allocation2 + $0x58] sm:$0xff]
        %v519 = vld [vmem:[#allocation2 + $0x60] sm:$0xff]
        %v520 = vld [vmem:[#allocation2 + $0x68] sm:$0xff]
        %v521 = vld [vmem:[#allocation2 + $0x70] sm:$0xff]
        %v522 = vld [vmem:[#allocation2 + $0x78] sm:$0xff]
        %v523 = vld [vmem:[#allocation2 + $0x80] sm:$0xff]
        %v524 = vld [vmem:[#allocation2 + $0x88] sm:$0xff]
        %v525 = vld [vmem:[#allocation2 + $0x90] sm:$0xff]
        %v526 = vld [vmem:[#allocation2 + $0x98] sm:$0xff]
        %v527 = vld [vmem:[#allocation2 + $0xa0] sm:$0xff]
        %v528 = vld [vmem:[#allocation2 + $0xa8] sm:$0xff]
        %v529 = vld [vmem:[#allocation2 + $0xb0] sm:$0xff]
        %v530 = vld [vmem:[#allocation2 + $0xb8] sm:$0xff]
        %v531 = vld [vmem:[#allocation2 + $0xc0] sm:$0xff]
        %v532 = vld [vmem:[#allocation2 + $0xc8] sm:$0xff]
        %v533 = vld [vmem:[#allocation2 + $0xd0] sm:$0xff]
        %v534 = vld [vmem:[#allocation2 + $0xd8] sm:$0xff]
        %v535 = vld [vmem:[#allocation2 + $0xe0] sm:$0xff]
        %v536 = vld [vmem:[#allocation2 + $0xe8] sm:$0xff]
        %v537 = vld [vmem:[#allocation2 + $0xf0] sm:$0xff]
        %v538 = vld [vmem:[#allocation2 + $0xf8] sm:$0xff]
        %v539 = vld [vmem:[%s405] sm:$0xff]
        %v540 = vld [vmem:[%s405 + $0x8] sm:$0xff]
        %v541 = vld [vmem:[%s405 + $0x10] sm:$0xff]
        %v542 = vld [vmem:[%s405 + $0x18] sm:$0xff]
        %v543 = vld [vmem:[%s405 + $0x20] sm:$0xff]
        %v544 = vld [vmem:[%s405 + $0x28] sm:$0xff]
        %v545 = vld [vmem:[%s405 + $0x30] sm:$0xff]
        %v546 = vld [vmem:[%s405 + $0x38] sm:$0xff]
        %v547 = vld [vmem:[%s405 + $0x40] sm:$0xff]
        %v548 = vld [vmem:[%s405 + $0x48] sm:$0xff]
        %v549 = vld [vmem:[%s405 + $0x50] sm:$0xff]
        %v550 = vld [vmem:[%s405 + $0x58] sm:$0xff]
        %v551 = vld [vmem:[%s405 + $0x60] sm:$0xff]
        %v552 = vld [vmem:[%s405 + $0x68] sm:$0xff]
        %v553 = vld [vmem:[%s405 + $0x70] sm:$0xff]
        %v554 = vld [vmem:[%s405 + $0x78] sm:$0xff]
        %v555 = vld [vmem:[%s405 + $0x80] sm:$0xff]
        %v556 = vld [vmem:[%s405 + $0x88] sm:$0xff]
        %v557 = vld [vmem:[%s405 + $0x90] sm:$0xff]
        %v558 = vld [vmem:[%s405 + $0x98] sm:$0xff]
        %v559 = vld [vmem:[%s405 + $0xa0] sm:$0xff]
        %v560 = vld [vmem:[%s405 + $0xa8] sm:$0xff]
        %v561 = vld [vmem:[%s405 + $0xb0] sm:$0xff]
        %v562 = vld [vmem:[%s405 + $0xb8] sm:$0xff]
        %v563 = vld [vmem:[%s405 + $0xc0] sm:$0xff]
        %v564 = vld [vmem:[%s405 + $0xc8] sm:$0xff]
        %v565 = vld [vmem:[%s405 + $0xd0] sm:$0xff]
        %v566 = vld [vmem:[%s405 + $0xd8] sm:$0xff]
        %v567 = vld [vmem:[%s405 + $0xe0] sm:$0xff]
        %v568 = vld [vmem:[%s405 + $0xe8] sm:$0xff]
        %v569 = vld [vmem:[%s405 + $0xf0] sm:$0xff]
        %v570 = vld [vmem:[%s405 + $0xf8] sm:$0xff]
        %v571 = vld [vmem:[%s451] sm:$0xf]
        %v572 = vld [vmem:[%s451 + $0x4] sm:$0xf]
        %v573 = vld [vmem:[%s451 + $0x8] sm:$0xf]
        %v574 = vld [vmem:[%s451 + $0xc] sm:$0xf]
        %v575 = vld [vmem:[%s451 + $0x10] sm:$0xf]
        %v576 = vld [vmem:[%s451 + $0x14] sm:$0xf]
        %v577 = vld [vmem:[%s451 + $0x18] sm:$0xf]
        %v578 = vld [vmem:[%s451 + $0x1c] sm:$0xf]
        %v579 = vld [vmem:[%s451 + $0x20] sm:$0xf]
        %v580 = vld [vmem:[%s451 + $0x24] sm:$0xf]
        %v581 = vld [vmem:[%s451 + $0x28] sm:$0xf]
        %v582 = vld [vmem:[%s451 + $0x2c] sm:$0xf]
        %v583 = vld [vmem:[%s451 + $0x30] sm:$0xf]
        %v584 = vld [vmem:[%s451 + $0x34] sm:$0xf]
        %v585 = vld [vmem:[%s451 + $0x38] sm:$0xf]
        %v586 = vld [vmem:[%s451 + $0x3c] sm:$0xf]
        %v587 = vld [vmem:[%s451 + $0x40] sm:$0xf]
        %v588 = vld [vmem:[%s451 + $0x44] sm:$0xf]
        %v589 = vld [vmem:[%s451 + $0x48] sm:$0xf]
        %v590 = vld [vmem:[%s451 + $0x4c] sm:$0xf]
        %v591 = vld [vmem:[%s451 + $0x50] sm:$0xf]
        %v592 = vld [vmem:[%s451 + $0x54] sm:$0xf]
        %v593 = vld [vmem:[%s451 + $0x58] sm:$0xf]
        %v594 = vld [vmem:[%s451 + $0x5c] sm:$0xf]
        %v595 = vld [vmem:[%s451 + $0x60] sm:$0xf]
        %v596 = vld [vmem:[%s451 + $0x64] sm:$0xf]
        %v597 = vld [vmem:[%s451 + $0x68] sm:$0xf]
        %v598 = vld [vmem:[%s451 + $0x6c] sm:$0xf]
        %v599 = vld [vmem:[%s451 + $0x70] sm:$0xf]
        %v600 = vld [vmem:[%s451 + $0x74] sm:$0xf]
        %v601 = vld [vmem:[%s451 + $0x78] sm:$0xf]
        %v602 = vld [vmem:[%s451 + $0x7c] sm:$0xf]
        %v635 = vunpack.c.l.b16 %v539
        %v636 = vunpack.c.h.b16 %v539
        %v637 = vunpack.c.l.b16 %v540
        %v638 = vunpack.c.h.b16 %v540
        %v639 = vunpack.c.l.b16 %v541
        %v640 = vunpack.c.h.b16 %v541
        %v641 = vunpack.c.l.b16 %v542
        %v642 = vunpack.c.h.b16 %v542
        %v643 = vunpack.c.l.b16 %v543
        %v644 = vunpack.c.h.b16 %v543
        %v645 = vunpack.c.l.b16 %v544
        %v646 = vunpack.c.h.b16 %v544
        %v647 = vunpack.c.l.b16 %v545
        %v648 = vunpack.c.h.b16 %v545
        %v649 = vunpack.c.l.b16 %v546
        %v650 = vunpack.c.h.b16 %v546
        %v651 = vunpack.c.l.b16 %v547
        %v652 = vunpack.c.h.b16 %v547
        %v653 = vunpack.c.l.b16 %v548
        %v654 = vunpack.c.h.b16 %v548
        %v655 = vunpack.c.l.b16 %v549
        %v656 = vunpack.c.h.b16 %v549
        %v657 = vunpack.c.l.b16 %v550
        %v658 = vunpack.c.h.b16 %v550
        %v659 = vunpack.c.l.b16 %v551
        %v660 = vunpack.c.h.b16 %v551
        %v661 = vunpack.c.l.b16 %v552
        %v662 = vunpack.c.h.b16 %v552
        %v663 = vunpack.c.l.b16 %v553
        %v664 = vunpack.c.h.b16 %v553
        %v665 = vunpack.c.l.b16 %v554
        %v666 = vunpack.c.h.b16 %v554
        %v667 = vunpack.c.l.b16 %v555
        %v668 = vunpack.c.h.b16 %v555
        %v669 = vunpack.c.l.b16 %v556
        %v670 = vunpack.c.h.b16 %v556
        %v671 = vunpack.c.l.b16 %v557
        %v672 = vunpack.c.h.b16 %v557
        %v673 = vunpack.c.l.b16 %v558
        %v674 = vunpack.c.h.b16 %v558
        %v675 = vunpack.c.l.b16 %v559
        %v676 = vunpack.c.h.b16 %v559
        %v677 = vunpack.c.l.b16 %v560
        %v678 = vunpack.c.h.b16 %v560
        %v679 = vunpack.c.l.b16 %v561
        %v680 = vunpack.c.h.b16 %v561
        %v681 = vunpack.c.l.b16 %v562
        %v682 = vunpack.c.h.b16 %v562
        %v683 = vunpack.c.l.b16 %v563
        %v684 = vunpack.c.h.b16 %v563
        %v685 = vunpack.c.l.b16 %v564
        %v686 = vunpack.c.h.b16 %v564
        %v687 = vunpack.c.l.b16 %v565
        %v688 = vunpack.c.h.b16 %v565
        %v689 = vunpack.c.l.b16 %v566
        %v690 = vunpack.c.h.b16 %v566
        %v691 = vunpack.c.l.b16 %v567
        %v692 = vunpack.c.h.b16 %v567
        %v693 = vunpack.c.l.b16 %v568
        %v694 = vunpack.c.h.b16 %v568
        %v695 = vunpack.c.l.b16 %v569
        %v696 = vunpack.c.h.b16 %v569
        %v697 = vunpack.c.l.b16 %v570
        %v698 = vunpack.c.h.b16 %v570
        %v699 = vpack.c.b16 %v637, %v635
        %v700 = vpack.c.b16 %v638, %v636
        %v701 = vpack.c.b16 %v641, %v639
        %v702 = vpack.c.b16 %v642, %v640
        %v703 = vpack.c.b16 %v645, %v643
        %v704 = vpack.c.b16 %v646, %v644
        %v705 = vpack.c.b16 %v649, %v647
        %v706 = vpack.c.b16 %v650, %v648
        %v707 = vpack.c.b16 %v653, %v651
        %v708 = vpack.c.b16 %v654, %v652
        %v709 = vpack.c.b16 %v657, %v655
        %v710 = vpack.c.b16 %v658, %v656
        %v711 = vpack.c.b16 %v661, %v659
        %v712 = vpack.c.b16 %v662, %v660
        %v713 = vpack.c.b16 %v665, %v663
        %v714 = vpack.c.b16 %v666, %v664
        %v715 = vpack.c.b16 %v669, %v667
        %v716 = vpack.c.b16 %v670, %v668
        %v717 = vpack.c.b16 %v673, %v671
        %v718 = vpack.c.b16 %v674, %v672
        %v719 = vpack.c.b16 %v677, %v675
        %v720 = vpack.c.b16 %v678, %v676
        %v721 = vpack.c.b16 %v681, %v679
        %v722 = vpack.c.b16 %v682, %v680
        %v723 = vpack.c.b16 %v685, %v683
        %v724 = vpack.c.b16 %v686, %v684
        %v725 = vpack.c.b16 %v689, %v687
        %v726 = vpack.c.b16 %v690, %v688
        %v727 = vpack.c.b16 %v693, %v691
        %v728 = vpack.c.b16 %v694, %v692
        %v729 = vpack.c.b16 %v697, %v695
        %v730 = vpack.c.b16 %v698, %v696
        %v795 = vunpack.c.l.b16 %v571
        %v796 = vunpack.c.l.b16 %v572
        %v797 = vunpack.c.l.b16 %v573
        %v798 = vunpack.c.l.b16 %v574
        %v799 = vunpack.c.l.b16 %v575
        %v800 = vunpack.c.l.b16 %v576
        %v801 = vunpack.c.l.b16 %v577
        %v802 = vunpack.c.l.b16 %v578
        %v803 = vunpack.c.l.b16 %v579
        %v804 = vunpack.c.l.b16 %v580
        %v805 = vunpack.c.l.b16 %v581
        %v806 = vunpack.c.l.b16 %v582
        %v807 = vunpack.c.l.b16 %v583
        %v808 = vunpack.c.l.b16 %v584
        %v809 = vunpack.c.l.b16 %v585
        %v810 = vunpack.c.l.b16 %v586
        %v811 = vunpack.c.l.b16 %v587
        %v812 = vunpack.c.l.b16 %v588
        %v813 = vunpack.c.l.b16 %v589
        %v814 = vunpack.c.l.b16 %v590
        %v815 = vunpack.c.l.b16 %v591
        %v816 = vunpack.c.l.b16 %v592
        %v817 = vunpack.c.l.b16 %v593
        %v818 = vunpack.c.l.b16 %v594
        %v819 = vunpack.c.l.b16 %v595
        %v820 = vunpack.c.l.b16 %v596
        %v821 = vunpack.c.l.b16 %v597
        %v822 = vunpack.c.l.b16 %v598
        %v823 = vunpack.c.l.b16 %v599
        %v824 = vunpack.c.l.b16 %v600
        %v825 = vunpack.c.l.b16 %v601
        %v826 = vunpack.c.l.b16 %v602
        %v827 = vpack.c.b16 %v796, %v795
        %v828 = vpack.c.b16 %v798, %v797
        %v829 = vpack.c.b16 %v800, %v799
        %v830 = vpack.c.b16 %v802, %v801
        %v831 = vpack.c.b16 %v804, %v803
        %v832 = vpack.c.b16 %v806, %v805
        %v833 = vpack.c.b16 %v808, %v807
        %v834 = vpack.c.b16 %v810, %v809
        %v835 = vpack.c.b16 %v812, %v811
        %v836 = vpack.c.b16 %v814, %v813
        %v837 = vpack.c.b16 %v816, %v815
        %v838 = vpack.c.b16 %v818, %v817
        %v839 = vpack.c.b16 %v820, %v819
        %v840 = vpack.c.b16 %v822, %v821
        %v841 = vpack.c.b16 %v824, %v823
        %v842 = vpack.c.b16 %v826, %v825
        %859 = vmatpush.bf16.msra.mxu0 %v834
        %860 = vmatpush.bf16.msra.mxu0 %v833
        %861 = vmatpush.bf16.msra.mxu0 %v832
        %862 = vmatpush.bf16.msra.mxu0 %v831
        %863 = vmatpush.bf16.msra.mxu0 %v830
        %864 = vmatpush.bf16.msra.mxu0 %v829
        %865 = vmatpush.bf16.msra.mxu0 %v828
        %866 = vmatpush.bf16.msra.mxu0 %v827
        %867 = vmatmul.bf16.gmra.mxu0 %v699
        %v868 = vpop.f32.mrf.mxu0
        %v869 = vadd.f32 0.0, %v868
        %v870 = vpop.f32.mrf.mxu0
        %v871 = vadd.f32 0.0, %v870
        %872 = vmatmul.bf16.gmra.mxu0 %v701
        %v873 = vpop.f32.mrf.mxu0
        %v874 = vadd.f32 0.0, %v873
        %v875 = vpop.f32.mrf.mxu0
        %v876 = vadd.f32 0.0, %v875
        %877 = vmatmul.bf16.gmra.mxu0 %v703
        %v878 = vpop.f32.mrf.mxu0
        %v879 = vadd.f32 0.0, %v878
        %v880 = vpop.f32.mrf.mxu0
        %v881 = vadd.f32 0.0, %v880
        %882 = vmatmul.bf16.gmra.mxu0 %v705
        %v883 = vpop.f32.mrf.mxu0
        %v884 = vadd.f32 0.0, %v883
        %v885 = vpop.f32.mrf.mxu0
        %v886 = vadd.f32 0.0, %v885
        %887 = vmatmul.bf16.gmra.mxu0 %v707
        %v888 = vpop.f32.mrf.mxu0
        %v889 = vadd.f32 0.0, %v888
        %v890 = vpop.f32.mrf.mxu0
        %v891 = vadd.f32 0.0, %v890
        %892 = vmatmul.bf16.gmra.mxu0 %v709
        %v893 = vpop.f32.mrf.mxu0
        %v894 = vadd.f32 0.0, %v893
        %v895 = vpop.f32.mrf.mxu0
        %v896 = vadd.f32 0.0, %v895
        %897 = vmatmul.bf16.gmra.mxu0 %v711
        %v898 = vpop.f32.mrf.mxu0
        %v899 = vadd.f32 0.0, %v898
        %v900 = vpop.f32.mrf.mxu0
        %v901 = vadd.f32 0.0, %v900
        %902 = vmatmul.bf16.gmra.mxu0 %v713
        %v903 = vpop.f32.mrf.mxu0
        %v904 = vadd.f32 0.0, %v903
        %v905 = vpop.f32.mrf.mxu0
        %v906 = vadd.f32 0.0, %v905
        %907 = vmatmul.bf16.gmra.mxu0 %v715
        %v908 = vpop.f32.mrf.mxu0
        %v909 = vadd.f32 0.0, %v908
        %v910 = vpop.f32.mrf.mxu0
        %v911 = vadd.f32 0.0, %v910
        %912 = vmatmul.bf16.gmra.mxu0 %v717
        %v913 = vpop.f32.mrf.mxu0
        %v914 = vadd.f32 0.0, %v913
        %v915 = vpop.f32.mrf.mxu0
        %v916 = vadd.f32 0.0, %v915
        %917 = vmatmul.bf16.gmra.mxu0 %v719
        %v918 = vpop.f32.mrf.mxu0
        %v919 = vadd.f32 0.0, %v918
        %v920 = vpop.f32.mrf.mxu0
        %v921 = vadd.f32 0.0, %v920
        %922 = vmatmul.bf16.gmra.mxu0 %v721
        %v923 = vpop.f32.mrf.mxu0
        %v924 = vadd.f32 0.0, %v923
        %v925 = vpop.f32.mrf.mxu0
        %v926 = vadd.f32 0.0, %v925
        %927 = vmatmul.bf16.gmra.mxu0 %v723
        %v928 = vpop.f32.mrf.mxu0
        %v929 = vadd.f32 0.0, %v928
        %v930 = vpop.f32.mrf.mxu0
        %v931 = vadd.f32 0.0, %v930
        %932 = vmatmul.bf16.gmra.mxu0 %v725
        %v933 = vpop.f32.mrf.mxu0
        %v934 = vadd.f32 0.0, %v933
        %v935 = vpop.f32.mrf.mxu0
        %v936 = vadd.f32 0.0, %v935
        %937 = vmatmul.bf16.gmra.mxu0 %v727
        %v938 = vpop.f32.mrf.mxu0
        %v939 = vadd.f32 0.0, %v938
        %v940 = vpop.f32.mrf.mxu0
        %v941 = vadd.f32 0.0, %v940
        %942 = vmatmul.bf16.gmra.mxu0 %v729
        %v943 = vpop.f32.mrf.mxu0
        %v944 = vadd.f32 0.0, %v943
        %v945 = vpop.f32.mrf.mxu0
        %v946 = vadd.f32 0.0, %v945
        %947 = vdwg.mxu0
        %948 = vmatpush.bf16.msra.mxu0 %v842
        %949 = vmatpush.bf16.msra.mxu0 %v841
        %950 = vmatpush.bf16.msra.mxu0 %v840
        %951 = vmatpush.bf16.msra.mxu0 %v839
        %952 = vmatpush.bf16.msra.mxu0 %v838
        %953 = vmatpush.bf16.msra.mxu0 %v837
        %954 = vmatpush.bf16.msra.mxu0 %v836
        %955 = vmatpush.bf16.msra.mxu0 %v835
        %956 = vmatmul.bf16.gmra.mxu0 %v700
        %v957 = vpop.f32.mrf.mxu0
        %v958 = vadd.f32 %v869, %v957
        %v959 = vpop.f32.mrf.mxu0
        %v960 = vadd.f32 %v871, %v959
        %961 = vmatmul.bf16.gmra.mxu0 %v702
        %v962 = vpop.f32.mrf.mxu0
        %v963 = vadd.f32 %v874, %v962
        %v964 = vpop.f32.mrf.mxu0
        %v965 = vadd.f32 %v876, %v964
        %966 = vmatmul.bf16.gmra.mxu0 %v704
        %v967 = vpop.f32.mrf.mxu0
        %v968 = vadd.f32 %v879, %v967
        %v969 = vpop.f32.mrf.mxu0
        %v970 = vadd.f32 %v881, %v969
        %971 = vmatmul.bf16.gmra.mxu0 %v706
        %v972 = vpop.f32.mrf.mxu0
        %v973 = vadd.f32 %v884, %v972
        %v974 = vpop.f32.mrf.mxu0
        %v975 = vadd.f32 %v886, %v974
        %976 = vmatmul.bf16.gmra.mxu0 %v708
        %v977 = vpop.f32.mrf.mxu0
        %v978 = vadd.f32 %v889, %v977
        %v979 = vpop.f32.mrf.mxu0
        %v980 = vadd.f32 %v891, %v979
        %981 = vmatmul.bf16.gmra.mxu0 %v710
        %v982 = vpop.f32.mrf.mxu0
        %v983 = vadd.f32 %v894, %v982
        %v984 = vpop.f32.mrf.mxu0
        %v985 = vadd.f32 %v896, %v984
        %986 = vmatmul.bf16.gmra.mxu0 %v712
        %v987 = vpop.f32.mrf.mxu0
        %v988 = vadd.f32 %v899, %v987
        %v989 = vpop.f32.mrf.mxu0
        %v990 = vadd.f32 %v901, %v989
        %991 = vmatmul.bf16.gmra.mxu0 %v714
        %v992 = vpop.f32.mrf.mxu0
        %v993 = vadd.f32 %v904, %v992
        %v994 = vpop.f32.mrf.mxu0
        %v995 = vadd.f32 %v906, %v994
        %996 = vmatmul.bf16.gmra.mxu0 %v716
        %v997 = vpop.f32.mrf.mxu0
        %v998 = vadd.f32 %v909, %v997
        %v999 = vpop.f32.mrf.mxu0
        %v1000 = vadd.f32 %v911, %v999
        %1001 = vmatmul.bf16.gmra.mxu0 %v718
        %v1002 = vpop.f32.mrf.mxu0
        %v1003 = vadd.f32 %v914, %v1002
        %v1004 = vpop.f32.mrf.mxu0
        %v1005 = vadd.f32 %v916, %v1004
        %1006 = vmatmul.bf16.gmra.mxu0 %v720
        %v1007 = vpop.f32.mrf.mxu0
        %v1008 = vadd.f32 %v919, %v1007
        %v1009 = vpop.f32.mrf.mxu0
        %v1010 = vadd.f32 %v921, %v1009
        %1011 = vmatmul.bf16.gmra.mxu0 %v722
        %v1012 = vpop.f32.mrf.mxu0
        %v1013 = vadd.f32 %v924, %v1012
        %v1014 = vpop.f32.mrf.mxu0
        %v1015 = vadd.f32 %v926, %v1014
        %1016 = vmatmul.bf16.gmra.mxu0 %v724
        %v1017 = vpop.f32.mrf.mxu0
        %v1018 = vadd.f32 %v929, %v1017
        %v1019 = vpop.f32.mrf.mxu0
        %v1020 = vadd.f32 %v931, %v1019
        %1021 = vmatmul.bf16.gmra.mxu0 %v726
        %v1022 = vpop.f32.mrf.mxu0
        %v1023 = vadd.f32 %v934, %v1022
        %v1024 = vpop.f32.mrf.mxu0
        %v1025 = vadd.f32 %v936, %v1024
        %1026 = vmatmul.bf16.gmra.mxu0 %v728
        %v1027 = vpop.f32.mrf.mxu0
        %v1028 = vadd.f32 %v939, %v1027
        %v1029 = vpop.f32.mrf.mxu0
        %v1030 = vadd.f32 %v941, %v1029
        %1031 = vmatmul.bf16.gmra.mxu0 %v730
        %v1032 = vpop.f32.mrf.mxu0
        %v1033 = vadd.f32 %v944, %v1032
        %v1034 = vpop.f32.mrf.mxu0
        %v1035 = vadd.f32 %v946, %v1034
        %1036 = vdwg.mxu0
        %v1037 = vadd.f32 %v507, %v958
        %v1038 = vadd.f32 %v508, %v960
        %v1039 = vadd.f32 %v509, %v963
        %v1040 = vadd.f32 %v510, %v965
        %v1041 = vadd.f32 %v511, %v968
        %v1042 = vadd.f32 %v512, %v970
        %v1043 = vadd.f32 %v513, %v973
        %v1044 = vadd.f32 %v514, %v975
        %v1045 = vadd.f32 %v515, %v978
        %v1046 = vadd.f32 %v516, %v980
        %v1047 = vadd.f32 %v517, %v983
        %v1048 = vadd.f32 %v518, %v985
        %v1049 = vadd.f32 %v519, %v988
        %v1050 = vadd.f32 %v520, %v990
        %v1051 = vadd.f32 %v521, %v993
        %v1052 = vadd.f32 %v522, %v995
        %v1053 = vadd.f32 %v523, %v998
        %v1054 = vadd.f32 %v524, %v1000
        %v1055 = vadd.f32 %v525, %v1003
        %v1056 = vadd.f32 %v526, %v1005
        %v1057 = vadd.f32 %v527, %v1008
        %v1058 = vadd.f32 %v528, %v1010
        %v1059 = vadd.f32 %v529, %v1013
        %v1060 = vadd.f32 %v530, %v1015
        %v1061 = vadd.f32 %v531, %v1018
        %v1062 = vadd.f32 %v532, %v1020
        %v1063 = vadd.f32 %v533, %v1023
        %v1064 = vadd.f32 %v534, %v1025
        %v1065 = vadd.f32 %v535, %v1028
        %v1066 = vadd.f32 %v536, %v1030
        %v1067 = vadd.f32 %v537, %v1033
        %v1068 = vadd.f32 %v538, %v1035
        %1069 = vst [vmem:[#allocation2] sm:$0xff] %v1037
        %1070 = vst [vmem:[#allocation2 + $0x8] sm:$0xff] %v1038
        %1071 = vst [vmem:[#allocation2 + $0x10] sm:$0xff] %v1039
        %1072 = vst [vmem:[#allocation2 + $0x18] sm:$0xff] %v1040
        %1073 = vst [vmem:[#allocation2 + $0x20] sm:$0xff] %v1041
        %1074 = vst [vmem:[#allocation2 + $0x28] sm:$0xff] %v1042
        %1075 = vst [vmem:[#allocation2 + $0x30] sm:$0xff] %v1043
        %1076 = vst [vmem:[#allocation2 + $0x38] sm:$0xff] %v1044
        %1077 = vst [vmem:[#allocation2 + $0x40] sm:$0xff] %v1045
        %1078 = vst [vmem:[#allocation2 + $0x48] sm:$0xff] %v1046
        %1079 = vst [vmem:[#allocation2 + $0x50] sm:$0xff] %v1047
        %1080 = vst [vmem:[#allocation2 + $0x58] sm:$0xff] %v1048
        %1081 = vst [vmem:[#allocation2 + $0x60] sm:$0xff] %v1049
        %1082 = vst [vmem:[#allocation2 + $0x68] sm:$0xff] %v1050
        %1083 = vst [vmem:[#allocation2 + $0x70] sm:$0xff] %v1051
        %1084 = vst [vmem:[#allocation2 + $0x78] sm:$0xff] %v1052
        %1085 = vst [vmem:[#allocation2 + $0x80] sm:$0xff] %v1053
        %1086 = vst [vmem:[#allocation2 + $0x88] sm:$0xff] %v1054
        %1087 = vst [vmem:[#allocation2 + $0x90] sm:$0xff] %v1055
        %1088 = vst [vmem:[#allocation2 + $0x98] sm:$0xff] %v1056
        %1089 = vst [vmem:[#allocation2 + $0xa0] sm:$0xff] %v1057
        %1090 = vst [vmem:[#allocation2 + $0xa8] sm:$0xff] %v1058
        %1091 = vst [vmem:[#allocation2 + $0xb0] sm:$0xff] %v1059
        %1092 = vst [vmem:[#allocation2 + $0xb8] sm:$0xff] %v1060
        %1093 = vst [vmem:[#allocation2 + $0xc0] sm:$0xff] %v1061
        %1094 = vst [vmem:[#allocation2 + $0xc8] sm:$0xff] %v1062
        %1095 = vst [vmem:[#allocation2 + $0xd0] sm:$0xff] %v1063
        %1096 = vst [vmem:[#allocation2 + $0xd8] sm:$0xff] %v1064
        %1097 = vst [vmem:[#allocation2 + $0xe0] sm:$0xff] %v1065
        %1098 = vst [vmem:[#allocation2 + $0xe8] sm:$0xff] %v1066
        %1099 = vst [vmem:[#allocation2 + $0xf0] sm:$0xff] %v1067
        %1100 = vst [vmem:[#allocation2 + $0xf8] sm:$0xff] %v1068
        %p1101 = scmp.eq.s32.totalorder %s21, 1
        // Predicated region
        $region83: #{protein_segmenter2_forward.11} parent=73 // pred_check
          %p1102 = pneg %p1101
        $region84: #{protein_segmenter2_forward.11} parent=73 // pred_check_branch
          %1104 = sbr.rel (%p1102) target = $region86
        $region85: #{protein_segmenter2_forward.11} parent=73 // pred_region
          %v1105 = vld [vmem:[%s463] sm:$0xff]
          %v1106 = vld [vmem:[%s463 + $0x8] sm:$0xff]
          %v1107 = vld [vmem:[%s463 + $0x10] sm:$0xff]
          %v1108 = vld [vmem:[%s463 + $0x18] sm:$0xff]
          %v1109 = vld [vmem:[%s463 + $0x20] sm:$0xff]
          %v1110 = vld [vmem:[%s463 + $0x28] sm:$0xff]
          %v1111 = vld [vmem:[%s463 + $0x30] sm:$0xff]
          %v1112 = vld [vmem:[%s463 + $0x38] sm:$0xff]
          %v1113 = vld [vmem:[%s463 + $0x40] sm:$0xff]
          %v1114 = vld [vmem:[%s463 + $0x48] sm:$0xff]
          %v1115 = vld [vmem:[%s463 + $0x50] sm:$0xff]
          %v1116 = vld [vmem:[%s463 + $0x58] sm:$0xff]
          %v1117 = vld [vmem:[%s463 + $0x60] sm:$0xff]
          %v1118 = vld [vmem:[%s463 + $0x68] sm:$0xff]
          %v1119 = vld [vmem:[%s463 + $0x70] sm:$0xff]
          %v1120 = vld [vmem:[%s463 + $0x78] sm:$0xff]
          %v1121 = vld [vmem:[%s463 + $0x80] sm:$0xff]
          %v1122 = vld [vmem:[%s463 + $0x88] sm:$0xff]
          %v1123 = vld [vmem:[%s463 + $0x90] sm:$0xff]
          %v1124 = vld [vmem:[%s463 + $0x98] sm:$0xff]
          %v1125 = vld [vmem:[%s463 + $0xa0] sm:$0xff]
          %v1126 = vld [vmem:[%s463 + $0xa8] sm:$0xff]
          %v1127 = vld [vmem:[%s463 + $0xb0] sm:$0xff]
          %v1128 = vld [vmem:[%s463 + $0xb8] sm:$0xff]
          %v1129 = vld [vmem:[%s463 + $0xc0] sm:$0xff]
          %v1130 = vld [vmem:[%s463 + $0xc8] sm:$0xff]
          %v1131 = vld [vmem:[%s463 + $0xd0] sm:$0xff]
          %v1132 = vld [vmem:[%s463 + $0xd8] sm:$0xff]
          %v1133 = vld [vmem:[%s463 + $0xe0] sm:$0xff]
          %v1134 = vld [vmem:[%s463 + $0xe8] sm:$0xff]
          %v1135 = vld [vmem:[%s463 + $0xf0] sm:$0xff]
          %v1136 = vld [vmem:[%s463 + $0xf8] sm:$0xff]
          %v1137 = vld [vmem:[#allocation2] sm:$0xff]
          %v1138 = vld [vmem:[#allocation2 + $0x8] sm:$0xff]
          %v1139 = vld [vmem:[#allocation2 + $0x10] sm:$0xff]
          %v1140 = vld [vmem:[#allocation2 + $0x18] sm:$0xff]
          %v1141 = vld [vmem:[#allocation2 + $0x20] sm:$0xff]
          %v1142 = vld [vmem:[#allocation2 + $0x28] sm:$0xff]
          %v1143 = vld [vmem:[#allocation2 + $0x30] sm:$0xff]
          %v1144 = vld [vmem:[#allocation2 + $0x38] sm:$0xff]
          %v1145 = vld [vmem:[#allocation2 + $0x40] sm:$0xff]
          %v1146 = vld [vmem:[#allocation2 + $0x48] sm:$0xff]
          %v1147 = vld [vmem:[#allocation2 + $0x50] sm:$0xff]
          %v1148 = vld [vmem:[#allocation2 + $0x58] sm:$0xff]
          %v1149 = vld [vmem:[#allocation2 + $0x60] sm:$0xff]
          %v1150 = vld [vmem:[#allocation2 + $0x68] sm:$0xff]
          %v1151 = vld [vmem:[#allocation2 + $0x70] sm:$0xff]
          %v1152 = vld [vmem:[#allocation2 + $0x78] sm:$0xff]
          %v1153 = vld [vmem:[#allocation2 + $0x80] sm:$0xff]
          %v1154 = vld [vmem:[#allocation2 + $0x88] sm:$0xff]
          %v1155 = vld [vmem:[#allocation2 + $0x90] sm:$0xff]
          %v1156 = vld [vmem:[#allocation2 + $0x98] sm:$0xff]
          %v1157 = vld [vmem:[#allocation2 + $0xa0] sm:$0xff]
          %v1158 = vld [vmem:[#allocation2 + $0xa8] sm:$0xff]
          %v1159 = vld [vmem:[#allocation2 + $0xb0] sm:$0xff]
          %v1160 = vld [vmem:[#allocation2 + $0xb8] sm:$0xff]
          %v1161 = vld [vmem:[#allocation2 + $0xc0] sm:$0xff]
          %v1162 = vld [vmem:[#allocation2 + $0xc8] sm:$0xff]
          %v1163 = vld [vmem:[#allocation2 + $0xd0] sm:$0xff]
          %v1164 = vld [vmem:[#allocation2 + $0xd8] sm:$0xff]
          %v1165 = vld [vmem:[#allocation2 + $0xe0] sm:$0xff]
          %v1166 = vld [vmem:[#allocation2 + $0xe8] sm:$0xff]
          %v1167 = vld [vmem:[#allocation2 + $0xf0] sm:$0xff]
          %v1168 = vld [vmem:[#allocation2 + $0xf8] sm:$0xff]
          %v1169 = vld [vmem:[%s457] sm:$0xf]
          %v1170 = vld [vmem:[%s457 + $0x4] sm:$0xf]
          %v1171 = vld [vmem:[%s457 + $0x8] sm:$0xf]
          %v1172 = vld [vmem:[%s457 + $0xc] sm:$0xf]
          %v1173 = vld [vmem:[%s457 + $0x10] sm:$0xf]
          %v1174 = vld [vmem:[%s457 + $0x14] sm:$0xf]
          %v1175 = vld [vmem:[%s457 + $0x18] sm:$0xf]
          %v1176 = vld [vmem:[%s457 + $0x1c] sm:$0xf]
          %v1177 = vld [vmem:[%s457 + $0x20] sm:$0xf]
          %v1178 = vld [vmem:[%s457 + $0x24] sm:$0xf]
          %v1179 = vld [vmem:[%s457 + $0x28] sm:$0xf]
          %v1180 = vld [vmem:[%s457 + $0x2c] sm:$0xf]
          %v1181 = vld [vmem:[%s457 + $0x30] sm:$0xf]
          %v1182 = vld [vmem:[%s457 + $0x34] sm:$0xf]
          %v1183 = vld [vmem:[%s457 + $0x38] sm:$0xf]
          %v1184 = vld [vmem:[%s457 + $0x3c] sm:$0xf]
          %v1185 = vld [vmem:[%s457 + $0x40] sm:$0xf]
          %v1186 = vld [vmem:[%s457 + $0x44] sm:$0xf]
          %v1187 = vld [vmem:[%s457 + $0x48] sm:$0xf]
          %v1188 = vld [vmem:[%s457 + $0x4c] sm:$0xf]
          %v1189 = vld [vmem:[%s457 + $0x50] sm:$0xf]
          %v1190 = vld [vmem:[%s457 + $0x54] sm:$0xf]
          %v1191 = vld [vmem:[%s457 + $0x58] sm:$0xf]
          %v1192 = vld [vmem:[%s457 + $0x5c] sm:$0xf]
          %v1193 = vld [vmem:[%s457 + $0x60] sm:$0xf]
          %v1194 = vld [vmem:[%s457 + $0x64] sm:$0xf]
          %v1195 = vld [vmem:[%s457 + $0x68] sm:$0xf]
          %v1196 = vld [vmem:[%s457 + $0x6c] sm:$0xf]
          %v1197 = vld [vmem:[%s457 + $0x70] sm:$0xf]
          %v1198 = vld [vmem:[%s457 + $0x74] sm:$0xf]
          %v1199 = vld [vmem:[%s457 + $0x78] sm:$0xf]
          %v1200 = vld [vmem:[%s457 + $0x7c] sm:$0xf]
          %v1201 = vunpack.c.l.bf16 %v1169
          %v1202 = vunpack.c.l.bf16 %v1170
          %v1203 = vunpack.c.l.bf16 %v1171
          %v1204 = vunpack.c.l.bf16 %v1172
          %v1205 = vunpack.c.l.bf16 %v1173
          %v1206 = vunpack.c.l.bf16 %v1174
          %v1207 = vunpack.c.l.bf16 %v1175
          %v1208 = vunpack.c.l.bf16 %v1176
          %v1209 = vunpack.c.l.bf16 %v1177
          %v1210 = vunpack.c.l.bf16 %v1178
          %v1211 = vunpack.c.l.bf16 %v1179
          %v1212 = vunpack.c.l.bf16 %v1180
          %v1213 = vunpack.c.l.bf16 %v1181
          %v1214 = vunpack.c.l.bf16 %v1182
          %v1215 = vunpack.c.l.bf16 %v1183
          %v1216 = vunpack.c.l.bf16 %v1184
          %v1217 = vunpack.c.l.bf16 %v1185
          %v1218 = vunpack.c.l.bf16 %v1186
          %v1219 = vunpack.c.l.bf16 %v1187
          %v1220 = vunpack.c.l.bf16 %v1188
          %v1221 = vunpack.c.l.bf16 %v1189
          %v1222 = vunpack.c.l.bf16 %v1190
          %v1223 = vunpack.c.l.bf16 %v1191
          %v1224 = vunpack.c.l.bf16 %v1192
          %v1225 = vunpack.c.l.bf16 %v1193
          %v1226 = vunpack.c.l.bf16 %v1194
          %v1227 = vunpack.c.l.bf16 %v1195
          %v1228 = vunpack.c.l.bf16 %v1196
          %v1229 = vunpack.c.l.bf16 %v1197
          %v1230 = vunpack.c.l.bf16 %v1198
          %v1231 = vunpack.c.l.bf16 %v1199
          %v1232 = vunpack.c.l.bf16 %v1200
          %v1233 = vadd.f32 %v1137, %v1201
          %v1234 = vadd.f32 %v1138, %v1202
          %v1235 = vadd.f32 %v1139, %v1203
          %v1236 = vadd.f32 %v1140, %v1204
          %v1237 = vadd.f32 %v1141, %v1205
          %v1238 = vadd.f32 %v1142, %v1206
          %v1239 = vadd.f32 %v1143, %v1207
          %v1240 = vadd.f32 %v1144, %v1208
          %v1241 = vadd.f32 %v1145, %v1209
          %v1242 = vadd.f32 %v1146, %v1210
          %v1243 = vadd.f32 %v1147, %v1211
          %v1244 = vadd.f32 %v1148, %v1212
          %v1245 = vadd.f32 %v1149, %v1213
          %v1246 = vadd.f32 %v1150, %v1214
          %v1247 = vadd.f32 %v1151, %v1215
          %v1248 = vadd.f32 %v1152, %v1216
          %v1249 = vadd.f32 %v1153, %v1217
          %v1250 = vadd.f32 %v1154, %v1218
          %v1251 = vadd.f32 %v1155, %v1219
          %v1252 = vadd.f32 %v1156, %v1220
          %v1253 = vadd.f32 %v1157, %v1221
          %v1254 = vadd.f32 %v1158, %v1222
          %v1255 = vadd.f32 %v1159, %v1223
          %v1256 = vadd.f32 %v1160, %v1224
          %v1257 = vadd.f32 %v1161, %v1225
          %v1258 = vadd.f32 %v1162, %v1226
          %v1259 = vadd.f32 %v1163, %v1227
          %v1260 = vadd.f32 %v1164, %v1228
          %v1261 = vadd.f32 %v1165, %v1229
          %v1262 = vadd.f32 %v1166, %v1230
          %v1263 = vadd.f32 %v1167, %v1231
          %v1264 = vadd.f32 %v1168, %v1232
          %1266 = vset.pattern.permute.xlu0 0
          %1267 = vperm.xlu0 %1266, %v1105
          %v1268 = vpop.permute.xlu0 %1267
          %1271 = vset.pattern.permute.xlu0 0
          %1272 = vperm.xlu0 %1271, %v1106
          %v1273 = vpop.permute.xlu0 %1272
          %1276 = vset.pattern.permute.xlu0 0
          %1277 = vperm.xlu0 %1276, %v1107
          %v1278 = vpop.permute.xlu0 %1277
          %1281 = vset.pattern.permute.xlu0 0
          %1282 = vperm.xlu0 %1281, %v1108
          %v1283 = vpop.permute.xlu0 %1282
          %1286 = vset.pattern.permute.xlu0 0
          %1287 = vperm.xlu0 %1286, %v1109
          %v1288 = vpop.permute.xlu0 %1287
          %1291 = vset.pattern.permute.xlu0 0
          %1292 = vperm.xlu0 %1291, %v1110
          %v1293 = vpop.permute.xlu0 %1292
          %1296 = vset.pattern.permute.xlu0 0
          %1297 = vperm.xlu0 %1296, %v1111
          %v1298 = vpop.permute.xlu0 %1297
          %1301 = vset.pattern.permute.xlu0 0
          %1302 = vperm.xlu0 %1301, %v1112
          %v1303 = vpop.permute.xlu0 %1302
          %1306 = vset.pattern.permute.xlu0 0
          %1307 = vperm.xlu0 %1306, %v1113
          %v1308 = vpop.permute.xlu0 %1307
          %1311 = vset.pattern.permute.xlu0 0
          %1312 = vperm.xlu0 %1311, %v1114
          %v1313 = vpop.permute.xlu0 %1312
          %1316 = vset.pattern.permute.xlu0 0
          %1317 = vperm.xlu0 %1316, %v1115
          %v1318 = vpop.permute.xlu0 %1317
          %1321 = vset.pattern.permute.xlu0 0
          %1322 = vperm.xlu0 %1321, %v1116
          %v1323 = vpop.permute.xlu0 %1322
          %1326 = vset.pattern.permute.xlu0 0
          %1327 = vperm.xlu0 %1326, %v1117
          %v1328 = vpop.permute.xlu0 %1327
          %1331 = vset.pattern.permute.xlu0 0
          %1332 = vperm.xlu0 %1331, %v1118
          %v1333 = vpop.permute.xlu0 %1332
          %1336 = vset.pattern.permute.xlu0 0
          %1337 = vperm.xlu0 %1336, %v1119
          %v1338 = vpop.permute.xlu0 %1337
          %1341 = vset.pattern.permute.xlu0 0
          %1342 = vperm.xlu0 %1341, %v1120
          %v1343 = vpop.permute.xlu0 %1342
          %1346 = vset.pattern.permute.xlu0 0
          %1347 = vperm.xlu0 %1346, %v1121
          %v1348 = vpop.permute.xlu0 %1347
          %1351 = vset.pattern.permute.xlu0 0
          %1352 = vperm.xlu0 %1351, %v1122
          %v1353 = vpop.permute.xlu0 %1352
          %1356 = vset.pattern.permute.xlu0 0
          %1357 = vperm.xlu0 %1356, %v1123
          %v1358 = vpop.permute.xlu0 %1357
          %1361 = vset.pattern.permute.xlu0 0
          %1362 = vperm.xlu0 %1361, %v1124
          %v1363 = vpop.permute.xlu0 %1362
          %1366 = vset.pattern.permute.xlu0 0
          %1367 = vperm.xlu0 %1366, %v1125
          %v1368 = vpop.permute.xlu0 %1367
          %1371 = vset.pattern.permute.xlu0 0
          %1372 = vperm.xlu0 %1371, %v1126
          %v1373 = vpop.permute.xlu0 %1372
          %1376 = vset.pattern.permute.xlu0 0
          %1377 = vperm.xlu0 %1376, %v1127
          %v1378 = vpop.permute.xlu0 %1377
          %1381 = vset.pattern.permute.xlu0 0
          %1382 = vperm.xlu0 %1381, %v1128
          %v1383 = vpop.permute.xlu0 %1382
          %1386 = vset.pattern.permute.xlu0 0
          %1387 = vperm.xlu0 %1386, %v1129
          %v1388 = vpop.permute.xlu0 %1387
          %1391 = vset.pattern.permute.xlu0 0
          %1392 = vperm.xlu0 %1391, %v1130
          %v1393 = vpop.permute.xlu0 %1392
          %1396 = vset.pattern.permute.xlu0 0
          %1397 = vperm.xlu0 %1396, %v1131
          %v1398 = vpop.permute.xlu0 %1397
          %1401 = vset.pattern.permute.xlu0 0
          %1402 = vperm.xlu0 %1401, %v1132
          %v1403 = vpop.permute.xlu0 %1402
          %1406 = vset.pattern.permute.xlu0 0
          %1407 = vperm.xlu0 %1406, %v1133
          %v1408 = vpop.permute.xlu0 %1407
          %1411 = vset.pattern.permute.xlu0 0
          %1412 = vperm.xlu0 %1411, %v1134
          %v1413 = vpop.permute.xlu0 %1412
          %1416 = vset.pattern.permute.xlu0 0
          %1417 = vperm.xlu0 %1416, %v1135
          %v1418 = vpop.permute.xlu0 %1417
          %1421 = vset.pattern.permute.xlu0 0
          %1422 = vperm.xlu0 %1421, %v1136
          %v1423 = vpop.permute.xlu0 %1422
          %v1425 = vmul.f32 %v1268, %v1233
          %v1426 = vmul.f32 %v1273, %v1234
          %v1427 = vmul.f32 %v1278, %v1235
          %v1428 = vmul.f32 %v1283, %v1236
          %v1429 = vmul.f32 %v1288, %v1237
          %v1430 = vmul.f32 %v1293, %v1238
          %v1431 = vmul.f32 %v1298, %v1239
          %v1432 = vmul.f32 %v1303, %v1240
          %v1433 = vmul.f32 %v1308, %v1241
          %v1434 = vmul.f32 %v1313, %v1242
          %v1435 = vmul.f32 %v1318, %v1243
          %v1436 = vmul.f32 %v1323, %v1244
          %v1437 = vmul.f32 %v1328, %v1245
          %v1438 = vmul.f32 %v1333, %v1246
          %v1439 = vmul.f32 %v1338, %v1247
          %v1440 = vmul.f32 %v1343, %v1248
          %v1441 = vmul.f32 %v1348, %v1249
          %v1442 = vmul.f32 %v1353, %v1250
          %v1443 = vmul.f32 %v1358, %v1251
          %v1444 = vmul.f32 %v1363, %v1252
          %v1445 = vmul.f32 %v1368, %v1253
          %v1446 = vmul.f32 %v1373, %v1254
          %v1447 = vmul.f32 %v1378, %v1255
          %v1448 = vmul.f32 %v1383, %v1256
          %v1449 = vmul.f32 %v1388, %v1257
          %v1450 = vmul.f32 %v1393, %v1258
          %v1451 = vmul.f32 %v1398, %v1259
          %v1452 = vmul.f32 %v1403, %v1260
          %v1453 = vmul.f32 %v1408, %v1261
          %v1454 = vmul.f32 %v1413, %v1262
          %v1455 = vmul.f32 %v1418, %v1263
          %v1456 = vmul.f32 %v1423, %v1264
          %v1457 = vld [vmem:[%s4] sm:$0x1]
          %v1459 = vperm.slane %v1457, 0
          %v1461 = vadd.f32 %v1425, %v1459
          %v1462 = vadd.f32 %v1426, %v1459
          %v1463 = vadd.f32 %v1427, %v1459
          %v1464 = vadd.f32 %v1428, %v1459
          %v1465 = vadd.f32 %v1429, %v1459
          %v1466 = vadd.f32 %v1430, %v1459
          %v1467 = vadd.f32 %v1431, %v1459
          %v1468 = vadd.f32 %v1432, %v1459
          %v1469 = vadd.f32 %v1433, %v1459
          %v1470 = vadd.f32 %v1434, %v1459
          %v1471 = vadd.f32 %v1435, %v1459
          %v1472 = vadd.f32 %v1436, %v1459
          %v1473 = vadd.f32 %v1437, %v1459
          %v1474 = vadd.f32 %v1438, %v1459
          %v1475 = vadd.f32 %v1439, %v1459
          %v1476 = vadd.f32 %v1440, %v1459
          %v1477 = vadd.f32 %v1441, %v1459
          %v1478 = vadd.f32 %v1442, %v1459
          %v1479 = vadd.f32 %v1443, %v1459
          %v1480 = vadd.f32 %v1444, %v1459
          %v1481 = vadd.f32 %v1445, %v1459
          %v1482 = vadd.f32 %v1446, %v1459
          %v1483 = vadd.f32 %v1447, %v1459
          %v1484 = vadd.f32 %v1448, %v1459
          %v1485 = vadd.f32 %v1449, %v1459
          %v1486 = vadd.f32 %v1450, %v1459
          %v1487 = vadd.f32 %v1451, %v1459
          %v1488 = vadd.f32 %v1452, %v1459
          %v1489 = vadd.f32 %v1453, %v1459
          %v1490 = vadd.f32 %v1454, %v1459
          %v1491 = vadd.f32 %v1455, %v1459
          %v1492 = vadd.f32 %v1456, %v1459
          %vm1493 = vcmp.gt.f32.partialorder %v1461, 0.0
          %vm1494 = vcmp.gt.f32.partialorder %v1462, 0.0
          %vm1495 = vcmp.gt.f32.partialorder %v1463, 0.0
          %vm1496 = vcmp.gt.f32.partialorder %v1464, 0.0
          %vm1497 = vcmp.gt.f32.partialorder %v1465, 0.0
          %vm1498 = vcmp.gt.f32.partialorder %v1466, 0.0
          %vm1499 = vcmp.gt.f32.partialorder %v1467, 0.0
          %vm1500 = vcmp.gt.f32.partialorder %v1468, 0.0
          %vm1501 = vcmp.gt.f32.partialorder %v1469, 0.0
          %vm1502 = vcmp.gt.f32.partialorder %v1470, 0.0
          %vm1503 = vcmp.gt.f32.partialorder %v1471, 0.0
          %vm1504 = vcmp.gt.f32.partialorder %v1472, 0.0
          %vm1505 = vcmp.gt.f32.partialorder %v1473, 0.0
          %vm1506 = vcmp.gt.f32.partialorder %v1474, 0.0
          %vm1507 = vcmp.gt.f32.partialorder %v1475, 0.0
          %vm1508 = vcmp.gt.f32.partialorder %v1476, 0.0
          %vm1509 = vcmp.gt.f32.partialorder %v1477, 0.0
          %vm1510 = vcmp.gt.f32.partialorder %v1478, 0.0
          %vm1511 = vcmp.gt.f32.partialorder %v1479, 0.0
          %vm1512 = vcmp.gt.f32.partialorder %v1480, 0.0
          %vm1513 = vcmp.gt.f32.partialorder %v1481, 0.0
          %vm1514 = vcmp.gt.f32.partialorder %v1482, 0.0
          %vm1515 = vcmp.gt.f32.partialorder %v1483, 0.0
          %vm1516 = vcmp.gt.f32.partialorder %v1484, 0.0
          %vm1517 = vcmp.gt.f32.partialorder %v1485, 0.0
          %vm1518 = vcmp.gt.f32.partialorder %v1486, 0.0
          %vm1519 = vcmp.gt.f32.partialorder %v1487, 0.0
          %vm1520 = vcmp.gt.f32.partialorder %v1488, 0.0
          %vm1521 = vcmp.gt.f32.partialorder %v1489, 0.0
          %vm1522 = vcmp.gt.f32.partialorder %v1490, 0.0
          %vm1523 = vcmp.gt.f32.partialorder %v1491, 0.0
          %vm1524 = vcmp.gt.f32.partialorder %v1492, 0.0
          %v1525 = vmin.f32 %v1461, 0.0
          %v1526 = vmin.f32 %v1462, 0.0
          %v1527 = vmin.f32 %v1463, 0.0
          %v1528 = vmin.f32 %v1464, 0.0
          %v1529 = vmin.f32 %v1465, 0.0
          %v1530 = vmin.f32 %v1466, 0.0
          %v1531 = vmin.f32 %v1467, 0.0
          %v1532 = vmin.f32 %v1468, 0.0
          %v1533 = vmin.f32 %v1469, 0.0
          %v1534 = vmin.f32 %v1470, 0.0
          %v1535 = vmin.f32 %v1471, 0.0
          %v1536 = vmin.f32 %v1472, 0.0
          %v1537 = vmin.f32 %v1473, 0.0
          %v1538 = vmin.f32 %v1474, 0.0
          %v1539 = vmin.f32 %v1475, 0.0
          %v1540 = vmin.f32 %v1476, 0.0
          %v1541 = vmin.f32 %v1477, 0.0
          %v1542 = vmin.f32 %v1478, 0.0
          %v1543 = vmin.f32 %v1479, 0.0
          %v1544 = vmin.f32 %v1480, 0.0
          %v1545 = vmin.f32 %v1481, 0.0
          %v1546 = vmin.f32 %v1482, 0.0
          %v1547 = vmin.f32 %v1483, 0.0
          %v1548 = vmin.f32 %v1484, 0.0
          %v1549 = vmin.f32 %v1485, 0.0
          %v1550 = vmin.f32 %v1486, 0.0
          %v1551 = vmin.f32 %v1487, 0.0
          %v1552 = vmin.f32 %v1488, 0.0
          %v1553 = vmin.f32 %v1489, 0.0
          %v1554 = vmin.f32 %v1490, 0.0
          %v1555 = vmin.f32 %v1491, 0.0
          %v1556 = vmin.f32 %v1492, 0.0
          %v1557 = vmul.f32 %v1525, 1.442695
          %v1558 = vpow.pop %v1557
          %v1559 = vmul.f32 %v1526, 1.442695
          %v1560 = vpow.pop %v1559
          %v1561 = vmul.f32 %v1527, 1.442695
          %v1562 = vpow.pop %v1561
          %v1563 = vmul.f32 %v1528, 1.442695
          %v1564 = vpow.pop %v1563
          %v1565 = vmul.f32 %v1529, 1.442695
          %v1566 = vpow.pop %v1565
          %v1567 = vmul.f32 %v1530, 1.442695
          %v1568 = vpow.pop %v1567
          %v1569 = vmul.f32 %v1531, 1.442695
          %v1570 = vpow.pop %v1569
          %v1571 = vmul.f32 %v1532, 1.442695
          %v1572 = vpow.pop %v1571
          %v1573 = vmul.f32 %v1533, 1.442695
          %v1574 = vpow.pop %v1573
          %v1575 = vmul.f32 %v1534, 1.442695
          %v1576 = vpow.pop %v1575
          %v1577 = vmul.f32 %v1535, 1.442695
          %v1578 = vpow.pop %v1577
          %v1579 = vmul.f32 %v1536, 1.442695
          %v1580 = vpow.pop %v1579
          %v1581 = vmul.f32 %v1537, 1.442695
          %v1582 = vpow.pop %v1581
          %v1583 = vmul.f32 %v1538, 1.442695
          %v1584 = vpow.pop %v1583
          %v1585 = vmul.f32 %v1539, 1.442695
          %v1586 = vpow.pop %v1585
          %v1587 = vmul.f32 %v1540, 1.442695
          %v1588 = vpow.pop %v1587
          %v1589 = vmul.f32 %v1541, 1.442695
          %v1590 = vpow.pop %v1589
          %v1591 = vmul.f32 %v1542, 1.442695
          %v1592 = vpow.pop %v1591
          %v1593 = vmul.f32 %v1543, 1.442695
          %v1594 = vpow.pop %v1593
          %v1595 = vmul.f32 %v1544, 1.442695
          %v1596 = vpow.pop %v1595
          %v1597 = vmul.f32 %v1545, 1.442695
          %v1598 = vpow.pop %v1597
          %v1599 = vmul.f32 %v1546, 1.442695
          %v1600 = vpow.pop %v1599
          %v1601 = vmul.f32 %v1547, 1.442695
          %v1602 = vpow.pop %v1601
          %v1603 = vmul.f32 %v1548, 1.442695
          %v1604 = vpow.pop %v1603
          %v1605 = vmul.f32 %v1549, 1.442695
          %v1606 = vpow.pop %v1605
          %v1607 = vmul.f32 %v1550, 1.442695
          %v1608 = vpow.pop %v1607
          %v1609 = vmul.f32 %v1551, 1.442695
          %v1610 = vpow.pop %v1609
          %v1611 = vmul.f32 %v1552, 1.442695
          %v1612 = vpow.pop %v1611
          %v1613 = vmul.f32 %v1553, 1.442695
          %v1614 = vpow.pop %v1613
          %v1615 = vmul.f32 %v1554, 1.442695
          %v1616 = vpow.pop %v1615
          %v1617 = vmul.f32 %v1555, 1.442695
          %v1618 = vpow.pop %v1617
          %v1619 = vmul.f32 %v1556, 1.442695
          %v1620 = vpow.pop %v1619
          %v1621 = vsub.f32 %v1558, 1.0
          %v1622 = vsub.f32 %v1560, 1.0
          %v1623 = vsub.f32 %v1562, 1.0
          %v1624 = vsub.f32 %v1564, 1.0
          %v1625 = vsub.f32 %v1566, 1.0
          %v1626 = vsub.f32 %v1568, 1.0
          %v1627 = vsub.f32 %v1570, 1.0
          %v1628 = vsub.f32 %v1572, 1.0
          %v1629 = vsub.f32 %v1574, 1.0
          %v1630 = vsub.f32 %v1576, 1.0
          %v1631 = vsub.f32 %v1578, 1.0
          %v1632 = vsub.f32 %v1580, 1.0
          %v1633 = vsub.f32 %v1582, 1.0
          %v1634 = vsub.f32 %v1584, 1.0
          %v1635 = vsub.f32 %v1586, 1.0
          %v1636 = vsub.f32 %v1588, 1.0
          %v1637 = vsub.f32 %v1590, 1.0
          %v1638 = vsub.f32 %v1592, 1.0
          %v1639 = vsub.f32 %v1594, 1.0
          %v1640 = vsub.f32 %v1596, 1.0
          %v1641 = vsub.f32 %v1598, 1.0
          %v1642 = vsub.f32 %v1600, 1.0
          %v1643 = vsub.f32 %v1602, 1.0
          %v1644 = vsub.f32 %v1604, 1.0
          %v1645 = vsub.f32 %v1606, 1.0
          %v1646 = vsub.f32 %v1608, 1.0
          %v1647 = vsub.f32 %v1610, 1.0
          %v1648 = vsub.f32 %v1612, 1.0
          %v1649 = vsub.f32 %v1614, 1.0
          %v1650 = vsub.f32 %v1616, 1.0
          %v1651 = vsub.f32 %v1618, 1.0
          %v1652 = vsub.f32 %v1620, 1.0
          %v1653 = vsel %vm1493, %v1461, %v1621
          %v1654 = vsel %vm1494, %v1462, %v1622
          %v1655 = vsel %vm1495, %v1463, %v1623
          %v1656 = vsel %vm1496, %v1464, %v1624
          %v1657 = vsel %vm1497, %v1465, %v1625
          %v1658 = vsel %vm1498, %v1466, %v1626
          %v1659 = vsel %vm1499, %v1467, %v1627
          %v1660 = vsel %vm1500, %v1468, %v1628
          %v1661 = vsel %vm1501, %v1469, %v1629
          %v1662 = vsel %vm1502, %v1470, %v1630
          %v1663 = vsel %vm1503, %v1471, %v1631
          %v1664 = vsel %vm1504, %v1472, %v1632
          %v1665 = vsel %vm1505, %v1473, %v1633
          %v1666 = vsel %vm1506, %v1474, %v1634
          %v1667 = vsel %vm1507, %v1475, %v1635
          %v1668 = vsel %vm1508, %v1476, %v1636
          %v1669 = vsel %vm1509, %v1477, %v1637
          %v1670 = vsel %vm1510, %v1478, %v1638
          %v1671 = vsel %vm1511, %v1479, %v1639
          %v1672 = vsel %vm1512, %v1480, %v1640
          %v1673 = vsel %vm1513, %v1481, %v1641
          %v1674 = vsel %vm1514, %v1482, %v1642
          %v1675 = vsel %vm1515, %v1483, %v1643
          %v1676 = vsel %vm1516, %v1484, %v1644
          %v1677 = vsel %vm1517, %v1485, %v1645
          %v1678 = vsel %vm1518, %v1486, %v1646
          %v1679 = vsel %vm1519, %v1487, %v1647
          %v1680 = vsel %vm1520, %v1488, %v1648
          %v1681 = vsel %vm1521, %v1489, %v1649
          %v1682 = vsel %vm1522, %v1490, %v1650
          %v1683 = vsel %vm1523, %v1491, %v1651
          %v1684 = vsel %vm1524, %v1492, %v1652
          %1685 = vst [vmem:[%s469] sm:$0xff] %v1653
          %1686 = vst [vmem:[%s469 + $0x8] sm:$0xff] %v1654
          %1687 = vst [vmem:[%s469 + $0x10] sm:$0xff] %v1655
          %1688 = vst [vmem:[%s469 + $0x18] sm:$0xff] %v1656
          %1689 = vst [vmem:[%s469 + $0x20] sm:$0xff] %v1657
          %1690 = vst [vmem:[%s469 + $0x28] sm:$0xff] %v1658
          %1691 = vst [vmem:[%s469 + $0x30] sm:$0xff] %v1659
          %1692 = vst [vmem:[%s469 + $0x38] sm:$0xff] %v1660
          %1693 = vst [vmem:[%s469 + $0x40] sm:$0xff] %v1661
          %1694 = vst [vmem:[%s469 + $0x48] sm:$0xff] %v1662
          %1695 = vst [vmem:[%s469 + $0x50] sm:$0xff] %v1663
          %1696 = vst [vmem:[%s469 + $0x58] sm:$0xff] %v1664
          %1697 = vst [vmem:[%s469 + $0x60] sm:$0xff] %v1665
          %1698 = vst [vmem:[%s469 + $0x68] sm:$0xff] %v1666
          %1699 = vst [vmem:[%s469 + $0x70] sm:$0xff] %v1667
          %1700 = vst [vmem:[%s469 + $0x78] sm:$0xff] %v1668
          %1701 = vst [vmem:[%s469 + $0x80] sm:$0xff] %v1669
          %1702 = vst [vmem:[%s469 + $0x88] sm:$0xff] %v1670
          %1703 = vst [vmem:[%s469 + $0x90] sm:$0xff] %v1671
          %1704 = vst [vmem:[%s469 + $0x98] sm:$0xff] %v1672
          %1705 = vst [vmem:[%s469 + $0xa0] sm:$0xff] %v1673
          %1706 = vst [vmem:[%s469 + $0xa8] sm:$0xff] %v1674
          %1707 = vst [vmem:[%s469 + $0xb0] sm:$0xff] %v1675
          %1708 = vst [vmem:[%s469 + $0xb8] sm:$0xff] %v1676
          %1709 = vst [vmem:[%s469 + $0xc0] sm:$0xff] %v1677
          %1710 = vst [vmem:[%s469 + $0xc8] sm:$0xff] %v1678
          %1711 = vst [vmem:[%s469 + $0xd0] sm:$0xff] %v1679
          %1712 = vst [vmem:[%s469 + $0xd8] sm:$0xff] %v1680
          %1713 = vst [vmem:[%s469 + $0xe0] sm:$0xff] %v1681
          %1714 = vst [vmem:[%s469 + $0xe8] sm:$0xff] %v1682
          %1715 = vst [vmem:[%s469 + $0xf0] sm:$0xff] %v1683
          %1716 = vst [vmem:[%s469 + $0xf8] sm:$0xff] %v1684
        $region86: #{protein_segmenter2_forward.11} parent=73 // pred_fallthru
          _
        %s1717 = smul.u32 32, %s20
        %p1718 = scmp.lt.s32.totalorder %s1717, 63
        %s1719 = scalar_select %p1718, %s1717, 63
        %s1720 = smul.addr %s1719, 8
        %s1721 = scalar_lea.vmem %s5, %s1720
        // Predicated region
        $region87: #{protein_segmenter2_forward.11} parent=73 // pred_check
          %p1722 = pneg %p173
        $region88: #{protein_segmenter2_forward.11} parent=73 // pred_check_branch
          %1724 = sbr.rel (%p1722) target = $region90
        $region89: #{protein_segmenter2_forward.11} parent=73 // pred_region
          %s1725 = smul.u32 32, %s20
        $region90: #{protein_segmenter2_forward.11} parent=73 // pred_fallthru
          _
      $region74: #{protein_segmenter2_forward.11} parent=5 // pred_fallthru
        _
      %p1726 = scmp.le.s32.totalorder 2, %s11
      // Predicated region
      $region91: #{protein_segmenter2_forward.11} parent=5 // pred_check
        %p1727 = pneg %p1726
      $region92: #{protein_segmenter2_forward.11} parent=5 // pred_check_branch
        %1729 = sbr.rel (%p1727) target = $region94
      $region93: #{protein_segmenter2_forward.11} parent=5 // pred_region
        %s1730 = ssub.s32 %s11, 2
        // Predicated region
        $region95: #{protein_segmenter2_forward.11} parent=93 // pred_check
          %p1731 = pneg %p179
        $region96: #{protein_segmenter2_forward.11} parent=93 // pred_check_branch
          %1733 = sbr.rel (%p1731) target = $region98
        $region97: #{protein_segmenter2_forward.11} parent=93 // pred_region
          %s1734 = smul.u32 32, %s22
          %p1735 = scmp.lt.s32.totalorder %s1734, 63
          %s1736 = scalar_select %p1735, %s1734, 63
          %s1737 = smul.addr %s1736, 8
          %s1738 = scalar_lea.vmem %s5, %s1737
        $region98: #{protein_segmenter2_forward.11} parent=93 // pred_fallthru
          _
      $region94: #{protein_segmenter2_forward.11} parent=5 // pred_fallthru
        _
    $region6: #{protein_segmenter2_forward.11} parent=1 // loop_footer
      %s15 = sadd.s32 1, %s11
    $region7: #{protein_segmenter2_forward.11} parent=1 // loop_footer_branch
      %10 = sbr.rel target = $region3
    $region8: #{protein_segmenter2_forward.11} parent=1 // loop_exit
      _

// kernel: protein_segmenter2_forward.17
$region0: #{protein_segmenter2_forward.17}
  #allocation0 [shape = 'u32[]', space=smem, size = 0x4, offset = 0x4, fixed_abs, tag = 'smem constant byte address 0x4 - core index']
  #allocation1 [shape = 'u32[72,128]{1,0:T(1,128)}', space=vmem, size = 0x9000, scoped, tag = 'internal scratch']
  #allocation2 [shape = 'f32[256,128]{1,0:T(8,128)}', space=vmem, size = 0x20000, scoped, tag = 'scratch operand']
  %s0 = inlined_call_operand.vmem [shape: bf16[512,512], index: 0, kind: input, shape index: {}]
  %s1 = inlined_call_operand.vmem [shape: bf16[512,128], index: 1, kind: input, shape index: {}, may-alias: {1,2}]
  %s2 = inlined_call_operand.vmem [shape: bf16[512,128], index: 2, kind: input, shape index: {}, may-alias: {1,2}]
  %s3 = inlined_call_operand.vmem [shape: f32[512,1], index: 3, kind: input, shape index: {}]
  %s4 = inlined_call_operand.vmem [shape: f32[1,128], index: 4, kind: input, shape index: {}]
  %s5 = inlined_call_operand.vmem [shape: f32[512,128], index: 5, kind: output, shape index: {}]
  %s6 = sld [smem:[#allocation0]]
  $region99: #{protein_segmenter2_forward.17} parent=0
    _
  %s8 = ssub.s32 1, %s6
  %s9 = scalar_select 0, %s8, %s6
  $region1: #{protein_segmenter2_forward.17} parent=0
    #allocation3 [shape = 'u8[262144]{0}', space=vmem, size = 0x40000, scoped, tag = 'input window, operand 0']
    loop: start=0, step=1, limit=6
    $region2: #{protein_segmenter2_forward.17} parent=1 // loop_pre_header
      _
    $region3: #{protein_segmenter2_forward.17} parent=1 // loop_header
      %s11 = sphi 0, %s15
      %p12 = scmp.ge.s32.totalorder %s11, 6
      %s18 = sphi 0, %s30
      %s19 = sphi 0, %s26
      %s20 = sphi 0, %s18
      %s21 = sphi 0, %s19
      %s22 = sphi 0, %s20
      %s23 = sphi 0, %s21
      %s35 = sphi 0, %s37
      %s38 = sphi 0, %s35
      %s39 = sphi 0, %s38
      %s55 = sphi 0, %s39
      %s61 = sphi 0, %s63
      %s64 = sphi 0, %s61
      %s65 = sphi 0, %s64
      %s81 = sphi 0, %s65
      %s87 = sphi 0, %s89
      %s90 = sphi 0, %s87
      %s91 = sphi 0, %s90
      %s107 = sphi 0, %s91
      %s113 = sphi 0, %s115
      %s116 = sphi 0, %s113
      %s117 = sphi 0, %s116
      %s133 = sphi 0, %s117
      %s137 = sphi 0, %s137
      %s139 = sphi 0, %s137
      %s140 = sphi 0, %s139
      %s154 = sphi 0, %s140
      %s160 = sphi 0, %s162
      %s163 = sphi 0, %s160
      %s164 = sphi 0, %s163
      %s180 = sphi 0, %s164
    $region4: #{protein_segmenter2_forward.17} parent=1 // loop_header_branch
      %14 = sbr.rel (%p12) target = $region8
    $region5: #{protein_segmenter2_forward.17} parent=1 // loop_body
      %s16 = ssub.s32 %s11, 1
      %s17 = ssub.s32 %s11, 2
      %s24 = sadd.s32 1, %s19
      %p25 = scmp.ge.s32.totalorder %s24, 2
      %s26 = scalar_select %p25, 0, %s24
      %s27 = sadd.s32 1, %s18
      %s28 = scalar_select %p25, %s27, %s18
      %p29 = scmp.ge.s32.totalorder %s28, 2
      %s30 = scalar_select %p29, 0, %s28
      %s31 = ssub.s32 %s18, %s30
      %s32 = ssub.s32 %s19, %s26
      %s33 = sor.u32 %s31, %s32
      %p34 = scmp.eq.s32.totalorder %s33, 0
      %s36 = sadd.s32 %s35, 1
      %s37 = scalar_select %p34, %s35, %s36
      %p40 = pneg %p34
      %p41 = scmp.eq.s32.totalorder %s11, 3
      %p42 = por %p40, %p41
      %p43 = scmp.ne.s32.totalorder %s35, %s38
      %p44 = scmp.eq.s32.totalorder %s11, 0
      %p45 = por %p43, %p44
      %p46 = scmp.ne.s32.totalorder %s35, %s38
      %p47 = scmp.eq.s32.totalorder %s16, 3
      %p48 = por %p46, %p47
      %p49 = scmp.ne.s32.totalorder %s38, %s39
      %p50 = scmp.eq.s32.totalorder %s16, 0
      %p51 = por %p49, %p50
      %p52 = scmp.ne.s32.totalorder %s38, %s39
      %p53 = scmp.eq.s32.totalorder %s17, 3
      %p54 = por %p52, %p53
      %p56 = scmp.ne.s32.totalorder %s39, %s55
      %p57 = scmp.eq.s32.totalorder %s17, 0
      %p58 = por %p56, %p57
      %s59 = ssub.s32 %s19, %s26
      %p60 = scmp.eq.s32.totalorder %s59, 0
      %s62 = sadd.s32 %s61, 1
      %s63 = scalar_select %p60, %s61, %s62
      %p66 = pneg %p60
      %p67 = scmp.eq.s32.totalorder %s11, 3
      %p68 = por %p66, %p67
      %p69 = scmp.ne.s32.totalorder %s61, %s64
      %p70 = scmp.eq.s32.totalorder %s11, 0
      %p71 = por %p69, %p70
      %p72 = scmp.ne.s32.totalorder %s61, %s64
      %p73 = scmp.eq.s32.totalorder %s16, 3
      %p74 = por %p72, %p73
      %p75 = scmp.ne.s32.totalorder %s64, %s65
      %p76 = scmp.eq.s32.totalorder %s16, 0
      %p77 = por %p75, %p76
      %p78 = scmp.ne.s32.totalorder %s64, %s65
      %p79 = scmp.eq.s32.totalorder %s17, 3
      %p80 = por %p78, %p79
      %p82 = scmp.ne.s32.totalorder %s65, %s81
      %p83 = scmp.eq.s32.totalorder %s17, 0
      %p84 = por %p82, %p83
      %s85 = ssub.s32 %s18, %s30
      %p86 = scmp.eq.s32.totalorder %s85, 0
      %s88 = sadd.s32 %s87, 1
      %s89 = scalar_select %p86, %s87, %s88
      %p92 = pneg %p86
      %p93 = scmp.eq.s32.totalorder %s11, 3
      %p94 = por %p92, %p93
      %p95 = scmp.ne.s32.totalorder %s87, %s90
      %p96 = scmp.eq.s32.totalorder %s11, 0
      %p97 = por %p95, %p96
      %p98 = scmp.ne.s32.totalorder %s87, %s90
      %p99 = scmp.eq.s32.totalorder %s16, 3
      %p100 = por %p98, %p99
      %p101 = scmp.ne.s32.totalorder %s90, %s91
      %p102 = scmp.eq.s32.totalorder %s16, 0
      %p103 = por %p101, %p102
      %p104 = scmp.ne.s32.totalorder %s90, %s91
      %p105 = scmp.eq.s32.totalorder %s17, 3
      %p106 = por %p104, %p105
      %p108 = scmp.ne.s32.totalorder %s91, %s107
      %p109 = scmp.eq.s32.totalorder %s17, 0
      %p110 = por %p108, %p109
      %s111 = ssub.s32 %s18, %s30
      %p112 = scmp.eq.s32.totalorder %s111, 0
      %s114 = sadd.s32 %s113, 1
      %s115 = scalar_select %p112, %s113, %s114
      %p118 = pneg %p112
      %p119 = scmp.eq.s32.totalorder %s11, 3
      %p120 = por %p118, %p119
      %p121 = scmp.ne.s32.totalorder %s113, %s116
      %p122 = scmp.eq.s32.totalorder %s11, 0
      %p123 = por %p121, %p122
      %p124 = scmp.ne.s32.totalorder %s113, %s116
      %p125 = scmp.eq.s32.totalorder %s16, 3
      %p126 = por %p124, %p125
      %p127 = scmp.ne.s32.totalorder %s116, %s117
      %p128 = scmp.eq.s32.totalorder %s16, 0
      %p129 = por %p127, %p128
      %p130 = scmp.ne.s32.totalorder %s116, %s117
      %p131 = scmp.eq.s32.totalorder %s17, 3
      %p132 = por %p130, %p131
      %p134 = scmp.ne.s32.totalorder %s117, %s133
      %p135 = scmp.eq.s32.totalorder %s17, 0
      %p136 = por %p134, %p135
      %s138 = sadd.s32 %s137, 1
      %p141 = scmp.eq.s32.totalorder %s11, 3
      %p142 = scmp.ne.s32.totalorder %s137, %s139
      %p143 = scmp.eq.s32.totalorder %s11, 0
      %p144 = por %p142, %p143
      %p145 = scmp.ne.s32.totalorder %s137, %s139
      %p146 = scmp.eq.s32.totalorder %s16, 3
      %p147 = por %p145, %p146
      %p148 = scmp.ne.s32.totalorder %s139, %s140
      %p149 = scmp.eq.s32.totalorder %s16, 0
      %p150 = por %p148, %p149
      %p151 = scmp.ne.s32.totalorder %s139, %s140
      %p152 = scmp.eq.s32.totalorder %s17, 3
      %p153 = por %p151, %p152
      %p155 = scmp.ne.s32.totalorder %s140, %s154
      %p156 = scmp.eq.s32.totalorder %s17, 0
      %p157 = por %p155, %p156
      %s158 = ssub.s32 %s18, %s30
      %p159 = scmp.eq.s32.totalorder %s158, 0
      %s161 = sadd.s32 %s160, 1
      %s162 = scalar_select %p159, %s160, %s161
      %p165 = pneg %p159
      %p166 = scmp.eq.s32.totalorder %s11, 3
      %p167 = por %p165, %p166
      %p168 = scmp.ne.s32.totalorder %s160, %s163
      %p169 = scmp.eq.s32.totalorder %s11, 0
      %p170 = por %p168, %p169
      %p171 = scmp.ne.s32.totalorder %s160, %s163
      %p172 = scmp.eq.s32.totalorder %s16, 3
      %p173 = por %p171, %p172
      %p174 = scmp.ne.s32.totalorder %s163, %s164
      %p175 = scmp.eq.s32.totalorder %s16, 0
      %p176 = por %p174, %p175
      %p177 = scmp.ne.s32.totalorder %s163, %s164
      %p178 = scmp.eq.s32.totalorder %s17, 3
      %p179 = por %p177, %p178
      %p181 = scmp.ne.s32.totalorder %s164, %s180
      %p182 = scmp.eq.s32.totalorder %s17, 0
      %p183 = por %p181, %p182
      %p184 = scmp.le.s32.totalorder 1, %s11
      %p185 = scmp.lt.s32.totalorder %s11, 5
      %p186 = pnand %p184, %p185
      %p187 = pneg %p186
      // Predicated region
      $region9: #{protein_segmenter2_forward.17} parent=5 // pred_check
        _
      $region10: #{protein_segmenter2_forward.17} parent=5 // pred_check_branch
        %189 = sbr.rel (%p186) target = $region12
      $region11: #{protein_segmenter2_forward.17} parent=5 // pred_region
        %s190 = ssub.s32 %s11, 1
        // Predicated region
        $region13: #{protein_segmenter2_forward.17} parent=11 // pred_check
          %p191 = pneg %p150
        $region14: #{protein_segmenter2_forward.17} parent=11 // pred_check_branch
          %193 = sbr.rel (%p191) target = $region16
        $region15: #{protein_segmenter2_forward.17} parent=11 // pred_region
          _
        $region16: #{protein_segmenter2_forward.17} parent=11 // pred_fallthru
          _
      $region12: #{protein_segmenter2_forward.17} parent=5 // pred_fallthru
        _
      %p194 = scmp.lt.s32.totalorder %s11, 4
      // Predicated region
      $region17: #{protein_segmenter2_forward.17} parent=5 // pred_check
        %p195 = pneg %p194
      $region18: #{protein_segmenter2_forward.17} parent=5 // pred_check_branch
        %197 = sbr.rel (%p195) target = $region20
      $region19: #{protein_segmenter2_forward.17} parent=5 // pred_region
        // Predicated region
        $region21: #{protein_segmenter2_forward.17} parent=19 // pred_check
          %p198 = pneg %p45
        $region22: #{protein_segmenter2_forward.17} parent=19 // pred_check_branch
          %200 = sbr.rel (%p198) target = $region24
        $region23: #{protein_segmenter2_forward.17} parent=19 // pred_region
          %s201 = sand.u32 %s35, 1
          %s202 = sand.u32 %s35, 1
          %s203 = smul.addr %s202, 256
          %s204 = scalar_lea.vmem [#allocation3], %s203
          %s205 = smul.u32 32, %s18
          %s206 = smul.u32 2, %s19
          %s207 = smul.addr %s205, 4
          %s208 = sadd.s32 %s206, %s207
          %s209 = smul.addr %s208, 4
          %s210 = scalar_lea.vmem %s0, %s209
          // Predicated region
          $region25: #{protein_segmenter2_forward.17} parent=23 // pred_check
            _
          $region26: #{protein_segmenter2_forward.17} parent=23 // pred_check_branch
            %212 = sbr.rel (0) target = $region28
          $region27: #{protein_segmenter2_forward.17} parent=23 // pred_region
            // Predicated region
            $region29: #{protein_segmenter2_forward.17} parent=27 // pred_check
              _
            $region30: #{protein_segmenter2_forward.17} parent=27 // pred_check_branch
              %214 = sbr.rel (0) target = $region32
            $region31: #{protein_segmenter2_forward.17} parent=27 // pred_region
              // Predicated region
              $region44: #{protein_segmenter2_forward.17} parent=31 // pred_check
                _
              $region45: #{protein_segmenter2_forward.17} parent=31 // pred_check_branch
                %292 = sbr.rel (0) target = $region47
              $region46: #{protein_segmenter2_forward.17} parent=31 // pred_region
                loop: start=0, step=1, limit=1
                $region48: #{protein_segmenter2_forward.17} parent=46 // loop_pre_header
                  _
                $region49: #{protein_segmenter2_forward.17} parent=46 // loop_header
                  %s294 = sphi 0, %s298
                  %p295 = scmp.ge.s32.totalorder %s294, 1
                  %s299 = sphi %s210, %s210
                  %s300 = sphi %s204, %s204
                $region50: #{protein_segmenter2_forward.17} parent=46 // loop_header_branch
                  %297 = sbr.rel (%p295) target = $region54
                $region51: #{protein_segmenter2_forward.17} parent=46 // loop_body
                  %v301 = vld [vmem:[%s299] sm:$0xff]
                  %302 = vst [vmem:[%s300] sm:$0xff] %v301
                  %v303 = vld [vmem:[%s299 + $0x10] sm:$0xff]
                  %304 = vst [vmem:[%s300 + $0x8] sm:$0xff] %v303
                  %v305 = vld [vmem:[%s299 + $0x20] sm:$0xff]
                  %306 = vst [vmem:[%s300 + $0x10] sm:$0xff] %v305
                  %v307 = vld [vmem:[%s299 + $0x30] sm:$0xff]
                  %308 = vst [vmem:[%s300 + $0x18] sm:$0xff] %v307
                  %v309 = vld [vmem:[%s299 + $0x40] sm:$0xff]
                  %310 = vst [vmem:[%s300 + $0x20] sm:$0xff] %v309
                  %v311 = vld [vmem:[%s299 + $0x50] sm:$0xff]
                  %312 = vst [vmem:[%s300 + $0x28] sm:$0xff] %v311
                  %v313 = vld [vmem:[%s299 + $0x60] sm:$0xff]
                  %314 = vst [vmem:[%s300 + $0x30] sm:$0xff] %v313
                  %v315 = vld [vmem:[%s299 + $0x70] sm:$0xff]
                  %316 = vst [vmem:[%s300 + $0x38] sm:$0xff] %v315
                  %v317 = vld [vmem:[%s299 + $0x80] sm:$0xff]
                  %318 = vst [vmem:[%s300 + $0x40] sm:$0xff] %v317
                  %v319 = vld [vmem:[%s299 + $0x90] sm:$0xff]
                  %320 = vst [vmem:[%s300 + $0x48] sm:$0xff] %v319
                  %v321 = vld [vmem:[%s299 + $0xa0] sm:$0xff]
                  %322 = vst [vmem:[%s300 + $0x50] sm:$0xff] %v321
                  %v323 = vld [vmem:[%s299 + $0xb0] sm:$0xff]
                  %324 = vst [vmem:[%s300 + $0x58] sm:$0xff] %v323
                  %v325 = vld [vmem:[%s299 + $0xc0] sm:$0xff]
                  %326 = vst [vmem:[%s300 + $0x60] sm:$0xff] %v325
                  %v327 = vld [vmem:[%s299 + $0xd0] sm:$0xff]
                  %328 = vst [vmem:[%s300 + $0x68] sm:$0xff] %v327
                  %v329 = vld [vmem:[%s299 + $0xe0] sm:$0xff]
                  %330 = vst [vmem:[%s300 + $0x70] sm:$0xff] %v329
                  %v331 = vld [vmem:[%s299 + $0xf0] sm:$0xff]
                  %332 = vst [vmem:[%s300 + $0x78] sm:$0xff] %v331
                  %v333 = vld [vmem:[%s299 + $0x100] sm:$0xff]
                  %334 = vst [vmem:[%s300 + $0x80] sm:$0xff] %v333
                  %v335 = vld [vmem:[%s299 + $0x110] sm:$0xff]
                  %336 = vst [vmem:[%s300 + $0x88] sm:$0xff] %v335
                  %v337 = vld [vmem:[%s299 + $0x120] sm:$0xff]
                  %338 = vst [vmem:[%s300 + $0x90] sm:$0xff] %v337
                  %v339 = vld [vmem:[%s299 + $0x130] sm:$0xff]
                  %340 = vst [vmem:[%s300 + $0x98] sm:$0xff] %v339
                  %v341 = vld [vmem:[%s299 + $0x140] sm:$0xff]
                  %342 = vst [vmem:[%s300 + $0xa0] sm:$0xff] %v341
                  %v343 = vld [vmem:[%s299 + $0x150] sm:$0xff]
                  %344 = vst [vmem:[%s300 + $0xa8] sm:$0xff] %v343
                  %v345 = vld [vmem:[%s299 + $0x160] sm:$0xff]
                  %346 = vst [vmem:[%s300 + $0xb0] sm:$0xff] %v345
                  %v347 = vld [vmem:[%s299 + $0x170] sm:$0xff]
                  %348 = vst [vmem:[%s300 + $0xb8] sm:$0xff] %v347
                  %v349 = vld [vmem:[%s299 + $0x180] sm:$0xff]
                  %350 = vst [vmem:[%s300 + $0xc0] sm:$0xff] %v349
                  %v351 = vld [vmem:[%s299 + $0x190] sm:$0xff]
                  %352 = vst [vmem:[%s300 + $0xc8] sm:$0xff] %v351
                  %v353 = vld [vmem:[%s299 + $0x1a0] sm:$0xff]
                  %354 = vst [vmem:[%s300 + $0xd0] sm:$0xff] %v353
                  %v355 = vld [vmem:[%s299 + $0x1b0] sm:$0xff]
                  %356 = vst [vmem:[%s300 + $0xd8] sm:$0xff] %v355
                  %v357 = vld [vmem:[%s299 + $0x1c0] sm:$0xff]
                  %358 = vst [vmem:[%s300 + $0xe0] sm:$0xff] %v357
                  %v359 = vld [vmem:[%s299 + $0x1d0] sm:$0xff]
                  %360 = vst [vmem:[%s300 + $0xe8] sm:$0xff] %v359
                  %v361 = vld [vmem:[%s299 + $0x1e0] sm:$0xff]
                  %362 = vst [vmem:[%s300 + $0xf0] sm:$0xff] %v361
                  %v363 = vld [vmem:[%s299 + $0x1f0] sm:$0xff]
                  %364 = vst [vmem:[%s300 + $0xf8] sm:$0xff] %v363
                $region52: #{protein_segmenter2_forward.17} parent=46 // loop_footer
                  %s298 = sadd.s32 1, %s294
                $region53: #{protein_segmenter2_forward.17} parent=46 // loop_footer_branch
                  %293 = sbr.rel target = $region49
                $region54: #{protein_segmenter2_forward.17} parent=46 // loop_exit
                  _
              $region47: #{protein_segmenter2_forward.17} parent=31 // pred_fallthru
                _
              // Predicated region
              $region55: #{protein_segmenter2_forward.17} parent=31 // pred_check
                _
              $region56: #{protein_segmenter2_forward.17} parent=31 // pred_check_branch
                %366 = sbr.rel target = $region58
              $region57: #{protein_segmenter2_forward.17} parent=31 // pred_region
                _
              $region58: #{protein_segmenter2_forward.17} parent=31 // pred_fallthru
                _
            $region32: #{protein_segmenter2_forward.17} parent=27 // pred_fallthru
              _
            // Predicated region
            $region33: #{protein_segmenter2_forward.17} parent=27 // pred_check
              _
            $region34: #{protein_segmenter2_forward.17} parent=27 // pred_check_branch
              %216 = sbr.rel target = $region36
            $region35: #{protein_segmenter2_forward.17} parent=27 // pred_region
              %s218 = ssub.s32 256, 1
              loop: start=0, step=1, limit=1
              $region37: #{protein_segmenter2_forward.17} parent=35 // loop_pre_header
                _
              $region38: #{protein_segmenter2_forward.17} parent=35 // loop_header
                %s220 = sphi 0, %s224
                %p221 = scmp.ge.s32.totalorder %s220, 1
                %s225 = sphi %s210, %s210
                %s226 = sphi %s204, %s204
              $region39: #{protein_segmenter2_forward.17} parent=35 // loop_header_branch
                %223 = sbr.rel (%p221) target = $region43
              $region40: #{protein_segmenter2_forward.17} parent=35 // loop_body
                %v227 = vld [vmem:[%s225] sm:%s218]
                %228 = vst [vmem:[%s226] sm:%s218] %v227
                %v229 = vld [vmem:[%s225 + $0x10] sm:%s218]
                %230 = vst [vmem:[%s226 + $0x8] sm:%s218] %v229
                %v231 = vld [vmem:[%s225 + $0x20] sm:%s218]
                %232 = vst [vmem:[%s226 + $0x10] sm:%s218] %v231
                %v233 = vld [vmem:[%s225 + $0x30] sm:%s218]
                %234 = vst [vmem:[%s226 + $0x18] sm:%s218] %v233
                %v235 = vld [vmem:[%s225 + $0x40] sm:%s218]
                %236 = vst [vmem:[%s226 + $0x20] sm:%s218] %v235
                %v237 = vld [vmem:[%s225 + $0x50] sm:%s218]
                %238 = vst [vmem:[%s226 + $0x28] sm:%s218] %v237
                %v239 = vld [vmem:[%s225 + $0x60] sm:%s218]
                %240 = vst [vmem:[%s226 + $0x30] sm:%s218] %v239
                %v241 = vld [vmem:[%s225 + $0x70] sm:%s218]
                %242 = vst [vmem:[%s226 + $0x38] sm:%s218] %v241
                %v243 = vld [vmem:[%s225 + $0x80] sm:%s218]
                %244 = vst [vmem:[%s226 + $0x40] sm:%s218] %v243
                %v245 = vld [vmem:[%s225 + $0x90] sm:%s218]
                %246 = vst [vmem:[%s226 + $0x48] sm:%s218] %v245
                %v247 = vld [vmem:[%s225 + $0xa0] sm:%s218]
                %248 = vst [vmem:[%s226 + $0x50] sm:%s218] %v247
                %v249 = vld [vmem:[%s225 + $0xb0] sm:%s218]
                %250 = vst [vmem:[%s226 + $0x58] sm:%s218] %v249
                %v251 = vld [vmem:[%s225 + $0xc0] sm:%s218]
                %252 = vst [vmem:[%s226 + $0x60] sm:%s218] %v251
                %v253 = vld [vmem:[%s225 + $0xd0] sm:%s218]
                %254 = vst [vmem:[%s226 + $0x68] sm:%s218] %v253
                %v255 = vld [vmem:[%s225 + $0xe0] sm:%s218]
                %256 = vst [vmem:[%s226 + $0x70] sm:%s218] %v255
                %v257 = vld [vmem:[%s225 + $0xf0] sm:%s218]
                %258 = vst [vmem:[%s226 + $0x78] sm:%s218] %v257
                %v259 = vld [vmem:[%s225 + $0x100] sm:%s218]
                %260 = vst [vmem:[%s226 + $0x80] sm:%s218] %v259
                %v261 = vld [vmem:[%s225 + $0x110] sm:%s218]
                %262 = vst [vmem:[%s226 + $0x88] sm:%s218] %v261
                %v263 = vld [vmem:[%s225 + $0x120] sm:%s218]
                %264 = vst [vmem:[%s226 + $0x90] sm:%s218] %v263
                %v265 = vld [vmem:[%s225 + $0x130] sm:%s218]
                %266 = vst [vmem:[%s226 + $0x98] sm:%s218] %v265
                %v267 = vld [vmem:[%s225 + $0x140] sm:%s218]
                %268 = vst [vmem:[%s226 + $0xa0] sm:%s218] %v267
                %v269 = vld [vmem:[%s225 + $0x150] sm:%s218]
                %270 = vst [vmem:[%s226 + $0xa8] sm:%s218] %v269
                %v271 = vld [vmem:[%s225 + $0x160] sm:%s218]
                %272 = vst [vmem:[%s226 + $0xb0] sm:%s218] %v271
                %v273 = vld [vmem:[%s225 + $0x170] sm:%s218]
                %274 = vst [vmem:[%s226 + $0xb8] sm:%s218] %v273
                %v275 = vld [vmem:[%s225 + $0x180] sm:%s218]
                %276 = vst [vmem:[%s226 + $0xc0] sm:%s218] %v275
                %v277 = vld [vmem:[%s225 + $0x190] sm:%s218]
                %278 = vst [vmem:[%s226 + $0xc8] sm:%s218] %v277
                %v279 = vld [vmem:[%s225 + $0x1a0] sm:%s218]
                %280 = vst [vmem:[%s226 + $0xd0] sm:%s218] %v279
                %v281 = vld [vmem:[%s225 + $0x1b0] sm:%s218]
                %282 = vst [vmem:[%s226 + $0xd8] sm:%s218] %v281
                %v283 = vld [vmem:[%s225 + $0x1c0] sm:%s218]
                %284 = vst [vmem:[%s226 + $0xe0] sm:%s218] %v283
                %v285 = vld [vmem:[%s225 + $0x1d0] sm:%s218]
                %286 = vst [vmem:[%s226 + $0xe8] sm:%s218] %v285
                %v287 = vld [vmem:[%s225 + $0x1e0] sm:%s218]
                %288 = vst [vmem:[%s226 + $0xf0] sm:%s218] %v287
                %v289 = vld [vmem:[%s225 + $0x1f0] sm:%s218]
                %290 = vst [vmem:[%s226 + $0xf8] sm:%s218] %v289
              $region41: #{protein_segmenter2_forward.17} parent=35 // loop_footer
                %s224 = sadd.s32 1, %s220
              $region42: #{protein_segmenter2_forward.17} parent=35 // loop_footer_branch
                %219 = sbr.rel target = $region38
              $region43: #{protein_segmenter2_forward.17} parent=35 // loop_exit
                _
            $region36: #{protein_segmenter2_forward.17} parent=27 // pred_fallthru
              _
          $region28: #{protein_segmenter2_forward.17} parent=23 // pred_fallthru
            _
          %367 = vnop
        $region24: #{protein_segmenter2_forward.17} parent=19 // pred_fallthru
          _
        // Predicated region
        $region59: #{protein_segmenter2_forward.17} parent=19 // pred_check
          %p368 = pneg %p71
        $region60: #{protein_segmenter2_forward.17} parent=19 // pred_check_branch
          %370 = sbr.rel (%p368) target = $region62
        $region61: #{protein_segmenter2_forward.17} parent=19 // pred_region
          %s371 = smul.u32 32, %s19
          %p372 = scmp.lt.s32.totalorder %s371, 63
          %s373 = scalar_select %p372, %s371, 63
          %s374 = smul.addr %s373, 4
          %s375 = scalar_lea.vmem %s1, %s374
          %s376 = smul.u32 32, %s19
        $region62: #{protein_segmenter2_forward.17} parent=19 // pred_fallthru
          _
        // Predicated region
        $region63: #{protein_segmenter2_forward.17} parent=19 // pred_check
          %p377 = pneg %p97
        $region64: #{protein_segmenter2_forward.17} parent=19 // pred_check_branch
          %379 = sbr.rel (%p377) target = $region66
        $region65: #{protein_segmenter2_forward.17} parent=19 // pred_region
          %s380 = smul.u32 32, %s18
          %p381 = scmp.lt.s32.totalorder %s380, 63
          %s382 = scalar_select %p381, %s380, 63
          %s383 = smul.addr %s382, 4
          %s384 = scalar_lea.vmem %s2, %s383
          %s385 = smul.u32 32, %s18
        $region66: #{protein_segmenter2_forward.17} parent=19 // pred_fallthru
          _
        // Predicated region
        $region67: #{protein_segmenter2_forward.17} parent=19 // pred_check
          %p386 = pneg %p123
        $region68: #{protein_segmenter2_forward.17} parent=19 // pred_check_branch
          %388 = sbr.rel (%p386) target = $region70
        $region69: #{protein_segmenter2_forward.17} parent=19 // pred_region
          %s389 = smul.u32 32, %s18
          %p390 = scmp.lt.s32.totalorder %s389, 63
          %s391 = scalar_select %p390, %s389, 63
          %s392 = smul.addr %s391, 8
          %s393 = scalar_lea.vmem %s3, %s392
          %s394 = smul.u32 32, %s18
        $region70: #{protein_segmenter2_forward.17} parent=19 // pred_fallthru
          _
      $region20: #{protein_segmenter2_forward.17} parent=5 // pred_fallthru
        _
      %p395 = scmp.le.s32.totalorder 1, %s11
      %p396 = scmp.lt.s32.totalorder %s11, 5
      %p397 = pnand %p395, %p396
      %p398 = pneg %p397
      // Predicated region
      $region71: #{protein_segmenter2_forward.17} parent=5 // pred_check
        _
      $region72: #{protein_segmenter2_forward.17} parent=5 // pred_check_branch
        %400 = sbr.rel (%p397) target = $region74
      $region73: #{protein_segmenter2_forward.17} parent=5 // pred_region
        %s401 = ssub.s32 %s11, 1
        %s402 = sand.u32 %s38, 1
        %s403 = sand.u32 %s38, 1
        %s404 = smul.addr %s403, 256
        %s405 = scalar_lea.vmem [#allocation3], %s404
        // Predicated region
        $region75: #{protein_segmenter2_forward.17} parent=73 // pred_check
          %p406 = pneg %p51
        $region76: #{protein_segmenter2_forward.17} parent=73 // pred_check_branch
          %408 = sbr.rel (%p406) target = $region78
        $region77: #{protein_segmenter2_forward.17} parent=73 // pred_region
          _
        $region78: #{protein_segmenter2_forward.17} parent=73 // pred_fallthru
          _
        %s409 = sand.u32 %s38, 1
        %s410 = sand.u32 %s38, 1
        %s411 = smul.addr %s410, 256
        %s412 = scalar_lea.vmem [#allocation3], %s411
        %p413 = pneg %p51
        %p414 = pneg %p48
        %s415 = smul.u32 32, %s21
        %p416 = scmp.lt.s32.totalorder %s415, 63
        %s417 = scalar_select %p416, %s415, 63
        %s418 = smul.addr %s417, 4
        %s419 = scalar_lea.vmem %s1, %s418
        %p420 = pneg %p77
        %p421 = pneg %p74
        %s422 = smul.u32 32, %s20
        %p423 = scmp.lt.s32.totalorder %s422, 63
        %s424 = scalar_select %p423, %s422, 63
        %s425 = smul.addr %s424, 4
        %s426 = scalar_lea.vmem %s2, %s425
        %p427 = pneg %p103
        %p428 = pneg %p100
        %s429 = smul.u32 32, %s20
        %p430 = scmp.lt.s32.totalorder %s429, 63
        %s431 = scalar_select %p430, %s429, 63
        %s432 = smul.addr %s431, 8
        %s433 = scalar_lea.vmem %s3, %s432
        %p434 = pneg %p129
        %p435 = pneg %p126
        %p436 = pneg %p150
        %p437 = pneg %p147
        %p438 = pneg %p176
        %p439 = pneg %p173
        %s440 = smul.u32 32, %s20
        %p441 = scmp.lt.s32.totalorder %s440, 63
        %s442 = scalar_select %p441, %s440, 63
        %s443 = smul.addr %s442, 8
        %s444 = scalar_lea.vmem %s5, %s443
        %s445 = smul.u32 32, %s20
        %s446 = smul.u32 2, %s21
        %s447 = smul.u32 32, %s21
        %p448 = scmp.lt.s32.totalorder %s447, 63
        %s449 = scalar_select %p448, %s447, 63
        %s450 = smul.addr %s449, 4
        %s451 = scalar_lea.vmem %s1, %s450
        %s452 = smul.u32 32, %s21
        %s453 = smul.u32 32, %s20
        %p454 = scmp.lt.s32.totalorder %s453, 63
        %s455 = scalar_select %p454, %s453, 63
        %s456 = smul.addr %s455, 4
        %s457 = scalar_lea.vmem %s2, %s456
        %s458 = smul.u32 32, %s20
        %s459 = smul.u32 32, %s20
        %p460 = scmp.lt.s32.totalorder %s459, 63
        %s461 = scalar_select %p460, %s459, 63
        %s462 = smul.addr %s461, 8
        %s463 = scalar_lea.vmem %s3, %s462
        %s464 = smul.u32 32, %s20
        %s465 = smul.u32 32, %s20
        %p466 = scmp.lt.s32.totalorder %s465, 63
        %s467 = scalar_select %p466, %s465, 63
        %s468 = smul.addr %s467, 8
        %s469 = scalar_lea.vmem %s5, %s468
        %s470 = smul.u32 32, %s20
        %p471 = scmp.eq.s32.totalorder %s21, 0
        // Predicated region
        $region79: #{protein_segmenter2_forward.17} parent=73 // pred_check
          %p472 = pneg %p471
        $region80: #{protein_segmenter2_forward.17} parent=73 // pred_check_branch
          %474 = sbr.rel (%p472) target = $region82
        $region81: #{protein_segmenter2_forward.17} parent=73 // pred_region
          %475 = vst [vmem:[#allocation2] sm:$0xff] 0.0
          %476 = vst [vmem:[#allocation2 + $0x8] sm:$0xff] 0.0
          %477 = vst [vmem:[#allocation2 + $0x10] sm:$0xff] 0.0
          %478 = vst [vmem:[#allocation2 + $0x18] sm:$0xff] 0.0
          %479 = vst [vmem:[#allocation2 + $0x20] sm:$0xff] 0.0
          %480 = vst [vmem:[#allocation2 + $0x28] sm:$0xff] 0.0
          %481 = vst [vmem:[#allocation2 + $0x30] sm:$0xff] 0.0
          %482 = vst [vmem:[#allocation2 + $0x38] sm:$0xff] 0.0
          %483 = vst [vmem:[#allocation2 + $0x40] sm:$0xff] 0.0
          %484 = vst [vmem:[#allocation2 + $0x48] sm:$0xff] 0.0
          %485 = vst [vmem:[#allocation2 + $0x50] sm:$0xff] 0.0
          %486 = vst [vmem:[#allocation2 + $0x58] sm:$0xff] 0.0
          %487 = vst [vmem:[#allocation2 + $0x60] sm:$0xff] 0.0
          %488 = vst [vmem:[#allocation2 + $0x68] sm:$0xff] 0.0
          %489 = vst [vmem:[#allocation2 + $0x70] sm:$0xff] 0.0
          %490 = vst [vmem:[#allocation2 + $0x78] sm:$0xff] 0.0
          %491 = vst [vmem:[#allocation2 + $0x80] sm:$0xff] 0.0
          %492 = vst [vmem:[#allocation2 + $0x88] sm:$0xff] 0.0
          %493 = vst [vmem:[#allocation2 + $0x90] sm:$0xff] 0.0
          %494 = vst [vmem:[#allocation2 + $0x98] sm:$0xff] 0.0
          %495 = vst [vmem:[#allocation2 + $0xa0] sm:$0xff] 0.0
          %496 = vst [vmem:[#allocation2 + $0xa8] sm:$0xff] 0.0
          %497 = vst [vmem:[#allocation2 + $0xb0] sm:$0xff] 0.0
          %498 = vst [vmem:[#allocation2 + $0xb8] sm:$0xff] 0.0
          %499 = vst [vmem:[#allocation2 + $0xc0] sm:$0xff] 0.0
          %500 = vst [vmem:[#allocation2 + $0xc8] sm:$0xff] 0.0
          %501 = vst [vmem:[#allocation2 + $0xd0] sm:$0xff] 0.0
          %502 = vst [vmem:[#allocation2 + $0xd8] sm:$0xff] 0.0
          %503 = vst [vmem:[#allocation2 + $0xe0] sm:$0xff] 0.0
          %504 = vst [vmem:[#allocation2 + $0xe8] sm:$0xff] 0.0
          %505 = vst [vmem:[#allocation2 + $0xf0] sm:$0xff] 0.0
          %506 = vst [vmem:[#allocation2 + $0xf8] sm:$0xff] 0.0
        $region82: #{protein_segmenter2_forward.17} parent=73 // pred_fallthru
          _
        %v507 = vld [vmem:[#allocation2] sm:$0xff]
        %v508 = vld [vmem:[#allocation2 + $0x8] sm:$0xff]
        %v509 = vld [vmem:[#allocation2 + $0x10] sm:$0xff]
        %v510 = vld [vmem:[#allocation2 + $0x18] sm:$0xff]
        %v511 = vld [vmem:[#allocation2 + $0x20] sm:$0xff]
        %v512 = vld [vmem:[#allocation2 + $0x28] sm:$0xff]
        %v513 = vld [vmem:[#allocation2 + $0x30] sm:$0xff]
        %v514 = vld [vmem:[#allocation2 + $0x38] sm:$0xff]
        %v515 = vld [vmem:[#allocation2 + $0x40] sm:$0xff]
        %v516 = vld [vmem:[#allocation2 + $0x48] sm:$0xff]
        %v517 = vld [vmem:[#allocation2 + $0x50] sm:$0xff]
        %v518 = vld [vmem:[#allocation2 + $0x58] sm:$0xff]
        %v519 = vld [vmem:[#allocation2 + $0x60] sm:$0xff]
        %v520 = vld [vmem:[#allocation2 + $0x68] sm:$0xff]
        %v521 = vld [vmem:[#allocation2 + $0x70] sm:$0xff]
        %v522 = vld [vmem:[#allocation2 + $0x78] sm:$0xff]
        %v523 = vld [vmem:[#allocation2 + $0x80] sm:$0xff]
        %v524 = vld [vmem:[#allocation2 + $0x88] sm:$0xff]
        %v525 = vld [vmem:[#allocation2 + $0x90] sm:$0xff]
        %v526 = vld [vmem:[#allocation2 + $0x98] sm:$0xff]
        %v527 = vld [vmem:[#allocation2 + $0xa0] sm:$0xff]
        %v528 = vld [vmem:[#allocation2 + $0xa8] sm:$0xff]
        %v529 = vld [vmem:[#allocation2 + $0xb0] sm:$0xff]
        %v530 = vld [vmem:[#allocation2 + $0xb8] sm:$0xff]
        %v531 = vld [vmem:[#allocation2 + $0xc0] sm:$0xff]
        %v532 = vld [vmem:[#allocation2 + $0xc8] sm:$0xff]
        %v533 = vld [vmem:[#allocation2 + $0xd0] sm:$0xff]
        %v534 = vld [vmem:[#allocation2 + $0xd8] sm:$0xff]
        %v535 = vld [vmem:[#allocation2 + $0xe0] sm:$0xff]
        %v536 = vld [vmem:[#allocation2 + $0xe8] sm:$0xff]
        %v537 = vld [vmem:[#allocation2 + $0xf0] sm:$0xff]
        %v538 = vld [vmem:[#allocation2 + $0xf8] sm:$0xff]
        %v539 = vld [vmem:[%s405] sm:$0xff]
        %v540 = vld [vmem:[%s405 + $0x8] sm:$0xff]
        %v541 = vld [vmem:[%s405 + $0x10] sm:$0xff]
        %v542 = vld [vmem:[%s405 + $0x18] sm:$0xff]
        %v543 = vld [vmem:[%s405 + $0x20] sm:$0xff]
        %v544 = vld [vmem:[%s405 + $0x28] sm:$0xff]
        %v545 = vld [vmem:[%s405 + $0x30] sm:$0xff]
        %v546 = vld [vmem:[%s405 + $0x38] sm:$0xff]
        %v547 = vld [vmem:[%s405 + $0x40] sm:$0xff]
        %v548 = vld [vmem:[%s405 + $0x48] sm:$0xff]
        %v549 = vld [vmem:[%s405 + $0x50] sm:$0xff]
        %v550 = vld [vmem:[%s405 + $0x58] sm:$0xff]
        %v551 = vld [vmem:[%s405 + $0x60] sm:$0xff]
        %v552 = vld [vmem:[%s405 + $0x68] sm:$0xff]
        %v553 = vld [vmem:[%s405 + $0x70] sm:$0xff]
        %v554 = vld [vmem:[%s405 + $0x78] sm:$0xff]
        %v555 = vld [vmem:[%s405 + $0x80] sm:$0xff]
        %v556 = vld [vmem:[%s405 + $0x88] sm:$0xff]
        %v557 = vld [vmem:[%s405 + $0x90] sm:$0xff]
        %v558 = vld [vmem:[%s405 + $0x98] sm:$0xff]
        %v559 = vld [vmem:[%s405 + $0xa0] sm:$0xff]
        %v560 = vld [vmem:[%s405 + $0xa8] sm:$0xff]
        %v561 = vld [vmem:[%s405 + $0xb0] sm:$0xff]
        %v562 = vld [vmem:[%s405 + $0xb8] sm:$0xff]
        %v563 = vld [vmem:[%s405 + $0xc0] sm:$0xff]
        %v564 = vld [vmem:[%s405 + $0xc8] sm:$0xff]
        %v565 = vld [vmem:[%s405 + $0xd0] sm:$0xff]
        %v566 = vld [vmem:[%s405 + $0xd8] sm:$0xff]
        %v567 = vld [vmem:[%s405 + $0xe0] sm:$0xff]
        %v568 = vld [vmem:[%s405 + $0xe8] sm:$0xff]
        %v569 = vld [vmem:[%s405 + $0xf0] sm:$0xff]
        %v570 = vld [vmem:[%s405 + $0xf8] sm:$0xff]
        %v571 = vld [vmem:[%s451] sm:$0xf]
        %v572 = vld [vmem:[%s451 + $0x4] sm:$0xf]
        %v573 = vld [vmem:[%s451 + $0x8] sm:$0xf]
        %v574 = vld [vmem:[%s451 + $0xc] sm:$0xf]
        %v575 = vld [vmem:[%s451 + $0x10] sm:$0xf]
        %v576 = vld [vmem:[%s451 + $0x14] sm:$0xf]
        %v577 = vld [vmem:[%s451 + $0x18] sm:$0xf]
        %v578 = vld [vmem:[%s451 + $0x1c] sm:$0xf]
        %v579 = vld [vmem:[%s451 + $0x20] sm:$0xf]
        %v580 = vld [vmem:[%s451 + $0x24] sm:$0xf]
        %v581 = vld [vmem:[%s451 + $0x28] sm:$0xf]
        %v582 = vld [vmem:[%s451 + $0x2c] sm:$0xf]
        %v583 = vld [vmem:[%s451 + $0x30] sm:$0xf]
        %v584 = vld [vmem:[%s451 + $0x34] sm:$0xf]
        %v585 = vld [vmem:[%s451 + $0x38] sm:$0xf]
        %v586 = vld [vmem:[%s451 + $0x3c] sm:$0xf]
        %v587 = vld [vmem:[%s451 + $0x40] sm:$0xf]
        %v588 = vld [vmem:[%s451 + $0x44] sm:$0xf]
        %v589 = vld [vmem:[%s451 + $0x48] sm:$0xf]
        %v590 = vld [vmem:[%s451 + $0x4c] sm:$0xf]
        %v591 = vld [vmem:[%s451 + $0x50] sm:$0xf]
        %v592 = vld [vmem:[%s451 + $0x54] sm:$0xf]
        %v593 = vld [vmem:[%s451 + $0x58] sm:$0xf]
        %v594 = vld [vmem:[%s451 + $0x5c] sm:$0xf]
        %v595 = vld [vmem:[%s451 + $0x60] sm:$0xf]
        %v596 = vld [vmem:[%s451 + $0x64] sm:$0xf]
        %v597 = vld [vmem:[%s451 + $0x68] sm:$0xf]
        %v598 = vld [vmem:[%s451 + $0x6c] sm:$0xf]
        %v599 = vld [vmem:[%s451 + $0x70] sm:$0xf]
        %v600 = vld [vmem:[%s451 + $0x74] sm:$0xf]
        %v601 = vld [vmem:[%s451 + $0x78] sm:$0xf]
        %v602 = vld [vmem:[%s451 + $0x7c] sm:$0xf]
        %v635 = vunpack.c.l.b16 %v539
        %v636 = vunpack.c.h.b16 %v539
        %v637 = vunpack.c.l.b16 %v540
        %v638 = vunpack.c.h.b16 %v540
        %v639 = vunpack.c.l.b16 %v541
        %v640 = vunpack.c.h.b16 %v541
        %v641 = vunpack.c.l.b16 %v542
        %v642 = vunpack.c.h.b16 %v542
        %v643 = vunpack.c.l.b16 %v543
        %v644 = vunpack.c.h.b16 %v543
        %v645 = vunpack.c.l.b16 %v544
        %v646 = vunpack.c.h.b16 %v544
        %v647 = vunpack.c.l.b16 %v545
        %v648 = vunpack.c.h.b16 %v545
        %v649 = vunpack.c.l.b16 %v546
        %v650 = vunpack.c.h.b16 %v546
        %v651 = vunpack.c.l.b16 %v547
        %v652 = vunpack.c.h.b16 %v547
        %v653 = vunpack.c.l.b16 %v548
        %v654 = vunpack.c.h.b16 %v548
        %v655 = vunpack.c.l.b16 %v549
        %v656 = vunpack.c.h.b16 %v549
        %v657 = vunpack.c.l.b16 %v550
        %v658 = vunpack.c.h.b16 %v550
        %v659 = vunpack.c.l.b16 %v551
        %v660 = vunpack.c.h.b16 %v551
        %v661 = vunpack.c.l.b16 %v552
        %v662 = vunpack.c.h.b16 %v552
        %v663 = vunpack.c.l.b16 %v553
        %v664 = vunpack.c.h.b16 %v553
        %v665 = vunpack.c.l.b16 %v554
        %v666 = vunpack.c.h.b16 %v554
        %v667 = vunpack.c.l.b16 %v555
        %v668 = vunpack.c.h.b16 %v555
        %v669 = vunpack.c.l.b16 %v556
        %v670 = vunpack.c.h.b16 %v556
        %v671 = vunpack.c.l.b16 %v557
        %v672 = vunpack.c.h.b16 %v557
        %v673 = vunpack.c.l.b16 %v558
        %v674 = vunpack.c.h.b16 %v558
        %v675 = vunpack.c.l.b16 %v559
        %v676 = vunpack.c.h.b16 %v559
        %v677 = vunpack.c.l.b16 %v560
        %v678 = vunpack.c.h.b16 %v560
        %v679 = vunpack.c.l.b16 %v561
        %v680 = vunpack.c.h.b16 %v561
        %v681 = vunpack.c.l.b16 %v562
        %v682 = vunpack.c.h.b16 %v562
        %v683 = vunpack.c.l.b16 %v563
        %v684 = vunpack.c.h.b16 %v563
        %v685 = vunpack.c.l.b16 %v564
        %v686 = vunpack.c.h.b16 %v564
        %v687 = vunpack.c.l.b16 %v565
        %v688 = vunpack.c.h.b16 %v565
        %v689 = vunpack.c.l.b16 %v566
        %v690 = vunpack.c.h.b16 %v566
        %v691 = vunpack.c.l.b16 %v567
        %v692 = vunpack.c.h.b16 %v567
        %v693 = vunpack.c.l.b16 %v568
        %v694 = vunpack.c.h.b16 %v568
        %v695 = vunpack.c.l.b16 %v569
        %v696 = vunpack.c.h.b16 %v569
        %v697 = vunpack.c.l.b16 %v570
        %v698 = vunpack.c.h.b16 %v570
        %v699 = vpack.c.b16 %v637, %v635
        %v700 = vpack.c.b16 %v638, %v636
        %v701 = vpack.c.b16 %v641, %v639
        %v702 = vpack.c.b16 %v642, %v640
        %v703 = vpack.c.b16 %v645, %v643
        %v704 = vpack.c.b16 %v646, %v644
        %v705 = vpack.c.b16 %v649, %v647
        %v706 = vpack.c.b16 %v650, %v648
        %v707 = vpack.c.b16 %v653, %v651
        %v708 = vpack.c.b16 %v654, %v652
        %v709 = vpack.c.b16 %v657, %v655
        %v710 = vpack.c.b16 %v658, %v656
        %v711 = vpack.c.b16 %v661, %v659
        %v712 = vpack.c.b16 %v662, %v660
        %v713 = vpack.c.b16 %v665, %v663
        %v714 = vpack.c.b16 %v666, %v664
        %v715 = vpack.c.b16 %v669, %v667
        %v716 = vpack.c.b16 %v670, %v668
        %v717 = vpack.c.b16 %v673, %v671
        %v718 = vpack.c.b16 %v674, %v672
        %v719 = vpack.c.b16 %v677, %v675
        %v720 = vpack.c.b16 %v678, %v676
        %v721 = vpack.c.b16 %v681, %v679
        %v722 = vpack.c.b16 %v682, %v680
        %v723 = vpack.c.b16 %v685, %v683
        %v724 = vpack.c.b16 %v686, %v684
        %v725 = vpack.c.b16 %v689, %v687
        %v726 = vpack.c.b16 %v690, %v688
        %v727 = vpack.c.b16 %v693, %v691
        %v728 = vpack.c.b16 %v694, %v692
        %v729 = vpack.c.b16 %v697, %v695
        %v730 = vpack.c.b16 %v698, %v696
        %v795 = vunpack.c.l.b16 %v571
        %v796 = vunpack.c.l.b16 %v572
        %v797 = vunpack.c.l.b16 %v573
        %v798 = vunpack.c.l.b16 %v574
        %v799 = vunpack.c.l.b16 %v575
        %v800 = vunpack.c.l.b16 %v576
        %v801 = vunpack.c.l.b16 %v577
        %v802 = vunpack.c.l.b16 %v578
        %v803 = vunpack.c.l.b16 %v579
        %v804 = vunpack.c.l.b16 %v580
        %v805 = vunpack.c.l.b16 %v581
        %v806 = vunpack.c.l.b16 %v582
        %v807 = vunpack.c.l.b16 %v583
        %v808 = vunpack.c.l.b16 %v584
        %v809 = vunpack.c.l.b16 %v585
        %v810 = vunpack.c.l.b16 %v586
        %v811 = vunpack.c.l.b16 %v587
        %v812 = vunpack.c.l.b16 %v588
        %v813 = vunpack.c.l.b16 %v589
        %v814 = vunpack.c.l.b16 %v590
        %v815 = vunpack.c.l.b16 %v591
        %v816 = vunpack.c.l.b16 %v592
        %v817 = vunpack.c.l.b16 %v593
        %v818 = vunpack.c.l.b16 %v594
        %v819 = vunpack.c.l.b16 %v595
        %v820 = vunpack.c.l.b16 %v596
        %v821 = vunpack.c.l.b16 %v597
        %v822 = vunpack.c.l.b16 %v598
        %v823 = vunpack.c.l.b16 %v599
        %v824 = vunpack.c.l.b16 %v600
        %v825 = vunpack.c.l.b16 %v601
        %v826 = vunpack.c.l.b16 %v602
        %v827 = vpack.c.b16 %v796, %v795
        %v828 = vpack.c.b16 %v798, %v797
        %v829 = vpack.c.b16 %v800, %v799
        %v830 = vpack.c.b16 %v802, %v801
        %v831 = vpack.c.b16 %v804, %v803
        %v832 = vpack.c.b16 %v806, %v805
        %v833 = vpack.c.b16 %v808, %v807
        %v834 = vpack.c.b16 %v810, %v809
        %v835 = vpack.c.b16 %v812, %v811
        %v836 = vpack.c.b16 %v814, %v813
        %v837 = vpack.c.b16 %v816, %v815
        %v838 = vpack.c.b16 %v818, %v817
        %v839 = vpack.c.b16 %v820, %v819
        %v840 = vpack.c.b16 %v822, %v821
        %v841 = vpack.c.b16 %v824, %v823
        %v842 = vpack.c.b16 %v826, %v825
        %859 = vmatpush.bf16.msra.mxu0 %v834
        %860 = vmatpush.bf16.msra.mxu0 %v833
        %861 = vmatpush.bf16.msra.mxu0 %v832
        %862 = vmatpush.bf16.msra.mxu0 %v831
        %863 = vmatpush.bf16.msra.mxu0 %v830
        %864 = vmatpush.bf16.msra.mxu0 %v829
        %865 = vmatpush.bf16.msra.mxu0 %v828
        %866 = vmatpush.bf16.msra.mxu0 %v827
        %867 = vmatmul.bf16.gmra.mxu0 %v699
        %v868 = vpop.f32.mrf.mxu0
        %v869 = vadd.f32 0.0, %v868
        %v870 = vpop.f32.mrf.mxu0
        %v871 = vadd.f32 0.0, %v870
        %872 = vmatmul.bf16.gmra.mxu0 %v701
        %v873 = vpop.f32.mrf.mxu0
        %v874 = vadd.f32 0.0, %v873
        %v875 = vpop.f32.mrf.mxu0
        %v876 = vadd.f32 0.0, %v875
        %877 = vmatmul.bf16.gmra.mxu0 %v703
        %v878 = vpop.f32.mrf.mxu0
        %v879 = vadd.f32 0.0, %v878
        %v880 = vpop.f32.mrf.mxu0
        %v881 = vadd.f32 0.0, %v880
        %882 = vmatmul.bf16.gmra.mxu0 %v705
        %v883 = vpop.f32.mrf.mxu0
        %v884 = vadd.f32 0.0, %v883
        %v885 = vpop.f32.mrf.mxu0
        %v886 = vadd.f32 0.0, %v885
        %887 = vmatmul.bf16.gmra.mxu0 %v707
        %v888 = vpop.f32.mrf.mxu0
        %v889 = vadd.f32 0.0, %v888
        %v890 = vpop.f32.mrf.mxu0
        %v891 = vadd.f32 0.0, %v890
        %892 = vmatmul.bf16.gmra.mxu0 %v709
        %v893 = vpop.f32.mrf.mxu0
        %v894 = vadd.f32 0.0, %v893
        %v895 = vpop.f32.mrf.mxu0
        %v896 = vadd.f32 0.0, %v895
        %897 = vmatmul.bf16.gmra.mxu0 %v711
        %v898 = vpop.f32.mrf.mxu0
        %v899 = vadd.f32 0.0, %v898
        %v900 = vpop.f32.mrf.mxu0
        %v901 = vadd.f32 0.0, %v900
        %902 = vmatmul.bf16.gmra.mxu0 %v713
        %v903 = vpop.f32.mrf.mxu0
        %v904 = vadd.f32 0.0, %v903
        %v905 = vpop.f32.mrf.mxu0
        %v906 = vadd.f32 0.0, %v905
        %907 = vmatmul.bf16.gmra.mxu0 %v715
        %v908 = vpop.f32.mrf.mxu0
        %v909 = vadd.f32 0.0, %v908
        %v910 = vpop.f32.mrf.mxu0
        %v911 = vadd.f32 0.0, %v910
        %912 = vmatmul.bf16.gmra.mxu0 %v717
        %v913 = vpop.f32.mrf.mxu0
        %v914 = vadd.f32 0.0, %v913
        %v915 = vpop.f32.mrf.mxu0
        %v916 = vadd.f32 0.0, %v915
        %917 = vmatmul.bf16.gmra.mxu0 %v719
        %v918 = vpop.f32.mrf.mxu0
        %v919 = vadd.f32 0.0, %v918
        %v920 = vpop.f32.mrf.mxu0
        %v921 = vadd.f32 0.0, %v920
        %922 = vmatmul.bf16.gmra.mxu0 %v721
        %v923 = vpop.f32.mrf.mxu0
        %v924 = vadd.f32 0.0, %v923
        %v925 = vpop.f32.mrf.mxu0
        %v926 = vadd.f32 0.0, %v925
        %927 = vmatmul.bf16.gmra.mxu0 %v723
        %v928 = vpop.f32.mrf.mxu0
        %v929 = vadd.f32 0.0, %v928
        %v930 = vpop.f32.mrf.mxu0
        %v931 = vadd.f32 0.0, %v930
        %932 = vmatmul.bf16.gmra.mxu0 %v725
        %v933 = vpop.f32.mrf.mxu0
        %v934 = vadd.f32 0.0, %v933
        %v935 = vpop.f32.mrf.mxu0
        %v936 = vadd.f32 0.0, %v935
        %937 = vmatmul.bf16.gmra.mxu0 %v727
        %v938 = vpop.f32.mrf.mxu0
        %v939 = vadd.f32 0.0, %v938
        %v940 = vpop.f32.mrf.mxu0
        %v941 = vadd.f32 0.0, %v940
        %942 = vmatmul.bf16.gmra.mxu0 %v729
        %v943 = vpop.f32.mrf.mxu0
        %v944 = vadd.f32 0.0, %v943
        %v945 = vpop.f32.mrf.mxu0
        %v946 = vadd.f32 0.0, %v945
        %947 = vdwg.mxu0
        %948 = vmatpush.bf16.msra.mxu0 %v842
        %949 = vmatpush.bf16.msra.mxu0 %v841
        %950 = vmatpush.bf16.msra.mxu0 %v840
        %951 = vmatpush.bf16.msra.mxu0 %v839
        %952 = vmatpush.bf16.msra.mxu0 %v838
        %953 = vmatpush.bf16.msra.mxu0 %v837
        %954 = vmatpush.bf16.msra.mxu0 %v836
        %955 = vmatpush.bf16.msra.mxu0 %v835
        %956 = vmatmul.bf16.gmra.mxu0 %v700
        %v957 = vpop.f32.mrf.mxu0
        %v958 = vadd.f32 %v869, %v957
        %v959 = vpop.f32.mrf.mxu0
        %v960 = vadd.f32 %v871, %v959
        %961 = vmatmul.bf16.gmra.mxu0 %v702
        %v962 = vpop.f32.mrf.mxu0
        %v963 = vadd.f32 %v874, %v962
        %v964 = vpop.f32.mrf.mxu0
        %v965 = vadd.f32 %v876, %v964
        %966 = vmatmul.bf16.gmra.mxu0 %v704
        %v967 = vpop.f32.mrf.mxu0
        %v968 = vadd.f32 %v879, %v967
        %v969 = vpop.f32.mrf.mxu0
        %v970 = vadd.f32 %v881, %v969
        %971 = vmatmul.bf16.gmra.mxu0 %v706
        %v972 = vpop.f32.mrf.mxu0
        %v973 = vadd.f32 %v884, %v972
        %v974 = vpop.f32.mrf.mxu0
        %v975 = vadd.f32 %v886, %v974
        %976 = vmatmul.bf16.gmra.mxu0 %v708
        %v977 = vpop.f32.mrf.mxu0
        %v978 = vadd.f32 %v889, %v977
        %v979 = vpop.f32.mrf.mxu0
        %v980 = vadd.f32 %v891, %v979
        %981 = vmatmul.bf16.gmra.mxu0 %v710
        %v982 = vpop.f32.mrf.mxu0
        %v983 = vadd.f32 %v894, %v982
        %v984 = vpop.f32.mrf.mxu0
        %v985 = vadd.f32 %v896, %v984
        %986 = vmatmul.bf16.gmra.mxu0 %v712
        %v987 = vpop.f32.mrf.mxu0
        %v988 = vadd.f32 %v899, %v987
        %v989 = vpop.f32.mrf.mxu0
        %v990 = vadd.f32 %v901, %v989
        %991 = vmatmul.bf16.gmra.mxu0 %v714
        %v992 = vpop.f32.mrf.mxu0
        %v993 = vadd.f32 %v904, %v992
        %v994 = vpop.f32.mrf.mxu0
        %v995 = vadd.f32 %v906, %v994
        %996 = vmatmul.bf16.gmra.mxu0 %v716
        %v997 = vpop.f32.mrf.mxu0
        %v998 = vadd.f32 %v909, %v997
        %v999 = vpop.f32.mrf.mxu0
        %v1000 = vadd.f32 %v911, %v999
        %1001 = vmatmul.bf16.gmra.mxu0 %v718
        %v1002 = vpop.f32.mrf.mxu0
        %v1003 = vadd.f32 %v914, %v1002
        %v1004 = vpop.f32.mrf.mxu0
        %v1005 = vadd.f32 %v916, %v1004
        %1006 = vmatmul.bf16.gmra.mxu0 %v720
        %v1007 = vpop.f32.mrf.mxu0
        %v1008 = vadd.f32 %v919, %v1007
        %v1009 = vpop.f32.mrf.mxu0
        %v1010 = vadd.f32 %v921, %v1009
        %1011 = vmatmul.bf16.gmra.mxu0 %v722
        %v1012 = vpop.f32.mrf.mxu0
        %v1013 = vadd.f32 %v924, %v1012
        %v1014 = vpop.f32.mrf.mxu0
        %v1015 = vadd.f32 %v926, %v1014
        %1016 = vmatmul.bf16.gmra.mxu0 %v724
        %v1017 = vpop.f32.mrf.mxu0
        %v1018 = vadd.f32 %v929, %v1017
        %v1019 = vpop.f32.mrf.mxu0
        %v1020 = vadd.f32 %v931, %v1019
        %1021 = vmatmul.bf16.gmra.mxu0 %v726
        %v1022 = vpop.f32.mrf.mxu0
        %v1023 = vadd.f32 %v934, %v1022
        %v1024 = vpop.f32.mrf.mxu0
        %v1025 = vadd.f32 %v936, %v1024
        %1026 = vmatmul.bf16.gmra.mxu0 %v728
        %v1027 = vpop.f32.mrf.mxu0
        %v1028 = vadd.f32 %v939, %v1027
        %v1029 = vpop.f32.mrf.mxu0
        %v1030 = vadd.f32 %v941, %v1029
        %1031 = vmatmul.bf16.gmra.mxu0 %v730
        %v1032 = vpop.f32.mrf.mxu0
        %v1033 = vadd.f32 %v944, %v1032
        %v1034 = vpop.f32.mrf.mxu0
        %v1035 = vadd.f32 %v946, %v1034
        %1036 = vdwg.mxu0
        %v1037 = vadd.f32 %v507, %v958
        %v1038 = vadd.f32 %v508, %v960
        %v1039 = vadd.f32 %v509, %v963
        %v1040 = vadd.f32 %v510, %v965
        %v1041 = vadd.f32 %v511, %v968
        %v1042 = vadd.f32 %v512, %v970
        %v1043 = vadd.f32 %v513, %v973
        %v1044 = vadd.f32 %v514, %v975
        %v1045 = vadd.f32 %v515, %v978
        %v1046 = vadd.f32 %v516, %v980
        %v1047 = vadd.f32 %v517, %v983
        %v1048 = vadd.f32 %v518, %v985
        %v1049 = vadd.f32 %v519, %v988
        %v1050 = vadd.f32 %v520, %v990
        %v1051 = vadd.f32 %v521, %v993
        %v1052 = vadd.f32 %v522, %v995
        %v1053 = vadd.f32 %v523, %v998
        %v1054 = vadd.f32 %v524, %v1000
        %v1055 = vadd.f32 %v525, %v1003
        %v1056 = vadd.f32 %v526, %v1005
        %v1057 = vadd.f32 %v527, %v1008
        %v1058 = vadd.f32 %v528, %v1010
        %v1059 = vadd.f32 %v529, %v1013
        %v1060 = vadd.f32 %v530, %v1015
        %v1061 = vadd.f32 %v531, %v1018
        %v1062 = vadd.f32 %v532, %v1020
        %v1063 = vadd.f32 %v533, %v1023
        %v1064 = vadd.f32 %v534, %v1025
        %v1065 = vadd.f32 %v535, %v1028
        %v1066 = vadd.f32 %v536, %v1030
        %v1067 = vadd.f32 %v537, %v1033
        %v1068 = vadd.f32 %v538, %v1035
        %1069 = vst [vmem:[#allocation2] sm:$0xff] %v1037
        %1070 = vst [vmem:[#allocation2 + $0x8] sm:$0xff] %v1038
        %1071 = vst [vmem:[#allocation2 + $0x10] sm:$0xff] %v1039
        %1072 = vst [vmem:[#allocation2 + $0x18] sm:$0xff] %v1040
        %1073 = vst [vmem:[#allocation2 + $0x20] sm:$0xff] %v1041
        %1074 = vst [vmem:[#allocation2 + $0x28] sm:$0xff] %v1042
        %1075 = vst [vmem:[#allocation2 + $0x30] sm:$0xff] %v1043
        %1076 = vst [vmem:[#allocation2 + $0x38] sm:$0xff] %v1044
        %1077 = vst [vmem:[#allocation2 + $0x40] sm:$0xff] %v1045
        %1078 = vst [vmem:[#allocation2 + $0x48] sm:$0xff] %v1046
        %1079 = vst [vmem:[#allocation2 + $0x50] sm:$0xff] %v1047
        %1080 = vst [vmem:[#allocation2 + $0x58] sm:$0xff] %v1048
        %1081 = vst [vmem:[#allocation2 + $0x60] sm:$0xff] %v1049
        %1082 = vst [vmem:[#allocation2 + $0x68] sm:$0xff] %v1050
        %1083 = vst [vmem:[#allocation2 + $0x70] sm:$0xff] %v1051
        %1084 = vst [vmem:[#allocation2 + $0x78] sm:$0xff] %v1052
        %1085 = vst [vmem:[#allocation2 + $0x80] sm:$0xff] %v1053
        %1086 = vst [vmem:[#allocation2 + $0x88] sm:$0xff] %v1054
        %1087 = vst [vmem:[#allocation2 + $0x90] sm:$0xff] %v1055
        %1088 = vst [vmem:[#allocation2 + $0x98] sm:$0xff] %v1056
        %1089 = vst [vmem:[#allocation2 + $0xa0] sm:$0xff] %v1057
        %1090 = vst [vmem:[#allocation2 + $0xa8] sm:$0xff] %v1058
        %1091 = vst [vmem:[#allocation2 + $0xb0] sm:$0xff] %v1059
        %1092 = vst [vmem:[#allocation2 + $0xb8] sm:$0xff] %v1060
        %1093 = vst [vmem:[#allocation2 + $0xc0] sm:$0xff] %v1061
        %1094 = vst [vmem:[#allocation2 + $0xc8] sm:$0xff] %v1062
        %1095 = vst [vmem:[#allocation2 + $0xd0] sm:$0xff] %v1063
        %1096 = vst [vmem:[#allocation2 + $0xd8] sm:$0xff] %v1064
        %1097 = vst [vmem:[#allocation2 + $0xe0] sm:$0xff] %v1065
        %1098 = vst [vmem:[#allocation2 + $0xe8] sm:$0xff] %v1066
        %1099 = vst [vmem:[#allocation2 + $0xf0] sm:$0xff] %v1067
        %1100 = vst [vmem:[#allocation2 + $0xf8] sm:$0xff] %v1068
        %p1101 = scmp.eq.s32.totalorder %s21, 1
        // Predicated region
        $region83: #{protein_segmenter2_forward.17} parent=73 // pred_check
          %p1102 = pneg %p1101
        $region84: #{protein_segmenter2_forward.17} parent=73 // pred_check_branch
          %1104 = sbr.rel (%p1102) target = $region86
        $region85: #{protein_segmenter2_forward.17} parent=73 // pred_region
          %v1105 = vld [vmem:[%s463] sm:$0xff]
          %v1106 = vld [vmem:[%s463 + $0x8] sm:$0xff]
          %v1107 = vld [vmem:[%s463 + $0x10] sm:$0xff]
          %v1108 = vld [vmem:[%s463 + $0x18] sm:$0xff]
          %v1109 = vld [vmem:[%s463 + $0x20] sm:$0xff]
          %v1110 = vld [vmem:[%s463 + $0x28] sm:$0xff]
          %v1111 = vld [vmem:[%s463 + $0x30] sm:$0xff]
          %v1112 = vld [vmem:[%s463 + $0x38] sm:$0xff]
          %v1113 = vld [vmem:[%s463 + $0x40] sm:$0xff]
          %v1114 = vld [vmem:[%s463 + $0x48] sm:$0xff]
          %v1115 = vld [vmem:[%s463 + $0x50] sm:$0xff]
          %v1116 = vld [vmem:[%s463 + $0x58] sm:$0xff]
          %v1117 = vld [vmem:[%s463 + $0x60] sm:$0xff]
          %v1118 = vld [vmem:[%s463 + $0x68] sm:$0xff]
          %v1119 = vld [vmem:[%s463 + $0x70] sm:$0xff]
          %v1120 = vld [vmem:[%s463 + $0x78] sm:$0xff]
          %v1121 = vld [vmem:[%s463 + $0x80] sm:$0xff]
          %v1122 = vld [vmem:[%s463 + $0x88] sm:$0xff]
          %v1123 = vld [vmem:[%s463 + $0x90] sm:$0xff]
          %v1124 = vld [vmem:[%s463 + $0x98] sm:$0xff]
          %v1125 = vld [vmem:[%s463 + $0xa0] sm:$0xff]
          %v1126 = vld [vmem:[%s463 + $0xa8] sm:$0xff]
          %v1127 = vld [vmem:[%s463 + $0xb0] sm:$0xff]
          %v1128 = vld [vmem:[%s463 + $0xb8] sm:$0xff]
          %v1129 = vld [vmem:[%s463 + $0xc0] sm:$0xff]
          %v1130 = vld [vmem:[%s463 + $0xc8] sm:$0xff]
          %v1131 = vld [vmem:[%s463 + $0xd0] sm:$0xff]
          %v1132 = vld [vmem:[%s463 + $0xd8] sm:$0xff]
          %v1133 = vld [vmem:[%s463 + $0xe0] sm:$0xff]
          %v1134 = vld [vmem:[%s463 + $0xe8] sm:$0xff]
          %v1135 = vld [vmem:[%s463 + $0xf0] sm:$0xff]
          %v1136 = vld [vmem:[%s463 + $0xf8] sm:$0xff]
          %v1137 = vld [vmem:[#allocation2] sm:$0xff]
          %v1138 = vld [vmem:[#allocation2 + $0x8] sm:$0xff]
          %v1139 = vld [vmem:[#allocation2 + $0x10] sm:$0xff]
          %v1140 = vld [vmem:[#allocation2 + $0x18] sm:$0xff]
          %v1141 = vld [vmem:[#allocation2 + $0x20] sm:$0xff]
          %v1142 = vld [vmem:[#allocation2 + $0x28] sm:$0xff]
          %v1143 = vld [vmem:[#allocation2 + $0x30] sm:$0xff]
          %v1144 = vld [vmem:[#allocation2 + $0x38] sm:$0xff]
          %v1145 = vld [vmem:[#allocation2 + $0x40] sm:$0xff]
          %v1146 = vld [vmem:[#allocation2 + $0x48] sm:$0xff]
          %v1147 = vld [vmem:[#allocation2 + $0x50] sm:$0xff]
          %v1148 = vld [vmem:[#allocation2 + $0x58] sm:$0xff]
          %v1149 = vld [vmem:[#allocation2 + $0x60] sm:$0xff]
          %v1150 = vld [vmem:[#allocation2 + $0x68] sm:$0xff]
          %v1151 = vld [vmem:[#allocation2 + $0x70] sm:$0xff]
          %v1152 = vld [vmem:[#allocation2 + $0x78] sm:$0xff]
          %v1153 = vld [vmem:[#allocation2 + $0x80] sm:$0xff]
          %v1154 = vld [vmem:[#allocation2 + $0x88] sm:$0xff]
          %v1155 = vld [vmem:[#allocation2 + $0x90] sm:$0xff]
          %v1156 = vld [vmem:[#allocation2 + $0x98] sm:$0xff]
          %v1157 = vld [vmem:[#allocation2 + $0xa0] sm:$0xff]
          %v1158 = vld [vmem:[#allocation2 + $0xa8] sm:$0xff]
          %v1159 = vld [vmem:[#allocation2 + $0xb0] sm:$0xff]
          %v1160 = vld [vmem:[#allocation2 + $0xb8] sm:$0xff]
          %v1161 = vld [vmem:[#allocation2 + $0xc0] sm:$0xff]
          %v1162 = vld [vmem:[#allocation2 + $0xc8] sm:$0xff]
          %v1163 = vld [vmem:[#allocation2 + $0xd0] sm:$0xff]
          %v1164 = vld [vmem:[#allocation2 + $0xd8] sm:$0xff]
          %v1165 = vld [vmem:[#allocation2 + $0xe0] sm:$0xff]
          %v1166 = vld [vmem:[#allocation2 + $0xe8] sm:$0xff]
          %v1167 = vld [vmem:[#allocation2 + $0xf0] sm:$0xff]
          %v1168 = vld [vmem:[#allocation2 + $0xf8] sm:$0xff]
          %v1169 = vld [vmem:[%s457] sm:$0xf]
          %v1170 = vld [vmem:[%s457 + $0x4] sm:$0xf]
          %v1171 = vld [vmem:[%s457 + $0x8] sm:$0xf]
          %v1172 = vld [vmem:[%s457 + $0xc] sm:$0xf]
          %v1173 = vld [vmem:[%s457 + $0x10] sm:$0xf]
          %v1174 = vld [vmem:[%s457 + $0x14] sm:$0xf]
          %v1175 = vld [vmem:[%s457 + $0x18] sm:$0xf]
          %v1176 = vld [vmem:[%s457 + $0x1c] sm:$0xf]
          %v1177 = vld [vmem:[%s457 + $0x20] sm:$0xf]
          %v1178 = vld [vmem:[%s457 + $0x24] sm:$0xf]
          %v1179 = vld [vmem:[%s457 + $0x28] sm:$0xf]
          %v1180 = vld [vmem:[%s457 + $0x2c] sm:$0xf]
          %v1181 = vld [vmem:[%s457 + $0x30] sm:$0xf]
          %v1182 = vld [vmem:[%s457 + $0x34] sm:$0xf]
          %v1183 = vld [vmem:[%s457 + $0x38] sm:$0xf]
          %v1184 = vld [vmem:[%s457 + $0x3c] sm:$0xf]
          %v1185 = vld [vmem:[%s457 + $0x40] sm:$0xf]
          %v1186 = vld [vmem:[%s457 + $0x44] sm:$0xf]
          %v1187 = vld [vmem:[%s457 + $0x48] sm:$0xf]
          %v1188 = vld [vmem:[%s457 + $0x4c] sm:$0xf]
          %v1189 = vld [vmem:[%s457 + $0x50] sm:$0xf]
          %v1190 = vld [vmem:[%s457 + $0x54] sm:$0xf]
          %v1191 = vld [vmem:[%s457 + $0x58] sm:$0xf]
          %v1192 = vld [vmem:[%s457 + $0x5c] sm:$0xf]
          %v1193 = vld [vmem:[%s457 + $0x60] sm:$0xf]
          %v1194 = vld [vmem:[%s457 + $0x64] sm:$0xf]
          %v1195 = vld [vmem:[%s457 + $0x68] sm:$0xf]
          %v1196 = vld [vmem:[%s457 + $0x6c] sm:$0xf]
          %v1197 = vld [vmem:[%s457 + $0x70] sm:$0xf]
          %v1198 = vld [vmem:[%s457 + $0x74] sm:$0xf]
          %v1199 = vld [vmem:[%s457 + $0x78] sm:$0xf]
          %v1200 = vld [vmem:[%s457 + $0x7c] sm:$0xf]
          %v1201 = vunpack.c.l.bf16 %v1169
          %v1202 = vunpack.c.l.bf16 %v1170
          %v1203 = vunpack.c.l.bf16 %v1171
          %v1204 = vunpack.c.l.bf16 %v1172
          %v1205 = vunpack.c.l.bf16 %v1173
          %v1206 = vunpack.c.l.bf16 %v1174
          %v1207 = vunpack.c.l.bf16 %v1175
          %v1208 = vunpack.c.l.bf16 %v1176
          %v1209 = vunpack.c.l.bf16 %v1177
          %v1210 = vunpack.c.l.bf16 %v1178
          %v1211 = vunpack.c.l.bf16 %v1179
          %v1212 = vunpack.c.l.bf16 %v1180
          %v1213 = vunpack.c.l.bf16 %v1181
          %v1214 = vunpack.c.l.bf16 %v1182
          %v1215 = vunpack.c.l.bf16 %v1183
          %v1216 = vunpack.c.l.bf16 %v1184
          %v1217 = vunpack.c.l.bf16 %v1185
          %v1218 = vunpack.c.l.bf16 %v1186
          %v1219 = vunpack.c.l.bf16 %v1187
          %v1220 = vunpack.c.l.bf16 %v1188
          %v1221 = vunpack.c.l.bf16 %v1189
          %v1222 = vunpack.c.l.bf16 %v1190
          %v1223 = vunpack.c.l.bf16 %v1191
          %v1224 = vunpack.c.l.bf16 %v1192
          %v1225 = vunpack.c.l.bf16 %v1193
          %v1226 = vunpack.c.l.bf16 %v1194
          %v1227 = vunpack.c.l.bf16 %v1195
          %v1228 = vunpack.c.l.bf16 %v1196
          %v1229 = vunpack.c.l.bf16 %v1197
          %v1230 = vunpack.c.l.bf16 %v1198
          %v1231 = vunpack.c.l.bf16 %v1199
          %v1232 = vunpack.c.l.bf16 %v1200
          %v1233 = vadd.f32 %v1137, %v1201
          %v1234 = vadd.f32 %v1138, %v1202
          %v1235 = vadd.f32 %v1139, %v1203
          %v1236 = vadd.f32 %v1140, %v1204
          %v1237 = vadd.f32 %v1141, %v1205
          %v1238 = vadd.f32 %v1142, %v1206
          %v1239 = vadd.f32 %v1143, %v1207
          %v1240 = vadd.f32 %v1144, %v1208
          %v1241 = vadd.f32 %v1145, %v1209
          %v1242 = vadd.f32 %v1146, %v1210
          %v1243 = vadd.f32 %v1147, %v1211
          %v1244 = vadd.f32 %v1148, %v1212
          %v1245 = vadd.f32 %v1149, %v1213
          %v1246 = vadd.f32 %v1150, %v1214
          %v1247 = vadd.f32 %v1151, %v1215
          %v1248 = vadd.f32 %v1152, %v1216
          %v1249 = vadd.f32 %v1153, %v1217
          %v1250 = vadd.f32 %v1154, %v1218
          %v1251 = vadd.f32 %v1155, %v1219
          %v1252 = vadd.f32 %v1156, %v1220
          %v1253 = vadd.f32 %v1157, %v1221
          %v1254 = vadd.f32 %v1158, %v1222
          %v1255 = vadd.f32 %v1159, %v1223
          %v1256 = vadd.f32 %v1160, %v1224
          %v1257 = vadd.f32 %v1161, %v1225
          %v1258 = vadd.f32 %v1162, %v1226
          %v1259 = vadd.f32 %v1163, %v1227
          %v1260 = vadd.f32 %v1164, %v1228
          %v1261 = vadd.f32 %v1165, %v1229
          %v1262 = vadd.f32 %v1166, %v1230
          %v1263 = vadd.f32 %v1167, %v1231
          %v1264 = vadd.f32 %v1168, %v1232
          %1266 = vset.pattern.permute.xlu0 0
          %1267 = vperm.xlu0 %1266, %v1105
          %v1268 = vpop.permute.xlu0 %1267
          %1271 = vset.pattern.permute.xlu0 0
          %1272 = vperm.xlu0 %1271, %v1106
          %v1273 = vpop.permute.xlu0 %1272
          %1276 = vset.pattern.permute.xlu0 0
          %1277 = vperm.xlu0 %1276, %v1107
          %v1278 = vpop.permute.xlu0 %1277
          %1281 = vset.pattern.permute.xlu0 0
          %1282 = vperm.xlu0 %1281, %v1108
          %v1283 = vpop.permute.xlu0 %1282
          %1286 = vset.pattern.permute.xlu0 0
          %1287 = vperm.xlu0 %1286, %v1109
          %v1288 = vpop.permute.xlu0 %1287
          %1291 = vset.pattern.permute.xlu0 0
          %1292 = vperm.xlu0 %1291, %v1110
          %v1293 = vpop.permute.xlu0 %1292
          %1296 = vset.pattern.permute.xlu0 0
          %1297 = vperm.xlu0 %1296, %v1111
          %v1298 = vpop.permute.xlu0 %1297
          %1301 = vset.pattern.permute.xlu0 0
          %1302 = vperm.xlu0 %1301, %v1112
          %v1303 = vpop.permute.xlu0 %1302
          %1306 = vset.pattern.permute.xlu0 0
          %1307 = vperm.xlu0 %1306, %v1113
          %v1308 = vpop.permute.xlu0 %1307
          %1311 = vset.pattern.permute.xlu0 0
          %1312 = vperm.xlu0 %1311, %v1114
          %v1313 = vpop.permute.xlu0 %1312
          %1316 = vset.pattern.permute.xlu0 0
          %1317 = vperm.xlu0 %1316, %v1115
          %v1318 = vpop.permute.xlu0 %1317
          %1321 = vset.pattern.permute.xlu0 0
          %1322 = vperm.xlu0 %1321, %v1116
          %v1323 = vpop.permute.xlu0 %1322
          %1326 = vset.pattern.permute.xlu0 0
          %1327 = vperm.xlu0 %1326, %v1117
          %v1328 = vpop.permute.xlu0 %1327
          %1331 = vset.pattern.permute.xlu0 0
          %1332 = vperm.xlu0 %1331, %v1118
          %v1333 = vpop.permute.xlu0 %1332
          %1336 = vset.pattern.permute.xlu0 0
          %1337 = vperm.xlu0 %1336, %v1119
          %v1338 = vpop.permute.xlu0 %1337
          %1341 = vset.pattern.permute.xlu0 0
          %1342 = vperm.xlu0 %1341, %v1120
          %v1343 = vpop.permute.xlu0 %1342
          %1346 = vset.pattern.permute.xlu0 0
          %1347 = vperm.xlu0 %1346, %v1121
          %v1348 = vpop.permute.xlu0 %1347
          %1351 = vset.pattern.permute.xlu0 0
          %1352 = vperm.xlu0 %1351, %v1122
          %v1353 = vpop.permute.xlu0 %1352
          %1356 = vset.pattern.permute.xlu0 0
          %1357 = vperm.xlu0 %1356, %v1123
          %v1358 = vpop.permute.xlu0 %1357
          %1361 = vset.pattern.permute.xlu0 0
          %1362 = vperm.xlu0 %1361, %v1124
          %v1363 = vpop.permute.xlu0 %1362
          %1366 = vset.pattern.permute.xlu0 0
          %1367 = vperm.xlu0 %1366, %v1125
          %v1368 = vpop.permute.xlu0 %1367
          %1371 = vset.pattern.permute.xlu0 0
          %1372 = vperm.xlu0 %1371, %v1126
          %v1373 = vpop.permute.xlu0 %1372
          %1376 = vset.pattern.permute.xlu0 0
          %1377 = vperm.xlu0 %1376, %v1127
          %v1378 = vpop.permute.xlu0 %1377
          %1381 = vset.pattern.permute.xlu0 0
          %1382 = vperm.xlu0 %1381, %v1128
          %v1383 = vpop.permute.xlu0 %1382
          %1386 = vset.pattern.permute.xlu0 0
          %1387 = vperm.xlu0 %1386, %v1129
          %v1388 = vpop.permute.xlu0 %1387
          %1391 = vset.pattern.permute.xlu0 0
          %1392 = vperm.xlu0 %1391, %v1130
          %v1393 = vpop.permute.xlu0 %1392
          %1396 = vset.pattern.permute.xlu0 0
          %1397 = vperm.xlu0 %1396, %v1131
          %v1398 = vpop.permute.xlu0 %1397
          %1401 = vset.pattern.permute.xlu0 0
          %1402 = vperm.xlu0 %1401, %v1132
          %v1403 = vpop.permute.xlu0 %1402
          %1406 = vset.pattern.permute.xlu0 0
          %1407 = vperm.xlu0 %1406, %v1133
          %v1408 = vpop.permute.xlu0 %1407
          %1411 = vset.pattern.permute.xlu0 0
          %1412 = vperm.xlu0 %1411, %v1134
          %v1413 = vpop.permute.xlu0 %1412
          %1416 = vset.pattern.permute.xlu0 0
          %1417 = vperm.xlu0 %1416, %v1135
          %v1418 = vpop.permute.xlu0 %1417
          %1421 = vset.pattern.permute.xlu0 0
          %1422 = vperm.xlu0 %1421, %v1136
          %v1423 = vpop.permute.xlu0 %1422
          %v1425 = vmul.f32 %v1268, %v1233
          %v1426 = vmul.f32 %v1273, %v1234
          %v1427 = vmul.f32 %v1278, %v1235
          %v1428 = vmul.f32 %v1283, %v1236
          %v1429 = vmul.f32 %v1288, %v1237
          %v1430 = vmul.f32 %v1293, %v1238
          %v1431 = vmul.f32 %v1298, %v1239
          %v1432 = vmul.f32 %v1303, %v1240
          %v1433 = vmul.f32 %v1308, %v1241
          %v1434 = vmul.f32 %v1313, %v1242
          %v1435 = vmul.f32 %v1318, %v1243
          %v1436 = vmul.f32 %v1323, %v1244
          %v1437 = vmul.f32 %v1328, %v1245
          %v1438 = vmul.f32 %v1333, %v1246
          %v1439 = vmul.f32 %v1338, %v1247
          %v1440 = vmul.f32 %v1343, %v1248
          %v1441 = vmul.f32 %v1348, %v1249
          %v1442 = vmul.f32 %v1353, %v1250
          %v1443 = vmul.f32 %v1358, %v1251
          %v1444 = vmul.f32 %v1363, %v1252
          %v1445 = vmul.f32 %v1368, %v1253
          %v1446 = vmul.f32 %v1373, %v1254
          %v1447 = vmul.f32 %v1378, %v1255
          %v1448 = vmul.f32 %v1383, %v1256
          %v1449 = vmul.f32 %v1388, %v1257
          %v1450 = vmul.f32 %v1393, %v1258
          %v1451 = vmul.f32 %v1398, %v1259
          %v1452 = vmul.f32 %v1403, %v1260
          %v1453 = vmul.f32 %v1408, %v1261
          %v1454 = vmul.f32 %v1413, %v1262
          %v1455 = vmul.f32 %v1418, %v1263
          %v1456 = vmul.f32 %v1423, %v1264
          %v1457 = vld [vmem:[%s4] sm:$0x1]
          %v1459 = vperm.slane %v1457, 0
          %v1461 = vadd.f32 %v1425, %v1459
          %v1462 = vadd.f32 %v1426, %v1459
          %v1463 = vadd.f32 %v1427, %v1459
          %v1464 = vadd.f32 %v1428, %v1459
          %v1465 = vadd.f32 %v1429, %v1459
          %v1466 = vadd.f32 %v1430, %v1459
          %v1467 = vadd.f32 %v1431, %v1459
          %v1468 = vadd.f32 %v1432, %v1459
          %v1469 = vadd.f32 %v1433, %v1459
          %v1470 = vadd.f32 %v1434, %v1459
          %v1471 = vadd.f32 %v1435, %v1459
          %v1472 = vadd.f32 %v1436, %v1459
          %v1473 = vadd.f32 %v1437, %v1459
          %v1474 = vadd.f32 %v1438, %v1459
          %v1475 = vadd.f32 %v1439, %v1459
          %v1476 = vadd.f32 %v1440, %v1459
          %v1477 = vadd.f32 %v1441, %v1459
          %v1478 = vadd.f32 %v1442, %v1459
          %v1479 = vadd.f32 %v1443, %v1459
          %v1480 = vadd.f32 %v1444, %v1459
          %v1481 = vadd.f32 %v1445, %v1459
          %v1482 = vadd.f32 %v1446, %v1459
          %v1483 = vadd.f32 %v1447, %v1459
          %v1484 = vadd.f32 %v1448, %v1459
          %v1485 = vadd.f32 %v1449, %v1459
          %v1486 = vadd.f32 %v1450, %v1459
          %v1487 = vadd.f32 %v1451, %v1459
          %v1488 = vadd.f32 %v1452, %v1459
          %v1489 = vadd.f32 %v1453, %v1459
          %v1490 = vadd.f32 %v1454, %v1459
          %v1491 = vadd.f32 %v1455, %v1459
          %v1492 = vadd.f32 %v1456, %v1459
          %1493 = vst [vmem:[%s469] sm:$0xff] %v1461
          %1494 = vst [vmem:[%s469 + $0x8] sm:$0xff] %v1462
          %1495 = vst [vmem:[%s469 + $0x10] sm:$0xff] %v1463
          %1496 = vst [vmem:[%s469 + $0x18] sm:$0xff] %v1464
          %1497 = vst [vmem:[%s469 + $0x20] sm:$0xff] %v1465
          %1498 = vst [vmem:[%s469 + $0x28] sm:$0xff] %v1466
          %1499 = vst [vmem:[%s469 + $0x30] sm:$0xff] %v1467
          %1500 = vst [vmem:[%s469 + $0x38] sm:$0xff] %v1468
          %1501 = vst [vmem:[%s469 + $0x40] sm:$0xff] %v1469
          %1502 = vst [vmem:[%s469 + $0x48] sm:$0xff] %v1470
          %1503 = vst [vmem:[%s469 + $0x50] sm:$0xff] %v1471
          %1504 = vst [vmem:[%s469 + $0x58] sm:$0xff] %v1472
          %1505 = vst [vmem:[%s469 + $0x60] sm:$0xff] %v1473
          %1506 = vst [vmem:[%s469 + $0x68] sm:$0xff] %v1474
          %1507 = vst [vmem:[%s469 + $0x70] sm:$0xff] %v1475
          %1508 = vst [vmem:[%s469 + $0x78] sm:$0xff] %v1476
          %1509 = vst [vmem:[%s469 + $0x80] sm:$0xff] %v1477
          %1510 = vst [vmem:[%s469 + $0x88] sm:$0xff] %v1478
          %1511 = vst [vmem:[%s469 + $0x90] sm:$0xff] %v1479
          %1512 = vst [vmem:[%s469 + $0x98] sm:$0xff] %v1480
          %1513 = vst [vmem:[%s469 + $0xa0] sm:$0xff] %v1481
          %1514 = vst [vmem:[%s469 + $0xa8] sm:$0xff] %v1482
          %1515 = vst [vmem:[%s469 + $0xb0] sm:$0xff] %v1483
          %1516 = vst [vmem:[%s469 + $0xb8] sm:$0xff] %v1484
          %1517 = vst [vmem:[%s469 + $0xc0] sm:$0xff] %v1485
          %1518 = vst [vmem:[%s469 + $0xc8] sm:$0xff] %v1486
          %1519 = vst [vmem:[%s469 + $0xd0] sm:$0xff] %v1487
          %1520 = vst [vmem:[%s469 + $0xd8] sm:$0xff] %v1488
          %1521 = vst [vmem:[%s469 + $0xe0] sm:$0xff] %v1489
          %1522 = vst [vmem:[%s469 + $0xe8] sm:$0xff] %v1490
          %1523 = vst [vmem:[%s469 + $0xf0] sm:$0xff] %v1491
          %1524 = vst [vmem:[%s469 + $0xf8] sm:$0xff] %v1492
        $region86: #{protein_segmenter2_forward.17} parent=73 // pred_fallthru
          _
        %s1525 = smul.u32 32, %s20
        %p1526 = scmp.lt.s32.totalorder %s1525, 63
        %s1527 = scalar_select %p1526, %s1525, 63
        %s1528 = smul.addr %s1527, 8
        %s1529 = scalar_lea.vmem %s5, %s1528
        // Predicated region
        $region87: #{protein_segmenter2_forward.17} parent=73 // pred_check
          %p1530 = pneg %p173
        $region88: #{protein_segmenter2_forward.17} parent=73 // pred_check_branch
          %1532 = sbr.rel (%p1530) target = $region90
        $region89: #{protein_segmenter2_forward.17} parent=73 // pred_region
          %s1533 = smul.u32 32, %s20
        $region90: #{protein_segmenter2_forward.17} parent=73 // pred_fallthru
          _
      $region74: #{protein_segmenter2_forward.17} parent=5 // pred_fallthru
        _
      %p1534 = scmp.le.s32.totalorder 2, %s11
      // Predicated region
      $region91: #{protein_segmenter2_forward.17} parent=5 // pred_check
        %p1535 = pneg %p1534
      $region92: #{protein_segmenter2_forward.17} parent=5 // pred_check_branch
        %1537 = sbr.rel (%p1535) target = $region94
      $region93: #{protein_segmenter2_forward.17} parent=5 // pred_region
        %s1538 = ssub.s32 %s11, 2
        // Predicated region
        $region95: #{protein_segmenter2_forward.17} parent=93 // pred_check
          %p1539 = pneg %p179
        $region96: #{protein_segmenter2_forward.17} parent=93 // pred_check_branch
          %1541 = sbr.rel (%p1539) target = $region98
        $region97: #{protein_segmenter2_forward.17} parent=93 // pred_region
          %s1542 = smul.u32 32, %s22
          %p1543 = scmp.lt.s32.totalorder %s1542, 63
          %s1544 = scalar_select %p1543, %s1542, 63
          %s1545 = smul.addr %s1544, 8
          %s1546 = scalar_lea.vmem %s5, %s1545
        $region98: #{protein_segmenter2_forward.17} parent=93 // pred_fallthru
          _
      $region94: #{protein_segmenter2_forward.17} parent=5 // pred_fallthru
        _
    $region6: #{protein_segmenter2_forward.17} parent=1 // loop_footer
      %s15 = sadd.s32 1, %s11
    $region7: #{protein_segmenter2_forward.17} parent=1 // loop_footer_branch
      %10 = sbr.rel target = $region3
    $region8: #{protein_segmenter2_forward.17} parent=1 // loop_exit
      _

</llo_original>
